<compile_context>
chip_gen: v7x
topology: tpu7x:2x2x1
jax: 0.10.0
libtpu: 0.0.40
codegen_flags: <defaults>
</compile_context>

<pallas_src>
import math

import jax
import jax.numpy as jnp
from jax.experimental import pallas as pl
from jax.experimental.pallas import tpu as pltpu


def _round_up(x, m):
    return (x + m - 1) // m * m


def _pad_gemm_dim(x):
    # 128-lane alignment always; for contraction dims > 128 pad to a multiple
    # of 256 so the 2x256x256 MXU on v6e/v7x gets full systolic-row occupancy
    # (the slight over-pad on v5e's 4x128x128 MXU is cheap).
    p = _round_up(x, 128)
    return p if p <= 128 else _round_up(x, 256)


# ----------------------------------------------------------------------------
# Kernel 1: the sigmoid recurrence (l1), chunked over time.
# ----------------------------------------------------------------------------
def rnn_recurrence_kernel(tok_ref, w1h_hbm, w1e_hbm, b1_hbm,
                          hid_ref,
                          h_ref, work_ref,
                          w1h_v, w1e_v, b1_v, dma_sem):
    """One grid step == one chunk of Tc timesteps.

    tok_ref : (Tc, Bp, Ep) bf16  embedded tokens for this chunk (time-major)
    hid_ref : (Bp, Tc, Hp) bf16  hidden states for this chunk (batch-major out)
    h_ref   : (Bp, Hp)     f32   hidden state carried across chunks
    work_ref: (Tc, Bp, Hp) f32   chunk scratch: holds the precomputed token
                                 projection xe_t, overwritten in place by h_t
    w1h_v/w1e_v/b1_v : small l1 weights staged once into persistent VMEM
    """
    c = pl.program_id(0)

    # One-time init: stage l1 weights into VMEM (no double-buffering), h = 0.
    # W2 is handled by a separate tiled-matmul kernel, so there is no large
    # one-time weight DMA serialized in front of the first chunk.
    @pl.when(c == 0)
    def _init():
        copies = [
            pltpu.make_async_copy(w1h_hbm, w1h_v, dma_sem.at[0]),
            pltpu.make_async_copy(w1e_hbm, w1e_v, dma_sem.at[1]),
            pltpu.make_async_copy(b1_hbm, b1_v, dma_sem.at[2]),
        ]
        for cp in copies:
            cp.start()
        for cp in copies:
            cp.wait()
        h_ref[...] = jnp.zeros_like(h_ref)

    tc, bp, ep = tok_ref.shape
    hp = h_ref.shape[-1]

    # Hoisted time-independent projection: one full-M (Bp*Tc rows) MXU GEMM
    # per chunk with b1 folded in. Removes half the MXU pushes and the strided
    # per-step token reads from the serial dependence chain.
    toks = tok_ref[...].reshape(tc * bp, ep)                          # bf16
    xe = jnp.dot(toks, w1e_v[...], preferred_element_type=jnp.float32)
    work_ref[...] = (xe + b1_v[...]).reshape(tc, bp, hp)

    # Serial recurrence: per step only  h @ W1h  + xe_t, then sigmoid (EUP).
    # work_ref[i] is read (xe_t) then overwritten with h_t; later steps only
    # read indices > i, so the in-place reuse is safe.
    w1h = w1h_v[...]                                                  # (Hp, Hp) bf16
    h = h_ref[...]                                                    # (Bp, Hp) f32
    for i in range(tc):                                               # tc is static
        pre = jnp.dot(h.astype(jnp.bfloat16), w1h,
                      preferred_element_type=jnp.float32) + work_ref[i]
        h = jax.nn.sigmoid(pre)                                       # f32 state
        work_ref[i] = h                                               # dense slab store
    h_ref[...] = h                                                    # carry to next chunk

    # One cheap in-VMEM permute (time-major -> batch-major) per chunk so the
    # hidden output (and therefore the logits) come out batch-major with no
    # large HBM transpose in the wrapper; lane-dense bf16 store.
    hid_ref[...] = jnp.transpose(work_ref[...], (1, 0, 2)).astype(hid_ref.dtype)


# ----------------------------------------------------------------------------
# Kernel 2: the l2 projection as a (rows x vocab)-tiled matmul.
# ----------------------------------------------------------------------------
def l2_matmul_kernel(h_ref, w2_ref, b2_ref, o_ref):
    o_ref[...] = (jnp.dot(h_ref[...], w2_ref[...],
                          preferred_element_type=jnp.float32)
                  + b2_ref[...]).astype(o_ref.dtype)


def rnn_lang_model_forward(input_ids, embed_table, w1, b1, w2, b2,
                           hidden_units, *, chunk=32):
    """input_ids: (B, S) int32.  Returns logits (B, S, V) float32."""
    B, S = input_ids.shape
    V, E = embed_table.shape
    H = hidden_units
    assert w1.shape == (H, E + H) and b1.shape == (H,)
    assert w2.shape == (V, H) and b2.shape == (V,)

    # TPU-aligned padded sizes: 8 sublanes for batch, 128/256 lanes for E/H/V.
    Bp = _round_up(B, 8)
    Ep = _pad_gemm_dim(E)
    Hp = _pad_gemm_dim(H)
    Vp = _round_up(V, 128)
    # Chunk of timesteps per grid step. Multiple of 16 keeps the bf16 hidden
    # output block sublane-aligned; Bp*Tc = 256 at the default fills a full
    # MXU row tile on v6e/v7x and amortizes per-grid-step overhead.
    chunk = max(16, _round_up(chunk, 16))
    Tc = chunk if S >= chunk else _round_up(S, 16)
    Sp = _round_up(S, Tc)
    num_chunks = Sp // Tc

    vmem_limit = 64 * 1024 * 1024   # > v5e/v6e scoped defaults, == v7x physical

    # Embedding gather directly in time-major (Sp, Bp, Ep) layout (no big HBM
    # transpose). Padded ids are 0 (a valid row); padded rows/steps/lanes are
    # sliced off or hit zero weights downstream.
    ids_p = jnp.zeros((Sp, Bp), jnp.int32).at[:S, :B].set(input_ids.T)
    emb_p = (jnp.zeros((V, Ep), jnp.float32).at[:, :E].set(embed_table)
             .astype(jnp.bfloat16))
    # TODO(synk): the gather could be fused into kernel 1 (scalar-prefetched
    # ids + DMA row gather) to avoid materializing this (Sp,Bp,Ep) HBM tensor.
    tokens = jnp.take(emb_p, ids_p, axis=0)            # (Sp, Bp, Ep) bf16

    # l1 weight (H, E+H) acts on cat([hidden, embed]); split and transpose for
    # right-multiplication. Zero padding keeps semantics: padded hidden lanes
    # become sigmoid(0)=0.5 but multiply zero weight rows in W1h and W2.
    w1h = (jnp.zeros((Hp, Hp), jnp.float32).at[:H, :H].set(w1[:, :H].T)
           .astype(jnp.bfloat16))
    w1e = (jnp.zeros((Ep, Hp), jnp.float32).at[:E, :H].set(w1[:, H:].T)
           .astype(jnp.bfloat16))
    b1p = jnp.zeros((1, Hp), jnp.float32).at[0, :H].set(b1)
    w2t = (jnp.zeros((Hp, Vp), jnp.float32).at[:H, :V].set(w2.T)
           .astype(jnp.bfloat16))
    b2p = jnp.zeros((1, Vp), jnp.float32).at[0, :V].set(b2)

    # ---- Kernel 1: recurrence -> batch-major bf16 hidden states ----
    hid = pl.pallas_call(
        rnn_recurrence_kernel,
        out_shape=jax.ShapeDtypeStruct((Bp, Sp, Hp), jnp.bfloat16),
        grid_spec=pltpu.PrefetchScalarGridSpec(
            num_scalar_prefetch=0,
            grid=(num_chunks,),
            in_specs=[
                pl.BlockSpec((Tc, Bp, Ep), lambda c: (c, 0, 0)),  # tokens
                pl.BlockSpec(memory_space=pl.ANY),                # W1h (HBM)
                pl.BlockSpec(memory_space=pl.ANY),                # W1e (HBM)
                pl.BlockSpec(memory_space=pl.ANY),                # b1  (HBM)
            ],
            out_specs=pl.BlockSpec((Bp, Tc, Hp), lambda c: (0, c, 0)),
            scratch_shapes=[
                pltpu.VMEM((Bp, Hp), jnp.float32),       # hidden carry
                pltpu.VMEM((Tc, Bp, Hp), jnp.float32),   # xe / chunk hiddens
                pltpu.VMEM((Hp, Hp), jnp.bfloat16),      # W1h resident
                pltpu.VMEM((Ep, Hp), jnp.bfloat16),      # W1e resident
                pltpu.VMEM((1, Hp), jnp.float32),        # b1 resident
                pltpu.SemaphoreType.DMA((3,)),           # weight-staging DMAs
            ],
        ),
        compiler_params=pltpu.CompilerParams(
            dimension_semantics=("arbitrary",),          # sequential recurrence
            vmem_limit_bytes=vmem_limit),
    )(tokens, w1h, w1e, b1p)

    # ---- Kernel 2: l2 projection, tiled over (rows, vocab), both parallel ----
    M = Bp * Sp
    TM = math.gcd(M, 256)            # 256-row MXU tiles when M allows
    TN = math.gcd(Vp, 512)           # lane-dense vocab tiles (<= 512 wide)
    # TODO(synk): add a K (Hp) grid axis + f32 accumulator if Hp ever becomes
    # too large to keep as a single contraction block.
    logits = pl.pallas_call(
        l2_matmul_kernel,
        out_shape=jax.ShapeDtypeStruct((M, Vp), jnp.float32),
        grid_spec=pltpu.PrefetchScalarGridSpec(
            num_scalar_prefetch=0,
            grid=(M // TM, Vp // TN),
            in_specs=[
                pl.BlockSpec((TM, Hp), lambda i, j: (i, 0)),   # hidden rows
                pl.BlockSpec((Hp, TN), lambda i, j: (0, j)),   # W2 V-tile
                pl.BlockSpec((1, TN), lambda i, j: (0, j)),    # b2 V-tile
            ],
            out_specs=pl.BlockSpec((TM, TN), lambda i, j: (i, j)),
        ),
        compiler_params=pltpu.CompilerParams(
            dimension_semantics=("parallel", "parallel"),      # megacore-friendly
            vmem_limit_bytes=vmem_limit),
    )(hid.reshape(M, Hp), w2t, b2p)

    return logits.reshape(Bp, Sp, Vp)[:B, :S, :V]


def reference_forward(input_ids, embed_table, w1, b1, w2, b2, hidden_units):
    """Pure-JAX f32 reference mirroring the PyTorch forward."""
    B, S = input_ids.shape
    tokens = jnp.take(embed_table, input_ids, axis=0)
    h = jnp.zeros((B, hidden_units), jnp.float32)
    outs = []
    for t in range(S):
        x = jnp.concatenate([h, tokens[:, t, :]], axis=1)
        h = jax.nn.sigmoid(x @ w1.T + b1)
        outs.append(h @ w2.T + b2)
    return jnp.stack(outs, axis=1)


if __name__ == "__main__":
    # Small shapes; S=48 with the default chunk=32 -> two chunks, exercising
    # the cross-chunk hidden carry and the trailing-timestep padding.
    B, S = 2, 48
    E, H, V = 16, 32, 64

    key = jax.random.PRNGKey(0)
    k_emb, k_w1, k_b1, k_w2, k_b2, k_in = jax.random.split(key, 6)

    embed_table = jax.random.normal(k_emb, (V, E), jnp.float32) * 0.1
    w1 = jax.random.normal(k_w1, (H, E + H), jnp.float32) * 0.1
    b1 = jax.random.normal(k_b1, (H,), jnp.float32) * 0.1
    w2 = jax.random.normal(k_w2, (V, H), jnp.float32) * 0.1
    b2 = jax.random.normal(k_b2, (V,), jnp.float32) * 0.1
    input_ids = jax.random.randint(k_in, (B, S), 0, V, jnp.int32)

    out = rnn_lang_model_forward(input_ids, embed_table, w1, b1, w2, b2, H)
    out = jax.block_until_ready(out)

    ref = reference_forward(input_ids, embed_table, w1, b1, w2, b2, H)
    assert out.shape == (B, S, V)
    # bf16 MXU operands (and the per-step bf16 cast of h) -> loosened tolerance
    # vs the f32 reference. NOTE: drift compounds with sequence length; for very
    # long sequences consider a higher-precision h @ W1h product.
    err = float(jnp.max(jnp.abs(out - ref)))
    assert jnp.allclose(out, ref, atol=2e-2, rtol=2e-2), (
        "mismatch vs reference, max abs err = %e" % err)

    print("KERNEL_OK")
</pallas_src>

<mosaic_0001>
module attributes {stable_mosaic.version = 11 : i64} {
  func.func @rnn_recurrence_kernel(%arg0: i32, %arg1: memref<32x8x128xbf16, #tpu.memory_space<vmem>>, %arg2: memref<128x128xbf16, #tpu.memory_space<any>>, %arg3: memref<128x128xbf16, #tpu.memory_space<any>>, %arg4: memref<1x128xf32, #tpu.memory_space<any>>, %arg5: memref<8x32x128xbf16, #tpu.memory_space<vmem>>, %arg6: memref<8x128xf32, #tpu.memory_space<vmem>>, %arg7: memref<32x8x128xf32, #tpu.memory_space<vmem>>, %arg8: memref<128x128xbf16, #tpu.memory_space<vmem>>, %arg9: memref<128x128xbf16, #tpu.memory_space<vmem>>, %arg10: memref<1x128xf32, #tpu.memory_space<vmem>>, %arg11: memref<3x!tpu.dma_semaphore, #tpu.memory_space<semaphore_mem>>) attributes {dimension_semantics = [#tpu.dimension_semantics<arbitrary>], iteration_bounds = array<i64: 2>, scalar_prefetch = 0 : i64, scratch_operands = 6 : i64, tpu.core_type = #tpu.core_type<tc>, window_params = [{transform_indices = @transform_0, window_bounds = array<i64: 32, 8, 128>}, {}, {}, {}, {transform_indices = @transform_4, window_bounds = array<i64: 8, 32, 128>}]} {
    %c0_i32 = arith.constant 0 : i32
    %0 = arith.cmpi eq, %arg0, %c0_i32 : i32
    %1 = arith.extui %0 : i1 to i32
    %c0_i32_0 = arith.constant 0 : i32
    %2 = arith.cmpi ne, %1, %c0_i32_0 : i32
    scf.if %2 {
      %c0_i32_247 = arith.constant 0 : i32
      %435 = tpu.memref_slice %arg11[%c0_i32_247] : memref<3x!tpu.dma_semaphore, #tpu.memory_space<semaphore_mem>> -> memref<1x!tpu.dma_semaphore, #tpu.memory_space<semaphore_mem>>
      %436 = tpu.memref_squeeze %435 : memref<1x!tpu.dma_semaphore, #tpu.memory_space<semaphore_mem>> -> memref<!tpu.dma_semaphore, #tpu.memory_space<semaphore_mem>>
      tpu.enqueue_dma source(%arg2 : memref<128x128xbf16, #tpu.memory_space<any>>) target(%arg8 : memref<128x128xbf16, #tpu.memory_space<vmem>>) target_semaphore(%436 : memref<!tpu.dma_semaphore, #tpu.memory_space<semaphore_mem>>)
      %c1_i32 = arith.constant 1 : i32
      %437 = tpu.memref_slice %arg11[%c1_i32] : memref<3x!tpu.dma_semaphore, #tpu.memory_space<semaphore_mem>> -> memref<1x!tpu.dma_semaphore, #tpu.memory_space<semaphore_mem>>
      %438 = tpu.memref_squeeze %437 : memref<1x!tpu.dma_semaphore, #tpu.memory_space<semaphore_mem>> -> memref<!tpu.dma_semaphore, #tpu.memory_space<semaphore_mem>>
      tpu.enqueue_dma source(%arg3 : memref<128x128xbf16, #tpu.memory_space<any>>) target(%arg9 : memref<128x128xbf16, #tpu.memory_space<vmem>>) target_semaphore(%438 : memref<!tpu.dma_semaphore, #tpu.memory_space<semaphore_mem>>)
      %c2_i32 = arith.constant 2 : i32
      %439 = tpu.memref_slice %arg11[%c2_i32] : memref<3x!tpu.dma_semaphore, #tpu.memory_space<semaphore_mem>> -> memref<1x!tpu.dma_semaphore, #tpu.memory_space<semaphore_mem>>
      %440 = tpu.memref_squeeze %439 : memref<1x!tpu.dma_semaphore, #tpu.memory_space<semaphore_mem>> -> memref<!tpu.dma_semaphore, #tpu.memory_space<semaphore_mem>>
      tpu.enqueue_dma source(%arg4 : memref<1x128xf32, #tpu.memory_space<any>>) target(%arg10 : memref<1x128xf32, #tpu.memory_space<vmem>>) target_semaphore(%440 : memref<!tpu.dma_semaphore, #tpu.memory_space<semaphore_mem>>)
      %c0_i32_248 = arith.constant 0 : i32
      %441 = tpu.memref_slice %arg11[%c0_i32_248] : memref<3x!tpu.dma_semaphore, #tpu.memory_space<semaphore_mem>> -> memref<1x!tpu.dma_semaphore, #tpu.memory_space<semaphore_mem>>
      %442 = tpu.memref_squeeze %441 : memref<1x!tpu.dma_semaphore, #tpu.memory_space<semaphore_mem>> -> memref<!tpu.dma_semaphore, #tpu.memory_space<semaphore_mem>>
      tpu.wait_dma2 semaphore(%442 : memref<!tpu.dma_semaphore, #tpu.memory_space<semaphore_mem>>) src(%arg2 : memref<128x128xbf16, #tpu.memory_space<any>>) dst(%arg8 : memref<128x128xbf16, #tpu.memory_space<vmem>>)
      %c1_i32_249 = arith.constant 1 : i32
      %443 = tpu.memref_slice %arg11[%c1_i32_249] : memref<3x!tpu.dma_semaphore, #tpu.memory_space<semaphore_mem>> -> memref<1x!tpu.dma_semaphore, #tpu.memory_space<semaphore_mem>>
      %444 = tpu.memref_squeeze %443 : memref<1x!tpu.dma_semaphore, #tpu.memory_space<semaphore_mem>> -> memref<!tpu.dma_semaphore, #tpu.memory_space<semaphore_mem>>
      tpu.wait_dma2 semaphore(%444 : memref<!tpu.dma_semaphore, #tpu.memory_space<semaphore_mem>>) src(%arg3 : memref<128x128xbf16, #tpu.memory_space<any>>) dst(%arg9 : memref<128x128xbf16, #tpu.memory_space<vmem>>)
      %c2_i32_250 = arith.constant 2 : i32
      %445 = tpu.memref_slice %arg11[%c2_i32_250] : memref<3x!tpu.dma_semaphore, #tpu.memory_space<semaphore_mem>> -> memref<1x!tpu.dma_semaphore, #tpu.memory_space<semaphore_mem>>
      %446 = tpu.memref_squeeze %445 : memref<1x!tpu.dma_semaphore, #tpu.memory_space<semaphore_mem>> -> memref<!tpu.dma_semaphore, #tpu.memory_space<semaphore_mem>>
      tpu.wait_dma2 semaphore(%446 : memref<!tpu.dma_semaphore, #tpu.memory_space<semaphore_mem>>) src(%arg4 : memref<1x128xf32, #tpu.memory_space<any>>) dst(%arg10 : memref<1x128xf32, #tpu.memory_space<vmem>>)
      %cst_251 = arith.constant 0.000000e+00 : f32
      %447 = vector.broadcast %cst_251 : f32 to vector<8x128xf32>
      %c0_252 = arith.constant 0 : index
      %c0_253 = arith.constant 0 : index
      %448 = vector.load %arg6[%c0_252, %c0_253] : memref<8x128xf32, #tpu.memory_space<vmem>>, vector<8x128xf32>
      tpu.vector_store %arg6[%c0_252, %c0_253], %447 {strides = array<i32>} : memref<8x128xf32, #tpu.memory_space<vmem>>, vector<8x128xf32>,
    } else {
    }
    %c0 = arith.constant 0 : index
    %c0_1 = arith.constant 0 : index
    %c0_2 = arith.constant 0 : index
    %3 = vector.load %arg1[%c0, %c0_1, %c0_2] : memref<32x8x128xbf16, #tpu.memory_space<vmem>>, vector<32x8x128xbf16>
    %4 = vector.shape_cast %3 : vector<32x8x128xbf16> to vector<256x128xbf16>
    %c0_3 = arith.constant 0 : index
    %c0_4 = arith.constant 0 : index
    %5 = vector.load %arg9[%c0_3, %c0_4] : memref<128x128xbf16, #tpu.memory_space<vmem>>, vector<128x128xbf16>
    %cst = arith.constant dense<0.000000e+00> : vector<256x128xf32>
    %6 = tpu.matmul %4, %5, %cst {dimension_numbers = #tpu.dot_dimension_numbers<[1], [0], [0], [1], [0, 0, 1, 1], [], []>} : vector<256x128xbf16>, vector<128x128xbf16>, vector<256x128xf32> -> vector<256x128xf32>
    %c0_5 = arith.constant 0 : index
    %c0_6 = arith.constant 0 : index
    %7 = vector.load %arg10[%c0_5, %c0_6] : memref<1x128xf32, #tpu.memory_space<vmem>>, vector<1x128xf32>
    %8 = vector.broadcast %7 : vector<1x128xf32> to vector<256x128xf32>
    %9 = arith.addf %6, %8 : vector<256x128xf32>
    %10 = vector.shape_cast %9 : vector<256x128xf32> to vector<32x8x128xf32>
    %c0_7 = arith.constant 0 : index
    %c0_8 = arith.constant 0 : index
    %c0_9 = arith.constant 0 : index
    %11 = vector.load %arg7[%c0_7, %c0_8, %c0_9] : memref<32x8x128xf32, #tpu.memory_space<vmem>>, vector<32x8x128xf32>
    tpu.vector_store %arg7[%c0_7, %c0_8, %c0_9], %10 {strides = array<i32>} : memref<32x8x128xf32, #tpu.memory_space<vmem>>, vector<32x8x128xf32>,
    %c0_10 = arith.constant 0 : index
    %c0_11 = arith.constant 0 : index
    %12 = vector.load %arg8[%c0_10, %c0_11] : memref<128x128xbf16, #tpu.memory_space<vmem>>, vector<128x128xbf16>
    %c0_12 = arith.constant 0 : index
    %c0_13 = arith.constant 0 : index
    %13 = vector.load %arg6[%c0_12, %c0_13] : memref<8x128xf32, #tpu.memory_space<vmem>>, vector<8x128xf32>
    %14 = arith.truncf %13 : vector<8x128xf32> to vector<8x128xbf16>
    %cst_14 = arith.constant dense<0.000000e+00> : vector<8x128xf32>
    %15 = tpu.matmul %14, %12, %cst_14 {dimension_numbers = #tpu.dot_dimension_numbers<[1], [0], [0], [1], [0, 0, 1, 1], [], []>} : vector<8x128xbf16>, vector<128x128xbf16>, vector<8x128xf32> -> vector<8x128xf32>
    %c0_15 = arith.constant 0 : index
    %c0_16 = arith.constant 0 : index
    %c0_17 = arith.constant 0 : index
    %16 = vector.load %arg7[%c0_15, %c0_16, %c0_17] : memref<32x8x128xf32, #tpu.memory_space<vmem>>, vector<1x8x128xf32>
    %17 = vector.shape_cast %16 : vector<1x8x128xf32> to vector<8x128xf32>
    %18 = arith.addf %15, %17 : vector<8x128xf32>
    %19 = arith.negf %18 : vector<8x128xf32>
    %20 = math.exp %19 : vector<8x128xf32>
    %cst_18 = arith.constant 1.000000e+00 : f32
    %21 = vector.broadcast %cst_18 : f32 to vector<8x128xf32>
    %22 = arith.addf %21, %20 : vector<8x128xf32>
    %23 = arith.divf %21, %22 : vector<8x128xf32>
    %c0_19 = arith.constant 0 : index
    %c0_20 = arith.constant 0 : index
    %c0_21 = arith.constant 0 : index
    %24 = vector.load %arg7[%c0_19, %c0_20, %c0_21] : memref<32x8x128xf32, #tpu.memory_space<vmem>>, vector<1x8x128xf32>
    %25 = vector.shape_cast %24 : vector<1x8x128xf32> to vector<8x128xf32>
    %26 = vector.shape_cast %23 : vector<8x128xf32> to vector<1x8x128xf32>
    tpu.vector_store %arg7[%c0_19, %c0_20, %c0_21], %26 {strides = array<i32>} : memref<32x8x128xf32, #tpu.memory_space<vmem>>, vector<1x8x128xf32>,
    %27 = arith.truncf %23 : vector<8x128xf32> to vector<8x128xbf16>
    %cst_22 = arith.constant dense<0.000000e+00> : vector<8x128xf32>
    %28 = tpu.matmul %27, %12, %cst_22 {dimension_numbers = #tpu.dot_dimension_numbers<[1], [0], [0], [1], [0, 0, 1, 1], [], []>} : vector<8x128xbf16>, vector<128x128xbf16>, vector<8x128xf32> -> vector<8x128xf32>
    %c1 = arith.constant 1 : index
    %c0_23 = arith.constant 0 : index
    %c0_24 = arith.constant 0 : index
    %29 = vector.load %arg7[%c1, %c0_23, %c0_24] : memref<32x8x128xf32, #tpu.memory_space<vmem>>, vector<1x8x128xf32>
    %30 = vector.shape_cast %29 : vector<1x8x128xf32> to vector<8x128xf32>
    %31 = arith.addf %28, %30 : vector<8x128xf32>
    %32 = arith.negf %31 : vector<8x128xf32>
    %33 = math.exp %32 : vector<8x128xf32>
    %cst_25 = arith.constant 1.000000e+00 : f32
    %34 = vector.broadcast %cst_25 : f32 to vector<8x128xf32>
    %35 = arith.addf %34, %33 : vector<8x128xf32>
    %36 = arith.divf %34, %35 : vector<8x128xf32>
    %c1_26 = arith.constant 1 : index
    %c0_27 = arith.constant 0 : index
    %c0_28 = arith.constant 0 : index
    %37 = vector.load %arg7[%c1_26, %c0_27, %c0_28] : memref<32x8x128xf32, #tpu.memory_space<vmem>>, vector<1x8x128xf32>
    %38 = vector.shape_cast %37 : vector<1x8x128xf32> to vector<8x128xf32>
    %39 = vector.shape_cast %36 : vector<8x128xf32> to vector<1x8x128xf32>
    tpu.vector_store %arg7[%c1_26, %c0_27, %c0_28], %39 {strides = array<i32>} : memref<32x8x128xf32, #tpu.memory_space<vmem>>, vector<1x8x128xf32>,
    %40 = arith.truncf %36 : vector<8x128xf32> to vector<8x128xbf16>
    %cst_29 = arith.constant dense<0.000000e+00> : vector<8x128xf32>
    %41 = tpu.matmul %40, %12, %cst_29 {dimension_numbers = #tpu.dot_dimension_numbers<[1], [0], [0], [1], [0, 0, 1, 1], [], []>} : vector<8x128xbf16>, vector<128x128xbf16>, vector<8x128xf32> -> vector<8x128xf32>
    %c2 = arith.constant 2 : index
    %c0_30 = arith.constant 0 : index
    %c0_31 = arith.constant 0 : index
    %42 = vector.load %arg7[%c2, %c0_30, %c0_31] : memref<32x8x128xf32, #tpu.memory_space<vmem>>, vector<1x8x128xf32>
    %43 = vector.shape_cast %42 : vector<1x8x128xf32> to vector<8x128xf32>
    %44 = arith.addf %41, %43 : vector<8x128xf32>
    %45 = arith.negf %44 : vector<8x128xf32>
    %46 = math.exp %45 : vector<8x128xf32>
    %cst_32 = arith.constant 1.000000e+00 : f32
    %47 = vector.broadcast %cst_32 : f32 to vector<8x128xf32>
    %48 = arith.addf %47, %46 : vector<8x128xf32>
    %49 = arith.divf %47, %48 : vector<8x128xf32>
    %c2_33 = arith.constant 2 : index
    %c0_34 = arith.constant 0 : index
    %c0_35 = arith.constant 0 : index
    %50 = vector.load %arg7[%c2_33, %c0_34, %c0_35] : memref<32x8x128xf32, #tpu.memory_space<vmem>>, vector<1x8x128xf32>
    %51 = vector.shape_cast %50 : vector<1x8x128xf32> to vector<8x128xf32>
    %52 = vector.shape_cast %49 : vector<8x128xf32> to vector<1x8x128xf32>
    tpu.vector_store %arg7[%c2_33, %c0_34, %c0_35], %52 {strides = array<i32>} : memref<32x8x128xf32, #tpu.memory_space<vmem>>, vector<1x8x128xf32>,
    %53 = arith.truncf %49 : vector<8x128xf32> to vector<8x128xbf16>
    %cst_36 = arith.constant dense<0.000000e+00> : vector<8x128xf32>
    %54 = tpu.matmul %53, %12, %cst_36 {dimension_numbers = #tpu.dot_dimension_numbers<[1], [0], [0], [1], [0, 0, 1, 1], [], []>} : vector<8x128xbf16>, vector<128x128xbf16>, vector<8x128xf32> -> vector<8x128xf32>
    %c3 = arith.constant 3 : index
    %c0_37 = arith.constant 0 : index
    %c0_38 = arith.constant 0 : index
    %55 = vector.load %arg7[%c3, %c0_37, %c0_38] : memref<32x8x128xf32, #tpu.memory_space<vmem>>, vector<1x8x128xf32>
    %56 = vector.shape_cast %55 : vector<1x8x128xf32> to vector<8x128xf32>
    %57 = arith.addf %54, %56 : vector<8x128xf32>
    %58 = arith.negf %57 : vector<8x128xf32>
    %59 = math.exp %58 : vector<8x128xf32>
    %cst_39 = arith.constant 1.000000e+00 : f32
    %60 = vector.broadcast %cst_39 : f32 to vector<8x128xf32>
    %61 = arith.addf %60, %59 : vector<8x128xf32>
    %62 = arith.divf %60, %61 : vector<8x128xf32>
    %c3_40 = arith.constant 3 : index
    %c0_41 = arith.constant 0 : index
    %c0_42 = arith.constant 0 : index
    %63 = vector.load %arg7[%c3_40, %c0_41, %c0_42] : memref<32x8x128xf32, #tpu.memory_space<vmem>>, vector<1x8x128xf32>
    %64 = vector.shape_cast %63 : vector<1x8x128xf32> to vector<8x128xf32>
    %65 = vector.shape_cast %62 : vector<8x128xf32> to vector<1x8x128xf32>
    tpu.vector_store %arg7[%c3_40, %c0_41, %c0_42], %65 {strides = array<i32>} : memref<32x8x128xf32, #tpu.memory_space<vmem>>, vector<1x8x128xf32>,
    %66 = arith.truncf %62 : vector<8x128xf32> to vector<8x128xbf16>
    %cst_43 = arith.constant dense<0.000000e+00> : vector<8x128xf32>
    %67 = tpu.matmul %66, %12, %cst_43 {dimension_numbers = #tpu.dot_dimension_numbers<[1], [0], [0], [1], [0, 0, 1, 1], [], []>} : vector<8x128xbf16>, vector<128x128xbf16>, vector<8x128xf32> -> vector<8x128xf32>
    %c4 = arith.constant 4 : index
    %c0_44 = arith.constant 0 : index
    %c0_45 = arith.constant 0 : index
    %68 = vector.load %arg7[%c4, %c0_44, %c0_45] : memref<32x8x128xf32, #tpu.memory_space<vmem>>, vector<1x8x128xf32>
    %69 = vector.shape_cast %68 : vector<1x8x128xf32> to vector<8x128xf32>
    %70 = arith.addf %67, %69 : vector<8x128xf32>
    %71 = arith.negf %70 : vector<8x128xf32>
    %72 = math.exp %71 : vector<8x128xf32>
    %cst_46 = arith.constant 1.000000e+00 : f32
    %73 = vector.broadcast %cst_46 : f32 to vector<8x128xf32>
    %74 = arith.addf %73, %72 : vector<8x128xf32>
    %75 = arith.divf %73, %74 : vector<8x128xf32>
    %c4_47 = arith.constant 4 : index
    %c0_48 = arith.constant 0 : index
    %c0_49 = arith.constant 0 : index
    %76 = vector.load %arg7[%c4_47, %c0_48, %c0_49] : memref<32x8x128xf32, #tpu.memory_space<vmem>>, vector<1x8x128xf32>
    %77 = vector.shape_cast %76 : vector<1x8x128xf32> to vector<8x128xf32>
    %78 = vector.shape_cast %75 : vector<8x128xf32> to vector<1x8x128xf32>
    tpu.vector_store %arg7[%c4_47, %c0_48, %c0_49], %78 {strides = array<i32>} : memref<32x8x128xf32, #tpu.memory_space<vmem>>, vector<1x8x128xf32>,
    %79 = arith.truncf %75 : vector<8x128xf32> to vector<8x128xbf16>
    %cst_50 = arith.constant dense<0.000000e+00> : vector<8x128xf32>
    %80 = tpu.matmul %79, %12, %cst_50 {dimension_numbers = #tpu.dot_dimension_numbers<[1], [0], [0], [1], [0, 0, 1, 1], [], []>} : vector<8x128xbf16>, vector<128x128xbf16>, vector<8x128xf32> -> vector<8x128xf32>
    %c5 = arith.constant 5 : index
    %c0_51 = arith.constant 0 : index
    %c0_52 = arith.constant 0 : index
    %81 = vector.load %arg7[%c5, %c0_51, %c0_52] : memref<32x8x128xf32, #tpu.memory_space<vmem>>, vector<1x8x128xf32>
    %82 = vector.shape_cast %81 : vector<1x8x128xf32> to vector<8x128xf32>
    %83 = arith.addf %80, %82 : vector<8x128xf32>
    %84 = arith.negf %83 : vector<8x128xf32>
    %85 = math.exp %84 : vector<8x128xf32>
    %cst_53 = arith.constant 1.000000e+00 : f32
    %86 = vector.broadcast %cst_53 : f32 to vector<8x128xf32>
    %87 = arith.addf %86, %85 : vector<8x128xf32>
    %88 = arith.divf %86, %87 : vector<8x128xf32>
    %c5_54 = arith.constant 5 : index
    %c0_55 = arith.constant 0 : index
    %c0_56 = arith.constant 0 : index
    %89 = vector.load %arg7[%c5_54, %c0_55, %c0_56] : memref<32x8x128xf32, #tpu.memory_space<vmem>>, vector<1x8x128xf32>
    %90 = vector.shape_cast %89 : vector<1x8x128xf32> to vector<8x128xf32>
    %91 = vector.shape_cast %88 : vector<8x128xf32> to vector<1x8x128xf32>
    tpu.vector_store %arg7[%c5_54, %c0_55, %c0_56], %91 {strides = array<i32>} : memref<32x8x128xf32, #tpu.memory_space<vmem>>, vector<1x8x128xf32>,
    %92 = arith.truncf %88 : vector<8x128xf32> to vector<8x128xbf16>
    %cst_57 = arith.constant dense<0.000000e+00> : vector<8x128xf32>
    %93 = tpu.matmul %92, %12, %cst_57 {dimension_numbers = #tpu.dot_dimension_numbers<[1], [0], [0], [1], [0, 0, 1, 1], [], []>} : vector<8x128xbf16>, vector<128x128xbf16>, vector<8x128xf32> -> vector<8x128xf32>
    %c6 = arith.constant 6 : index
    %c0_58 = arith.constant 0 : index
    %c0_59 = arith.constant 0 : index
    %94 = vector.load %arg7[%c6, %c0_58, %c0_59] : memref<32x8x128xf32, #tpu.memory_space<vmem>>, vector<1x8x128xf32>
    %95 = vector.shape_cast %94 : vector<1x8x128xf32> to vector<8x128xf32>
    %96 = arith.addf %93, %95 : vector<8x128xf32>
    %97 = arith.negf %96 : vector<8x128xf32>
    %98 = math.exp %97 : vector<8x128xf32>
    %cst_60 = arith.constant 1.000000e+00 : f32
    %99 = vector.broadcast %cst_60 : f32 to vector<8x128xf32>
    %100 = arith.addf %99, %98 : vector<8x128xf32>
    %101 = arith.divf %99, %100 : vector<8x128xf32>
    %c6_61 = arith.constant 6 : index
    %c0_62 = arith.constant 0 : index
    %c0_63 = arith.constant 0 : index
    %102 = vector.load %arg7[%c6_61, %c0_62, %c0_63] : memref<32x8x128xf32, #tpu.memory_space<vmem>>, vector<1x8x128xf32>
    %103 = vector.shape_cast %102 : vector<1x8x128xf32> to vector<8x128xf32>
    %104 = vector.shape_cast %101 : vector<8x128xf32> to vector<1x8x128xf32>
    tpu.vector_store %arg7[%c6_61, %c0_62, %c0_63], %104 {strides = array<i32>} : memref<32x8x128xf32, #tpu.memory_space<vmem>>, vector<1x8x128xf32>,
    %105 = arith.truncf %101 : vector<8x128xf32> to vector<8x128xbf16>
    %cst_64 = arith.constant dense<0.000000e+00> : vector<8x128xf32>
    %106 = tpu.matmul %105, %12, %cst_64 {dimension_numbers = #tpu.dot_dimension_numbers<[1], [0], [0], [1], [0, 0, 1, 1], [], []>} : vector<8x128xbf16>, vector<128x128xbf16>, vector<8x128xf32> -> vector<8x128xf32>
    %c7 = arith.constant 7 : index
    %c0_65 = arith.constant 0 : index
    %c0_66 = arith.constant 0 : index
    %107 = vector.load %arg7[%c7, %c0_65, %c0_66] : memref<32x8x128xf32, #tpu.memory_space<vmem>>, vector<1x8x128xf32>
    %108 = vector.shape_cast %107 : vector<1x8x128xf32> to vector<8x128xf32>
    %109 = arith.addf %106, %108 : vector<8x128xf32>
    %110 = arith.negf %109 : vector<8x128xf32>
    %111 = math.exp %110 : vector<8x128xf32>
    %cst_67 = arith.constant 1.000000e+00 : f32
    %112 = vector.broadcast %cst_67 : f32 to vector<8x128xf32>
    %113 = arith.addf %112, %111 : vector<8x128xf32>
    %114 = arith.divf %112, %113 : vector<8x128xf32>
    %c7_68 = arith.constant 7 : index
    %c0_69 = arith.constant 0 : index
    %c0_70 = arith.constant 0 : index
    %115 = vector.load %arg7[%c7_68, %c0_69, %c0_70] : memref<32x8x128xf32, #tpu.memory_space<vmem>>, vector<1x8x128xf32>
    %116 = vector.shape_cast %115 : vector<1x8x128xf32> to vector<8x128xf32>
    %117 = vector.shape_cast %114 : vector<8x128xf32> to vector<1x8x128xf32>
    tpu.vector_store %arg7[%c7_68, %c0_69, %c0_70], %117 {strides = array<i32>} : memref<32x8x128xf32, #tpu.memory_space<vmem>>, vector<1x8x128xf32>,
    %118 = arith.truncf %114 : vector<8x128xf32> to vector<8x128xbf16>
    %cst_71 = arith.constant dense<0.000000e+00> : vector<8x128xf32>
    %119 = tpu.matmul %118, %12, %cst_71 {dimension_numbers = #tpu.dot_dimension_numbers<[1], [0], [0], [1], [0, 0, 1, 1], [], []>} : vector<8x128xbf16>, vector<128x128xbf16>, vector<8x128xf32> -> vector<8x128xf32>
    %c8 = arith.constant 8 : index
    %c0_72 = arith.constant 0 : index
    %c0_73 = arith.constant 0 : index
    %120 = vector.load %arg7[%c8, %c0_72, %c0_73] : memref<32x8x128xf32, #tpu.memory_space<vmem>>, vector<1x8x128xf32>
    %121 = vector.shape_cast %120 : vector<1x8x128xf32> to vector<8x128xf32>
    %122 = arith.addf %119, %121 : vector<8x128xf32>
    %123 = arith.negf %122 : vector<8x128xf32>
    %124 = math.exp %123 : vector<8x128xf32>
    %cst_74 = arith.constant 1.000000e+00 : f32
    %125 = vector.broadcast %cst_74 : f32 to vector<8x128xf32>
    %126 = arith.addf %125, %124 : vector<8x128xf32>
    %127 = arith.divf %125, %126 : vector<8x128xf32>
    %c8_75 = arith.constant 8 : index
    %c0_76 = arith.constant 0 : index
    %c0_77 = arith.constant 0 : index
    %128 = vector.load %arg7[%c8_75, %c0_76, %c0_77] : memref<32x8x128xf32, #tpu.memory_space<vmem>>, vector<1x8x128xf32>
    %129 = vector.shape_cast %128 : vector<1x8x128xf32> to vector<8x128xf32>
    %130 = vector.shape_cast %127 : vector<8x128xf32> to vector<1x8x128xf32>
    tpu.vector_store %arg7[%c8_75, %c0_76, %c0_77], %130 {strides = array<i32>} : memref<32x8x128xf32, #tpu.memory_space<vmem>>, vector<1x8x128xf32>,
    %131 = arith.truncf %127 : vector<8x128xf32> to vector<8x128xbf16>
    %cst_78 = arith.constant dense<0.000000e+00> : vector<8x128xf32>
    %132 = tpu.matmul %131, %12, %cst_78 {dimension_numbers = #tpu.dot_dimension_numbers<[1], [0], [0], [1], [0, 0, 1, 1], [], []>} : vector<8x128xbf16>, vector<128x128xbf16>, vector<8x128xf32> -> vector<8x128xf32>
    %c9 = arith.constant 9 : index
    %c0_79 = arith.constant 0 : index
    %c0_80 = arith.constant 0 : index
    %133 = vector.load %arg7[%c9, %c0_79, %c0_80] : memref<32x8x128xf32, #tpu.memory_space<vmem>>, vector<1x8x128xf32>
    %134 = vector.shape_cast %133 : vector<1x8x128xf32> to vector<8x128xf32>
    %135 = arith.addf %132, %134 : vector<8x128xf32>
    %136 = arith.negf %135 : vector<8x128xf32>
    %137 = math.exp %136 : vector<8x128xf32>
    %cst_81 = arith.constant 1.000000e+00 : f32
    %138 = vector.broadcast %cst_81 : f32 to vector<8x128xf32>
    %139 = arith.addf %138, %137 : vector<8x128xf32>
    %140 = arith.divf %138, %139 : vector<8x128xf32>
    %c9_82 = arith.constant 9 : index
    %c0_83 = arith.constant 0 : index
    %c0_84 = arith.constant 0 : index
    %141 = vector.load %arg7[%c9_82, %c0_83, %c0_84] : memref<32x8x128xf32, #tpu.memory_space<vmem>>, vector<1x8x128xf32>
    %142 = vector.shape_cast %141 : vector<1x8x128xf32> to vector<8x128xf32>
    %143 = vector.shape_cast %140 : vector<8x128xf32> to vector<1x8x128xf32>
    tpu.vector_store %arg7[%c9_82, %c0_83, %c0_84], %143 {strides = array<i32>} : memref<32x8x128xf32, #tpu.memory_space<vmem>>, vector<1x8x128xf32>,
    %144 = arith.truncf %140 : vector<8x128xf32> to vector<8x128xbf16>
    %cst_85 = arith.constant dense<0.000000e+00> : vector<8x128xf32>
    %145 = tpu.matmul %144, %12, %cst_85 {dimension_numbers = #tpu.dot_dimension_numbers<[1], [0], [0], [1], [0, 0, 1, 1], [], []>} : vector<8x128xbf16>, vector<128x128xbf16>, vector<8x128xf32> -> vector<8x128xf32>
    %c10 = arith.constant 10 : index
    %c0_86 = arith.constant 0 : index
    %c0_87 = arith.constant 0 : index
    %146 = vector.load %arg7[%c10, %c0_86, %c0_87] : memref<32x8x128xf32, #tpu.memory_space<vmem>>, vector<1x8x128xf32>
    %147 = vector.shape_cast %146 : vector<1x8x128xf32> to vector<8x128xf32>
    %148 = arith.addf %145, %147 : vector<8x128xf32>
    %149 = arith.negf %148 : vector<8x128xf32>
    %150 = math.exp %149 : vector<8x128xf32>
    %cst_88 = arith.constant 1.000000e+00 : f32
    %151 = vector.broadcast %cst_88 : f32 to vector<8x128xf32>
    %152 = arith.addf %151, %150 : vector<8x128xf32>
    %153 = arith.divf %151, %152 : vector<8x128xf32>
    %c10_89 = arith.constant 10 : index
    %c0_90 = arith.constant 0 : index
    %c0_91 = arith.constant 0 : index
    %154 = vector.load %arg7[%c10_89, %c0_90, %c0_91] : memref<32x8x128xf32, #tpu.memory_space<vmem>>, vector<1x8x128xf32>
    %155 = vector.shape_cast %154 : vector<1x8x128xf32> to vector<8x128xf32>
    %156 = vector.shape_cast %153 : vector<8x128xf32> to vector<1x8x128xf32>
    tpu.vector_store %arg7[%c10_89, %c0_90, %c0_91], %156 {strides = array<i32>} : memref<32x8x128xf32, #tpu.memory_space<vmem>>, vector<1x8x128xf32>,
    %157 = arith.truncf %153 : vector<8x128xf32> to vector<8x128xbf16>
    %cst_92 = arith.constant dense<0.000000e+00> : vector<8x128xf32>
    %158 = tpu.matmul %157, %12, %cst_92 {dimension_numbers = #tpu.dot_dimension_numbers<[1], [0], [0], [1], [0, 0, 1, 1], [], []>} : vector<8x128xbf16>, vector<128x128xbf16>, vector<8x128xf32> -> vector<8x128xf32>
    %c11 = arith.constant 11 : index
    %c0_93 = arith.constant 0 : index
    %c0_94 = arith.constant 0 : index
    %159 = vector.load %arg7[%c11, %c0_93, %c0_94] : memref<32x8x128xf32, #tpu.memory_space<vmem>>, vector<1x8x128xf32>
    %160 = vector.shape_cast %159 : vector<1x8x128xf32> to vector<8x128xf32>
    %161 = arith.addf %158, %160 : vector<8x128xf32>
    %162 = arith.negf %161 : vector<8x128xf32>
    %163 = math.exp %162 : vector<8x128xf32>
    %cst_95 = arith.constant 1.000000e+00 : f32
    %164 = vector.broadcast %cst_95 : f32 to vector<8x128xf32>
    %165 = arith.addf %164, %163 : vector<8x128xf32>
    %166 = arith.divf %164, %165 : vector<8x128xf32>
    %c11_96 = arith.constant 11 : index
    %c0_97 = arith.constant 0 : index
    %c0_98 = arith.constant 0 : index
    %167 = vector.load %arg7[%c11_96, %c0_97, %c0_98] : memref<32x8x128xf32, #tpu.memory_space<vmem>>, vector<1x8x128xf32>
    %168 = vector.shape_cast %167 : vector<1x8x128xf32> to vector<8x128xf32>
    %169 = vector.shape_cast %166 : vector<8x128xf32> to vector<1x8x128xf32>
    tpu.vector_store %arg7[%c11_96, %c0_97, %c0_98], %169 {strides = array<i32>} : memref<32x8x128xf32, #tpu.memory_space<vmem>>, vector<1x8x128xf32>,
    %170 = arith.truncf %166 : vector<8x128xf32> to vector<8x128xbf16>
    %cst_99 = arith.constant dense<0.000000e+00> : vector<8x128xf32>
    %171 = tpu.matmul %170, %12, %cst_99 {dimension_numbers = #tpu.dot_dimension_numbers<[1], [0], [0], [1], [0, 0, 1, 1], [], []>} : vector<8x128xbf16>, vector<128x128xbf16>, vector<8x128xf32> -> vector<8x128xf32>
    %c12 = arith.constant 12 : index
    %c0_100 = arith.constant 0 : index
    %c0_101 = arith.constant 0 : index
    %172 = vector.load %arg7[%c12, %c0_100, %c0_101] : memref<32x8x128xf32, #tpu.memory_space<vmem>>, vector<1x8x128xf32>
    %173 = vector.shape_cast %172 : vector<1x8x128xf32> to vector<8x128xf32>
    %174 = arith.addf %171, %173 : vector<8x128xf32>
    %175 = arith.negf %174 : vector<8x128xf32>
    %176 = math.exp %175 : vector<8x128xf32>
    %cst_102 = arith.constant 1.000000e+00 : f32
    %177 = vector.broadcast %cst_102 : f32 to vector<8x128xf32>
    %178 = arith.addf %177, %176 : vector<8x128xf32>
    %179 = arith.divf %177, %178 : vector<8x128xf32>
    %c12_103 = arith.constant 12 : index
    %c0_104 = arith.constant 0 : index
    %c0_105 = arith.constant 0 : index
    %180 = vector.load %arg7[%c12_103, %c0_104, %c0_105] : memref<32x8x128xf32, #tpu.memory_space<vmem>>, vector<1x8x128xf32>
    %181 = vector.shape_cast %180 : vector<1x8x128xf32> to vector<8x128xf32>
    %182 = vector.shape_cast %179 : vector<8x128xf32> to vector<1x8x128xf32>
    tpu.vector_store %arg7[%c12_103, %c0_104, %c0_105], %182 {strides = array<i32>} : memref<32x8x128xf32, #tpu.memory_space<vmem>>, vector<1x8x128xf32>,
    %183 = arith.truncf %179 : vector<8x128xf32> to vector<8x128xbf16>
    %cst_106 = arith.constant dense<0.000000e+00> : vector<8x128xf32>
    %184 = tpu.matmul %183, %12, %cst_106 {dimension_numbers = #tpu.dot_dimension_numbers<[1], [0], [0], [1], [0, 0, 1, 1], [], []>} : vector<8x128xbf16>, vector<128x128xbf16>, vector<8x128xf32> -> vector<8x128xf32>
    %c13 = arith.constant 13 : index
    %c0_107 = arith.constant 0 : index
    %c0_108 = arith.constant 0 : index
    %185 = vector.load %arg7[%c13, %c0_107, %c0_108] : memref<32x8x128xf32, #tpu.memory_space<vmem>>, vector<1x8x128xf32>
    %186 = vector.shape_cast %185 : vector<1x8x128xf32> to vector<8x128xf32>
    %187 = arith.addf %184, %186 : vector<8x128xf32>
    %188 = arith.negf %187 : vector<8x128xf32>
    %189 = math.exp %188 : vector<8x128xf32>
    %cst_109 = arith.constant 1.000000e+00 : f32
    %190 = vector.broadcast %cst_109 : f32 to vector<8x128xf32>
    %191 = arith.addf %190, %189 : vector<8x128xf32>
    %192 = arith.divf %190, %191 : vector<8x128xf32>
    %c13_110 = arith.constant 13 : index
    %c0_111 = arith.constant 0 : index
    %c0_112 = arith.constant 0 : index
    %193 = vector.load %arg7[%c13_110, %c0_111, %c0_112] : memref<32x8x128xf32, #tpu.memory_space<vmem>>, vector<1x8x128xf32>
    %194 = vector.shape_cast %193 : vector<1x8x128xf32> to vector<8x128xf32>
    %195 = vector.shape_cast %192 : vector<8x128xf32> to vector<1x8x128xf32>
    tpu.vector_store %arg7[%c13_110, %c0_111, %c0_112], %195 {strides = array<i32>} : memref<32x8x128xf32, #tpu.memory_space<vmem>>, vector<1x8x128xf32>,
    %196 = arith.truncf %192 : vector<8x128xf32> to vector<8x128xbf16>
    %cst_113 = arith.constant dense<0.000000e+00> : vector<8x128xf32>
    %197 = tpu.matmul %196, %12, %cst_113 {dimension_numbers = #tpu.dot_dimension_numbers<[1], [0], [0], [1], [0, 0, 1, 1], [], []>} : vector<8x128xbf16>, vector<128x128xbf16>, vector<8x128xf32> -> vector<8x128xf32>
    %c14 = arith.constant 14 : index
    %c0_114 = arith.constant 0 : index
    %c0_115 = arith.constant 0 : index
    %198 = vector.load %arg7[%c14, %c0_114, %c0_115] : memref<32x8x128xf32, #tpu.memory_space<vmem>>, vector<1x8x128xf32>
    %199 = vector.shape_cast %198 : vector<1x8x128xf32> to vector<8x128xf32>
    %200 = arith.addf %197, %199 : vector<8x128xf32>
    %201 = arith.negf %200 : vector<8x128xf32>
    %202 = math.exp %201 : vector<8x128xf32>
    %cst_116 = arith.constant 1.000000e+00 : f32
    %203 = vector.broadcast %cst_116 : f32 to vector<8x128xf32>
    %204 = arith.addf %203, %202 : vector<8x128xf32>
    %205 = arith.divf %203, %204 : vector<8x128xf32>
    %c14_117 = arith.constant 14 : index
    %c0_118 = arith.constant 0 : index
    %c0_119 = arith.constant 0 : index
    %206 = vector.load %arg7[%c14_117, %c0_118, %c0_119] : memref<32x8x128xf32, #tpu.memory_space<vmem>>, vector<1x8x128xf32>
    %207 = vector.shape_cast %206 : vector<1x8x128xf32> to vector<8x128xf32>
    %208 = vector.shape_cast %205 : vector<8x128xf32> to vector<1x8x128xf32>
    tpu.vector_store %arg7[%c14_117, %c0_118, %c0_119], %208 {strides = array<i32>} : memref<32x8x128xf32, #tpu.memory_space<vmem>>, vector<1x8x128xf32>,
    %209 = arith.truncf %205 : vector<8x128xf32> to vector<8x128xbf16>
    %cst_120 = arith.constant dense<0.000000e+00> : vector<8x128xf32>
    %210 = tpu.matmul %209, %12, %cst_120 {dimension_numbers = #tpu.dot_dimension_numbers<[1], [0], [0], [1], [0, 0, 1, 1], [], []>} : vector<8x128xbf16>, vector<128x128xbf16>, vector<8x128xf32> -> vector<8x128xf32>
    %c15 = arith.constant 15 : index
    %c0_121 = arith.constant 0 : index
    %c0_122 = arith.constant 0 : index
    %211 = vector.load %arg7[%c15, %c0_121, %c0_122] : memref<32x8x128xf32, #tpu.memory_space<vmem>>, vector<1x8x128xf32>
    %212 = vector.shape_cast %211 : vector<1x8x128xf32> to vector<8x128xf32>
    %213 = arith.addf %210, %212 : vector<8x128xf32>
    %214 = arith.negf %213 : vector<8x128xf32>
    %215 = math.exp %214 : vector<8x128xf32>
    %cst_123 = arith.constant 1.000000e+00 : f32
    %216 = vector.broadcast %cst_123 : f32 to vector<8x128xf32>
    %217 = arith.addf %216, %215 : vector<8x128xf32>
    %218 = arith.divf %216, %217 : vector<8x128xf32>
    %c15_124 = arith.constant 15 : index
    %c0_125 = arith.constant 0 : index
    %c0_126 = arith.constant 0 : index
    %219 = vector.load %arg7[%c15_124, %c0_125, %c0_126] : memref<32x8x128xf32, #tpu.memory_space<vmem>>, vector<1x8x128xf32>
    %220 = vector.shape_cast %219 : vector<1x8x128xf32> to vector<8x128xf32>
    %221 = vector.shape_cast %218 : vector<8x128xf32> to vector<1x8x128xf32>
    tpu.vector_store %arg7[%c15_124, %c0_125, %c0_126], %221 {strides = array<i32>} : memref<32x8x128xf32, #tpu.memory_space<vmem>>, vector<1x8x128xf32>,
    %222 = arith.truncf %218 : vector<8x128xf32> to vector<8x128xbf16>
    %cst_127 = arith.constant dense<0.000000e+00> : vector<8x128xf32>
    %223 = tpu.matmul %222, %12, %cst_127 {dimension_numbers = #tpu.dot_dimension_numbers<[1], [0], [0], [1], [0, 0, 1, 1], [], []>} : vector<8x128xbf16>, vector<128x128xbf16>, vector<8x128xf32> -> vector<8x128xf32>
    %c16 = arith.constant 16 : index
    %c0_128 = arith.constant 0 : index
    %c0_129 = arith.constant 0 : index
    %224 = vector.load %arg7[%c16, %c0_128, %c0_129] : memref<32x8x128xf32, #tpu.memory_space<vmem>>, vector<1x8x128xf32>
    %225 = vector.shape_cast %224 : vector<1x8x128xf32> to vector<8x128xf32>
    %226 = arith.addf %223, %225 : vector<8x128xf32>
    %227 = arith.negf %226 : vector<8x128xf32>
    %228 = math.exp %227 : vector<8x128xf32>
    %cst_130 = arith.constant 1.000000e+00 : f32
    %229 = vector.broadcast %cst_130 : f32 to vector<8x128xf32>
    %230 = arith.addf %229, %228 : vector<8x128xf32>
    %231 = arith.divf %229, %230 : vector<8x128xf32>
    %c16_131 = arith.constant 16 : index
    %c0_132 = arith.constant 0 : index
    %c0_133 = arith.constant 0 : index
    %232 = vector.load %arg7[%c16_131, %c0_132, %c0_133] : memref<32x8x128xf32, #tpu.memory_space<vmem>>, vector<1x8x128xf32>
    %233 = vector.shape_cast %232 : vector<1x8x128xf32> to vector<8x128xf32>
    %234 = vector.shape_cast %231 : vector<8x128xf32> to vector<1x8x128xf32>
    tpu.vector_store %arg7[%c16_131, %c0_132, %c0_133], %234 {strides = array<i32>} : memref<32x8x128xf32, #tpu.memory_space<vmem>>, vector<1x8x128xf32>,
    %235 = arith.truncf %231 : vector<8x128xf32> to vector<8x128xbf16>
    %cst_134 = arith.constant dense<0.000000e+00> : vector<8x128xf32>
    %236 = tpu.matmul %235, %12, %cst_134 {dimension_numbers = #tpu.dot_dimension_numbers<[1], [0], [0], [1], [0, 0, 1, 1], [], []>} : vector<8x128xbf16>, vector<128x128xbf16>, vector<8x128xf32> -> vector<8x128xf32>
    %c17 = arith.constant 17 : index
    %c0_135 = arith.constant 0 : index
    %c0_136 = arith.constant 0 : index
    %237 = vector.load %arg7[%c17, %c0_135, %c0_136] : memref<32x8x128xf32, #tpu.memory_space<vmem>>, vector<1x8x128xf32>
    %238 = vector.shape_cast %237 : vector<1x8x128xf32> to vector<8x128xf32>
    %239 = arith.addf %236, %238 : vector<8x128xf32>
    %240 = arith.negf %239 : vector<8x128xf32>
    %241 = math.exp %240 : vector<8x128xf32>
    %cst_137 = arith.constant 1.000000e+00 : f32
    %242 = vector.broadcast %cst_137 : f32 to vector<8x128xf32>
    %243 = arith.addf %242, %241 : vector<8x128xf32>
    %244 = arith.divf %242, %243 : vector<8x128xf32>
    %c17_138 = arith.constant 17 : index
    %c0_139 = arith.constant 0 : index
    %c0_140 = arith.constant 0 : index
    %245 = vector.load %arg7[%c17_138, %c0_139, %c0_140] : memref<32x8x128xf32, #tpu.memory_space<vmem>>, vector<1x8x128xf32>
    %246 = vector.shape_cast %245 : vector<1x8x128xf32> to vector<8x128xf32>
    %247 = vector.shape_cast %244 : vector<8x128xf32> to vector<1x8x128xf32>
    tpu.vector_store %arg7[%c17_138, %c0_139, %c0_140], %247 {strides = array<i32>} : memref<32x8x128xf32, #tpu.memory_space<vmem>>, vector<1x8x128xf32>,
    %248 = arith.truncf %244 : vector<8x128xf32> to vector<8x128xbf16>
    %cst_141 = arith.constant dense<0.000000e+00> : vector<8x128xf32>
    %249 = tpu.matmul %248, %12, %cst_141 {dimension_numbers = #tpu.dot_dimension_numbers<[1], [0], [0], [1], [0, 0, 1, 1], [], []>} : vector<8x128xbf16>, vector<128x128xbf16>, vector<8x128xf32> -> vector<8x128xf32>
    %c18 = arith.constant 18 : index
    %c0_142 = arith.constant 0 : index
    %c0_143 = arith.constant 0 : index
    %250 = vector.load %arg7[%c18, %c0_142, %c0_143] : memref<32x8x128xf32, #tpu.memory_space<vmem>>, vector<1x8x128xf32>
    %251 = vector.shape_cast %250 : vector<1x8x128xf32> to vector<8x128xf32>
    %252 = arith.addf %249, %251 : vector<8x128xf32>
    %253 = arith.negf %252 : vector<8x128xf32>
    %254 = math.exp %253 : vector<8x128xf32>
    %cst_144 = arith.constant 1.000000e+00 : f32
    %255 = vector.broadcast %cst_144 : f32 to vector<8x128xf32>
    %256 = arith.addf %255, %254 : vector<8x128xf32>
    %257 = arith.divf %255, %256 : vector<8x128xf32>
    %c18_145 = arith.constant 18 : index
    %c0_146 = arith.constant 0 : index
    %c0_147 = arith.constant 0 : index
    %258 = vector.load %arg7[%c18_145, %c0_146, %c0_147] : memref<32x8x128xf32, #tpu.memory_space<vmem>>, vector<1x8x128xf32>
    %259 = vector.shape_cast %258 : vector<1x8x128xf32> to vector<8x128xf32>
    %260 = vector.shape_cast %257 : vector<8x128xf32> to vector<1x8x128xf32>
    tpu.vector_store %arg7[%c18_145, %c0_146, %c0_147], %260 {strides = array<i32>} : memref<32x8x128xf32, #tpu.memory_space<vmem>>, vector<1x8x128xf32>,
    %261 = arith.truncf %257 : vector<8x128xf32> to vector<8x128xbf16>
    %cst_148 = arith.constant dense<0.000000e+00> : vector<8x128xf32>
    %262 = tpu.matmul %261, %12, %cst_148 {dimension_numbers = #tpu.dot_dimension_numbers<[1], [0], [0], [1], [0, 0, 1, 1], [], []>} : vector<8x128xbf16>, vector<128x128xbf16>, vector<8x128xf32> -> vector<8x128xf32>
    %c19 = arith.constant 19 : index
    %c0_149 = arith.constant 0 : index
    %c0_150 = arith.constant 0 : index
    %263 = vector.load %arg7[%c19, %c0_149, %c0_150] : memref<32x8x128xf32, #tpu.memory_space<vmem>>, vector<1x8x128xf32>
    %264 = vector.shape_cast %263 : vector<1x8x128xf32> to vector<8x128xf32>
    %265 = arith.addf %262, %264 : vector<8x128xf32>
    %266 = arith.negf %265 : vector<8x128xf32>
    %267 = math.exp %266 : vector<8x128xf32>
    %cst_151 = arith.constant 1.000000e+00 : f32
    %268 = vector.broadcast %cst_151 : f32 to vector<8x128xf32>
    %269 = arith.addf %268, %267 : vector<8x128xf32>
    %270 = arith.divf %268, %269 : vector<8x128xf32>
    %c19_152 = arith.constant 19 : index
    %c0_153 = arith.constant 0 : index
    %c0_154 = arith.constant 0 : index
    %271 = vector.load %arg7[%c19_152, %c0_153, %c0_154] : memref<32x8x128xf32, #tpu.memory_space<vmem>>, vector<1x8x128xf32>
    %272 = vector.shape_cast %271 : vector<1x8x128xf32> to vector<8x128xf32>
    %273 = vector.shape_cast %270 : vector<8x128xf32> to vector<1x8x128xf32>
    tpu.vector_store %arg7[%c19_152, %c0_153, %c0_154], %273 {strides = array<i32>} : memref<32x8x128xf32, #tpu.memory_space<vmem>>, vector<1x8x128xf32>,
    %274 = arith.truncf %270 : vector<8x128xf32> to vector<8x128xbf16>
    %cst_155 = arith.constant dense<0.000000e+00> : vector<8x128xf32>
    %275 = tpu.matmul %274, %12, %cst_155 {dimension_numbers = #tpu.dot_dimension_numbers<[1], [0], [0], [1], [0, 0, 1, 1], [], []>} : vector<8x128xbf16>, vector<128x128xbf16>, vector<8x128xf32> -> vector<8x128xf32>
    %c20 = arith.constant 20 : index
    %c0_156 = arith.constant 0 : index
    %c0_157 = arith.constant 0 : index
    %276 = vector.load %arg7[%c20, %c0_156, %c0_157] : memref<32x8x128xf32, #tpu.memory_space<vmem>>, vector<1x8x128xf32>
    %277 = vector.shape_cast %276 : vector<1x8x128xf32> to vector<8x128xf32>
    %278 = arith.addf %275, %277 : vector<8x128xf32>
    %279 = arith.negf %278 : vector<8x128xf32>
    %280 = math.exp %279 : vector<8x128xf32>
    %cst_158 = arith.constant 1.000000e+00 : f32
    %281 = vector.broadcast %cst_158 : f32 to vector<8x128xf32>
    %282 = arith.addf %281, %280 : vector<8x128xf32>
    %283 = arith.divf %281, %282 : vector<8x128xf32>
    %c20_159 = arith.constant 20 : index
    %c0_160 = arith.constant 0 : index
    %c0_161 = arith.constant 0 : index
    %284 = vector.load %arg7[%c20_159, %c0_160, %c0_161] : memref<32x8x128xf32, #tpu.memory_space<vmem>>, vector<1x8x128xf32>
    %285 = vector.shape_cast %284 : vector<1x8x128xf32> to vector<8x128xf32>
    %286 = vector.shape_cast %283 : vector<8x128xf32> to vector<1x8x128xf32>
    tpu.vector_store %arg7[%c20_159, %c0_160, %c0_161], %286 {strides = array<i32>} : memref<32x8x128xf32, #tpu.memory_space<vmem>>, vector<1x8x128xf32>,
    %287 = arith.truncf %283 : vector<8x128xf32> to vector<8x128xbf16>
    %cst_162 = arith.constant dense<0.000000e+00> : vector<8x128xf32>
    %288 = tpu.matmul %287, %12, %cst_162 {dimension_numbers = #tpu.dot_dimension_numbers<[1], [0], [0], [1], [0, 0, 1, 1], [], []>} : vector<8x128xbf16>, vector<128x128xbf16>, vector<8x128xf32> -> vector<8x128xf32>
    %c21 = arith.constant 21 : index
    %c0_163 = arith.constant 0 : index
    %c0_164 = arith.constant 0 : index
    %289 = vector.load %arg7[%c21, %c0_163, %c0_164] : memref<32x8x128xf32, #tpu.memory_space<vmem>>, vector<1x8x128xf32>
    %290 = vector.shape_cast %289 : vector<1x8x128xf32> to vector<8x128xf32>
    %291 = arith.addf %288, %290 : vector<8x128xf32>
    %292 = arith.negf %291 : vector<8x128xf32>
    %293 = math.exp %292 : vector<8x128xf32>
    %cst_165 = arith.constant 1.000000e+00 : f32
    %294 = vector.broadcast %cst_165 : f32 to vector<8x128xf32>
    %295 = arith.addf %294, %293 : vector<8x128xf32>
    %296 = arith.divf %294, %295 : vector<8x128xf32>
    %c21_166 = arith.constant 21 : index
    %c0_167 = arith.constant 0 : index
    %c0_168 = arith.constant 0 : index
    %297 = vector.load %arg7[%c21_166, %c0_167, %c0_168] : memref<32x8x128xf32, #tpu.memory_space<vmem>>, vector<1x8x128xf32>
    %298 = vector.shape_cast %297 : vector<1x8x128xf32> to vector<8x128xf32>
    %299 = vector.shape_cast %296 : vector<8x128xf32> to vector<1x8x128xf32>
    tpu.vector_store %arg7[%c21_166, %c0_167, %c0_168], %299 {strides = array<i32>} : memref<32x8x128xf32, #tpu.memory_space<vmem>>, vector<1x8x128xf32>,
    %300 = arith.truncf %296 : vector<8x128xf32> to vector<8x128xbf16>
    %cst_169 = arith.constant dense<0.000000e+00> : vector<8x128xf32>
    %301 = tpu.matmul %300, %12, %cst_169 {dimension_numbers = #tpu.dot_dimension_numbers<[1], [0], [0], [1], [0, 0, 1, 1], [], []>} : vector<8x128xbf16>, vector<128x128xbf16>, vector<8x128xf32> -> vector<8x128xf32>
    %c22 = arith.constant 22 : index
    %c0_170 = arith.constant 0 : index
    %c0_171 = arith.constant 0 : index
    %302 = vector.load %arg7[%c22, %c0_170, %c0_171] : memref<32x8x128xf32, #tpu.memory_space<vmem>>, vector<1x8x128xf32>
    %303 = vector.shape_cast %302 : vector<1x8x128xf32> to vector<8x128xf32>
    %304 = arith.addf %301, %303 : vector<8x128xf32>
    %305 = arith.negf %304 : vector<8x128xf32>
    %306 = math.exp %305 : vector<8x128xf32>
    %cst_172 = arith.constant 1.000000e+00 : f32
    %307 = vector.broadcast %cst_172 : f32 to vector<8x128xf32>
    %308 = arith.addf %307, %306 : vector<8x128xf32>
    %309 = arith.divf %307, %308 : vector<8x128xf32>
    %c22_173 = arith.constant 22 : index
    %c0_174 = arith.constant 0 : index
    %c0_175 = arith.constant 0 : index
    %310 = vector.load %arg7[%c22_173, %c0_174, %c0_175] : memref<32x8x128xf32, #tpu.memory_space<vmem>>, vector<1x8x128xf32>
    %311 = vector.shape_cast %310 : vector<1x8x128xf32> to vector<8x128xf32>
    %312 = vector.shape_cast %309 : vector<8x128xf32> to vector<1x8x128xf32>
    tpu.vector_store %arg7[%c22_173, %c0_174, %c0_175], %312 {strides = array<i32>} : memref<32x8x128xf32, #tpu.memory_space<vmem>>, vector<1x8x128xf32>,
    %313 = arith.truncf %309 : vector<8x128xf32> to vector<8x128xbf16>
    %cst_176 = arith.constant dense<0.000000e+00> : vector<8x128xf32>
    %314 = tpu.matmul %313, %12, %cst_176 {dimension_numbers = #tpu.dot_dimension_numbers<[1], [0], [0], [1], [0, 0, 1, 1], [], []>} : vector<8x128xbf16>, vector<128x128xbf16>, vector<8x128xf32> -> vector<8x128xf32>
    %c23 = arith.constant 23 : index
    %c0_177 = arith.constant 0 : index
    %c0_178 = arith.constant 0 : index
    %315 = vector.load %arg7[%c23, %c0_177, %c0_178] : memref<32x8x128xf32, #tpu.memory_space<vmem>>, vector<1x8x128xf32>
    %316 = vector.shape_cast %315 : vector<1x8x128xf32> to vector<8x128xf32>
    %317 = arith.addf %314, %316 : vector<8x128xf32>
    %318 = arith.negf %317 : vector<8x128xf32>
    %319 = math.exp %318 : vector<8x128xf32>
    %cst_179 = arith.constant 1.000000e+00 : f32
    %320 = vector.broadcast %cst_179 : f32 to vector<8x128xf32>
    %321 = arith.addf %320, %319 : vector<8x128xf32>
    %322 = arith.divf %320, %321 : vector<8x128xf32>
    %c23_180 = arith.constant 23 : index
    %c0_181 = arith.constant 0 : index
    %c0_182 = arith.constant 0 : index
    %323 = vector.load %arg7[%c23_180, %c0_181, %c0_182] : memref<32x8x128xf32, #tpu.memory_space<vmem>>, vector<1x8x128xf32>
    %324 = vector.shape_cast %323 : vector<1x8x128xf32> to vector<8x128xf32>
    %325 = vector.shape_cast %322 : vector<8x128xf32> to vector<1x8x128xf32>
    tpu.vector_store %arg7[%c23_180, %c0_181, %c0_182], %325 {strides = array<i32>} : memref<32x8x128xf32, #tpu.memory_space<vmem>>, vector<1x8x128xf32>,
    %326 = arith.truncf %322 : vector<8x128xf32> to vector<8x128xbf16>
    %cst_183 = arith.constant dense<0.000000e+00> : vector<8x128xf32>
    %327 = tpu.matmul %326, %12, %cst_183 {dimension_numbers = #tpu.dot_dimension_numbers<[1], [0], [0], [1], [0, 0, 1, 1], [], []>} : vector<8x128xbf16>, vector<128x128xbf16>, vector<8x128xf32> -> vector<8x128xf32>
    %c24 = arith.constant 24 : index
    %c0_184 = arith.constant 0 : index
    %c0_185 = arith.constant 0 : index
    %328 = vector.load %arg7[%c24, %c0_184, %c0_185] : memref<32x8x128xf32, #tpu.memory_space<vmem>>, vector<1x8x128xf32>
    %329 = vector.shape_cast %328 : vector<1x8x128xf32> to vector<8x128xf32>
    %330 = arith.addf %327, %329 : vector<8x128xf32>
    %331 = arith.negf %330 : vector<8x128xf32>
    %332 = math.exp %331 : vector<8x128xf32>
    %cst_186 = arith.constant 1.000000e+00 : f32
    %333 = vector.broadcast %cst_186 : f32 to vector<8x128xf32>
    %334 = arith.addf %333, %332 : vector<8x128xf32>
    %335 = arith.divf %333, %334 : vector<8x128xf32>
    %c24_187 = arith.constant 24 : index
    %c0_188 = arith.constant 0 : index
    %c0_189 = arith.constant 0 : index
    %336 = vector.load %arg7[%c24_187, %c0_188, %c0_189] : memref<32x8x128xf32, #tpu.memory_space<vmem>>, vector<1x8x128xf32>
    %337 = vector.shape_cast %336 : vector<1x8x128xf32> to vector<8x128xf32>
    %338 = vector.shape_cast %335 : vector<8x128xf32> to vector<1x8x128xf32>
    tpu.vector_store %arg7[%c24_187, %c0_188, %c0_189], %338 {strides = array<i32>} : memref<32x8x128xf32, #tpu.memory_space<vmem>>, vector<1x8x128xf32>,
    %339 = arith.truncf %335 : vector<8x128xf32> to vector<8x128xbf16>
    %cst_190 = arith.constant dense<0.000000e+00> : vector<8x128xf32>
    %340 = tpu.matmul %339, %12, %cst_190 {dimension_numbers = #tpu.dot_dimension_numbers<[1], [0], [0], [1], [0, 0, 1, 1], [], []>} : vector<8x128xbf16>, vector<128x128xbf16>, vector<8x128xf32> -> vector<8x128xf32>
    %c25 = arith.constant 25 : index
    %c0_191 = arith.constant 0 : index
    %c0_192 = arith.constant 0 : index
    %341 = vector.load %arg7[%c25, %c0_191, %c0_192] : memref<32x8x128xf32, #tpu.memory_space<vmem>>, vector<1x8x128xf32>
    %342 = vector.shape_cast %341 : vector<1x8x128xf32> to vector<8x128xf32>
    %343 = arith.addf %340, %342 : vector<8x128xf32>
    %344 = arith.negf %343 : vector<8x128xf32>
    %345 = math.exp %344 : vector<8x128xf32>
    %cst_193 = arith.constant 1.000000e+00 : f32
    %346 = vector.broadcast %cst_193 : f32 to vector<8x128xf32>
    %347 = arith.addf %346, %345 : vector<8x128xf32>
    %348 = arith.divf %346, %347 : vector<8x128xf32>
    %c25_194 = arith.constant 25 : index
    %c0_195 = arith.constant 0 : index
    %c0_196 = arith.constant 0 : index
    %349 = vector.load %arg7[%c25_194, %c0_195, %c0_196] : memref<32x8x128xf32, #tpu.memory_space<vmem>>, vector<1x8x128xf32>
    %350 = vector.shape_cast %349 : vector<1x8x128xf32> to vector<8x128xf32>
    %351 = vector.shape_cast %348 : vector<8x128xf32> to vector<1x8x128xf32>
    tpu.vector_store %arg7[%c25_194, %c0_195, %c0_196], %351 {strides = array<i32>} : memref<32x8x128xf32, #tpu.memory_space<vmem>>, vector<1x8x128xf32>,
    %352 = arith.truncf %348 : vector<8x128xf32> to vector<8x128xbf16>
    %cst_197 = arith.constant dense<0.000000e+00> : vector<8x128xf32>
    %353 = tpu.matmul %352, %12, %cst_197 {dimension_numbers = #tpu.dot_dimension_numbers<[1], [0], [0], [1], [0, 0, 1, 1], [], []>} : vector<8x128xbf16>, vector<128x128xbf16>, vector<8x128xf32> -> vector<8x128xf32>
    %c26 = arith.constant 26 : index
    %c0_198 = arith.constant 0 : index
    %c0_199 = arith.constant 0 : index
    %354 = vector.load %arg7[%c26, %c0_198, %c0_199] : memref<32x8x128xf32, #tpu.memory_space<vmem>>, vector<1x8x128xf32>
    %355 = vector.shape_cast %354 : vector<1x8x128xf32> to vector<8x128xf32>
    %356 = arith.addf %353, %355 : vector<8x128xf32>
    %357 = arith.negf %356 : vector<8x128xf32>
    %358 = math.exp %357 : vector<8x128xf32>
    %cst_200 = arith.constant 1.000000e+00 : f32
    %359 = vector.broadcast %cst_200 : f32 to vector<8x128xf32>
    %360 = arith.addf %359, %358 : vector<8x128xf32>
    %361 = arith.divf %359, %360 : vector<8x128xf32>
    %c26_201 = arith.constant 26 : index
    %c0_202 = arith.constant 0 : index
    %c0_203 = arith.constant 0 : index
    %362 = vector.load %arg7[%c26_201, %c0_202, %c0_203] : memref<32x8x128xf32, #tpu.memory_space<vmem>>, vector<1x8x128xf32>
    %363 = vector.shape_cast %362 : vector<1x8x128xf32> to vector<8x128xf32>
    %364 = vector.shape_cast %361 : vector<8x128xf32> to vector<1x8x128xf32>
    tpu.vector_store %arg7[%c26_201, %c0_202, %c0_203], %364 {strides = array<i32>} : memref<32x8x128xf32, #tpu.memory_space<vmem>>, vector<1x8x128xf32>,
    %365 = arith.truncf %361 : vector<8x128xf32> to vector<8x128xbf16>
    %cst_204 = arith.constant dense<0.000000e+00> : vector<8x128xf32>
    %366 = tpu.matmul %365, %12, %cst_204 {dimension_numbers = #tpu.dot_dimension_numbers<[1], [0], [0], [1], [0, 0, 1, 1], [], []>} : vector<8x128xbf16>, vector<128x128xbf16>, vector<8x128xf32> -> vector<8x128xf32>
    %c27 = arith.constant 27 : index
    %c0_205 = arith.constant 0 : index
    %c0_206 = arith.constant 0 : index
    %367 = vector.load %arg7[%c27, %c0_205, %c0_206] : memref<32x8x128xf32, #tpu.memory_space<vmem>>, vector<1x8x128xf32>
    %368 = vector.shape_cast %367 : vector<1x8x128xf32> to vector<8x128xf32>
    %369 = arith.addf %366, %368 : vector<8x128xf32>
    %370 = arith.negf %369 : vector<8x128xf32>
    %371 = math.exp %370 : vector<8x128xf32>
    %cst_207 = arith.constant 1.000000e+00 : f32
    %372 = vector.broadcast %cst_207 : f32 to vector<8x128xf32>
    %373 = arith.addf %372, %371 : vector<8x128xf32>
    %374 = arith.divf %372, %373 : vector<8x128xf32>
    %c27_208 = arith.constant 27 : index
    %c0_209 = arith.constant 0 : index
    %c0_210 = arith.constant 0 : index
    %375 = vector.load %arg7[%c27_208, %c0_209, %c0_210] : memref<32x8x128xf32, #tpu.memory_space<vmem>>, vector<1x8x128xf32>
    %376 = vector.shape_cast %375 : vector<1x8x128xf32> to vector<8x128xf32>
    %377 = vector.shape_cast %374 : vector<8x128xf32> to vector<1x8x128xf32>
    tpu.vector_store %arg7[%c27_208, %c0_209, %c0_210], %377 {strides = array<i32>} : memref<32x8x128xf32, #tpu.memory_space<vmem>>, vector<1x8x128xf32>,
    %378 = arith.truncf %374 : vector<8x128xf32> to vector<8x128xbf16>
    %cst_211 = arith.constant dense<0.000000e+00> : vector<8x128xf32>
    %379 = tpu.matmul %378, %12, %cst_211 {dimension_numbers = #tpu.dot_dimension_numbers<[1], [0], [0], [1], [0, 0, 1, 1], [], []>} : vector<8x128xbf16>, vector<128x128xbf16>, vector<8x128xf32> -> vector<8x128xf32>
    %c28 = arith.constant 28 : index
    %c0_212 = arith.constant 0 : index
    %c0_213 = arith.constant 0 : index
    %380 = vector.load %arg7[%c28, %c0_212, %c0_213] : memref<32x8x128xf32, #tpu.memory_space<vmem>>, vector<1x8x128xf32>
    %381 = vector.shape_cast %380 : vector<1x8x128xf32> to vector<8x128xf32>
    %382 = arith.addf %379, %381 : vector<8x128xf32>
    %383 = arith.negf %382 : vector<8x128xf32>
    %384 = math.exp %383 : vector<8x128xf32>
    %cst_214 = arith.constant 1.000000e+00 : f32
    %385 = vector.broadcast %cst_214 : f32 to vector<8x128xf32>
    %386 = arith.addf %385, %384 : vector<8x128xf32>
    %387 = arith.divf %385, %386 : vector<8x128xf32>
    %c28_215 = arith.constant 28 : index
    %c0_216 = arith.constant 0 : index
    %c0_217 = arith.constant 0 : index
    %388 = vector.load %arg7[%c28_215, %c0_216, %c0_217] : memref<32x8x128xf32, #tpu.memory_space<vmem>>, vector<1x8x128xf32>
    %389 = vector.shape_cast %388 : vector<1x8x128xf32> to vector<8x128xf32>
    %390 = vector.shape_cast %387 : vector<8x128xf32> to vector<1x8x128xf32>
    tpu.vector_store %arg7[%c28_215, %c0_216, %c0_217], %390 {strides = array<i32>} : memref<32x8x128xf32, #tpu.memory_space<vmem>>, vector<1x8x128xf32>,
    %391 = arith.truncf %387 : vector<8x128xf32> to vector<8x128xbf16>
    %cst_218 = arith.constant dense<0.000000e+00> : vector<8x128xf32>
    %392 = tpu.matmul %391, %12, %cst_218 {dimension_numbers = #tpu.dot_dimension_numbers<[1], [0], [0], [1], [0, 0, 1, 1], [], []>} : vector<8x128xbf16>, vector<128x128xbf16>, vector<8x128xf32> -> vector<8x128xf32>
    %c29 = arith.constant 29 : index
    %c0_219 = arith.constant 0 : index
    %c0_220 = arith.constant 0 : index
    %393 = vector.load %arg7[%c29, %c0_219, %c0_220] : memref<32x8x128xf32, #tpu.memory_space<vmem>>, vector<1x8x128xf32>
    %394 = vector.shape_cast %393 : vector<1x8x128xf32> to vector<8x128xf32>
    %395 = arith.addf %392, %394 : vector<8x128xf32>
    %396 = arith.negf %395 : vector<8x128xf32>
    %397 = math.exp %396 : vector<8x128xf32>
    %cst_221 = arith.constant 1.000000e+00 : f32
    %398 = vector.broadcast %cst_221 : f32 to vector<8x128xf32>
    %399 = arith.addf %398, %397 : vector<8x128xf32>
    %400 = arith.divf %398, %399 : vector<8x128xf32>
    %c29_222 = arith.constant 29 : index
    %c0_223 = arith.constant 0 : index
    %c0_224 = arith.constant 0 : index
    %401 = vector.load %arg7[%c29_222, %c0_223, %c0_224] : memref<32x8x128xf32, #tpu.memory_space<vmem>>, vector<1x8x128xf32>
    %402 = vector.shape_cast %401 : vector<1x8x128xf32> to vector<8x128xf32>
    %403 = vector.shape_cast %400 : vector<8x128xf32> to vector<1x8x128xf32>
    tpu.vector_store %arg7[%c29_222, %c0_223, %c0_224], %403 {strides = array<i32>} : memref<32x8x128xf32, #tpu.memory_space<vmem>>, vector<1x8x128xf32>,
    %404 = arith.truncf %400 : vector<8x128xf32> to vector<8x128xbf16>
    %cst_225 = arith.constant dense<0.000000e+00> : vector<8x128xf32>
    %405 = tpu.matmul %404, %12, %cst_225 {dimension_numbers = #tpu.dot_dimension_numbers<[1], [0], [0], [1], [0, 0, 1, 1], [], []>} : vector<8x128xbf16>, vector<128x128xbf16>, vector<8x128xf32> -> vector<8x128xf32>
    %c30 = arith.constant 30 : index
    %c0_226 = arith.constant 0 : index
    %c0_227 = arith.constant 0 : index
    %406 = vector.load %arg7[%c30, %c0_226, %c0_227] : memref<32x8x128xf32, #tpu.memory_space<vmem>>, vector<1x8x128xf32>
    %407 = vector.shape_cast %406 : vector<1x8x128xf32> to vector<8x128xf32>
    %408 = arith.addf %405, %407 : vector<8x128xf32>
    %409 = arith.negf %408 : vector<8x128xf32>
    %410 = math.exp %409 : vector<8x128xf32>
    %cst_228 = arith.constant 1.000000e+00 : f32
    %411 = vector.broadcast %cst_228 : f32 to vector<8x128xf32>
    %412 = arith.addf %411, %410 : vector<8x128xf32>
    %413 = arith.divf %411, %412 : vector<8x128xf32>
    %c30_229 = arith.constant 30 : index
    %c0_230 = arith.constant 0 : index
    %c0_231 = arith.constant 0 : index
    %414 = vector.load %arg7[%c30_229, %c0_230, %c0_231] : memref<32x8x128xf32, #tpu.memory_space<vmem>>, vector<1x8x128xf32>
    %415 = vector.shape_cast %414 : vector<1x8x128xf32> to vector<8x128xf32>
    %416 = vector.shape_cast %413 : vector<8x128xf32> to vector<1x8x128xf32>
    tpu.vector_store %arg7[%c30_229, %c0_230, %c0_231], %416 {strides = array<i32>} : memref<32x8x128xf32, #tpu.memory_space<vmem>>, vector<1x8x128xf32>,
    %417 = arith.truncf %413 : vector<8x128xf32> to vector<8x128xbf16>
    %cst_232 = arith.constant dense<0.000000e+00> : vector<8x128xf32>
    %418 = tpu.matmul %417, %12, %cst_232 {dimension_numbers = #tpu.dot_dimension_numbers<[1], [0], [0], [1], [0, 0, 1, 1], [], []>} : vector<8x128xbf16>, vector<128x128xbf16>, vector<8x128xf32> -> vector<8x128xf32>
    %c31 = arith.constant 31 : index
    %c0_233 = arith.constant 0 : index
    %c0_234 = arith.constant 0 : index
    %419 = vector.load %arg7[%c31, %c0_233, %c0_234] : memref<32x8x128xf32, #tpu.memory_space<vmem>>, vector<1x8x128xf32>
    %420 = vector.shape_cast %419 : vector<1x8x128xf32> to vector<8x128xf32>
    %421 = arith.addf %418, %420 : vector<8x128xf32>
    %422 = arith.negf %421 : vector<8x128xf32>
    %423 = math.exp %422 : vector<8x128xf32>
    %cst_235 = arith.constant 1.000000e+00 : f32
    %424 = vector.broadcast %cst_235 : f32 to vector<8x128xf32>
    %425 = arith.addf %424, %423 : vector<8x128xf32>
    %426 = arith.divf %424, %425 : vector<8x128xf32>
    %c31_236 = arith.constant 31 : index
    %c0_237 = arith.constant 0 : index
    %c0_238 = arith.constant 0 : index
    %427 = vector.load %arg7[%c31_236, %c0_237, %c0_238] : memref<32x8x128xf32, #tpu.memory_space<vmem>>, vector<1x8x128xf32>
    %428 = vector.shape_cast %427 : vector<1x8x128xf32> to vector<8x128xf32>
    %429 = vector.shape_cast %426 : vector<8x128xf32> to vector<1x8x128xf32>
    tpu.vector_store %arg7[%c31_236, %c0_237, %c0_238], %429 {strides = array<i32>} : memref<32x8x128xf32, #tpu.memory_space<vmem>>, vector<1x8x128xf32>,
    %c0_239 = arith.constant 0 : index
    %c0_240 = arith.constant 0 : index
    %430 = vector.load %arg6[%c0_239, %c0_240] : memref<8x128xf32, #tpu.memory_space<vmem>>, vector<8x128xf32>
    tpu.vector_store %arg6[%c0_239, %c0_240], %426 {strides = array<i32>} : memref<8x128xf32, #tpu.memory_space<vmem>>, vector<8x128xf32>,
    %c0_241 = arith.constant 0 : index
    %c0_242 = arith.constant 0 : index
    %c0_243 = arith.constant 0 : index
    %431 = vector.load %arg7[%c0_241, %c0_242, %c0_243] : memref<32x8x128xf32, #tpu.memory_space<vmem>>, vector<32x8x128xf32>
    %432 = tpu.transpose %431, [1, 0, 2] : vector<32x8x128xf32> -> vector<8x32x128xf32>
    %433 = arith.truncf %432 : vector<8x32x128xf32> to vector<8x32x128xbf16>
    %c0_244 = arith.constant 0 : index
    %c0_245 = arith.constant 0 : index
    %c0_246 = arith.constant 0 : index
    %434 = vector.load %arg5[%c0_244, %c0_245, %c0_246] : memref<8x32x128xbf16, #tpu.memory_space<vmem>>, vector<8x32x128xbf16>
    tpu.vector_store %arg5[%c0_244, %c0_245, %c0_246], %433 {strides = array<i32>} : memref<8x32x128xbf16, #tpu.memory_space<vmem>>, vector<8x32x128xbf16>,
    return
  }
  func.func @transform_0(%arg0: i32) -> (i32, i32, i32) {
    %c0_i32 = arith.constant 0 : i32
    %c0_i32_0 = arith.constant 0 : i32
    %c0_i32_1 = arith.constant 0 : i32
    return %arg0, %c0_i32, %c0_i32_0 : i32, i32, i32
  }
  func.func @transform_4(%arg0: i32) -> (i32, i32, i32) {
    %c0_i32 = arith.constant 0 : i32
    %c0_i32_0 = arith.constant 0 : i32
    %c0_i32_1 = arith.constant 0 : i32
    return %c0_i32, %arg0, %c0_i32_0 : i32, i32, i32
  }
}

</mosaic_0001>

<llo_original>
// kernel: tpu_custom_call.1
$region0: #{tpu_custom_call.1}
  #allocation0 [shape = 'u32[]', space=smem, size = 0x4, offset = 0x4, fixed_abs, tag = 'smem constant byte address 0x4 - core index']
  #allocation1 [shape = 'u32[144,128]{1,0:T(1,128)}', space=vmem, size = 0x12000, scoped, tag = 'internal scratch']
  #allocation2 [shape = 'f32[8,128]{1,0:T(8,128)}', space=vmem, size = 0x1000, scoped, tag = 'scratch operand']
  #allocation3 [shape = 'f32[32,8,128]{2,1,0:T(8,128)}', space=vmem, size = 0x20000, scoped, tag = 'scratch operand']
  #allocation4 [shape = 'bf16[128,128]{1,0:T(16,128)(2,1)}', space=vmem, size = 0x8000, scoped, tag = 'scratch operand']
  #allocation5 [shape = 'bf16[128,128]{1,0:T(16,128)(2,1)}', space=vmem, size = 0x8000, scoped, tag = 'scratch operand']
  #allocation6 [shape = 'f32[1,128]{1,0:T(1,128)}', space=vmem, size = 0x200, scoped, tag = 'scratch operand']
  #allocation7 [shape = 's32[3]{0}', space=sflag, size = 0xc, scoped, tag = 'scratch operand']
  #allocation12 [shape = 's32[]', space=sflag, size = 0x4, offset = 0, fixed_abs, tag = 'sflag constant byte address 0x0 - dummy sync flag']
  #allocation13 [shape = 's32[]', space=sflag, size = 0x4, offset = 0, fixed_abs, tag = 'sflag constant byte address 0x0 - dummy sync flag']
  #allocation14 [shape = 'u32[]', space=smem, size = 0x4, offset = 0x44, fixed_abs, tag = 'smem constant byte address 0x44 - assertion arg 0']
  #allocation15 [shape = 'u32[]', space=smem, size = 0x4, offset = 0x48, fixed_abs, tag = 'smem constant byte address 0x48 - assertion arg 1']
  #allocation16 [shape = 's32[]', space=sflag, size = 0x4, offset = 0, fixed_abs, tag = 'sflag constant byte address 0x0 - dummy sync flag']
  #allocation17 [shape = 's32[]', space=sflag, size = 0x4, offset = 0, fixed_abs, tag = 'sflag constant byte address 0x0 - dummy sync flag']
  #allocation18 [shape = 's32[]', space=sflag, size = 0x4, offset = 0, fixed_abs, tag = 'sflag constant byte address 0x0 - dummy sync flag']
  #allocation19 [shape = 's32[]', space=sflag, size = 0x4, offset = 0, fixed_abs, tag = 'sflag constant byte address 0x0 - dummy sync flag']
  #allocation20 [shape = 's32[]', space=sflag, size = 0x4, offset = 0, fixed_abs, tag = 'sflag constant byte address 0x0 - dummy sync flag']
  %s0 = inlined_call_operand.hbm [shape: bf16[64,8,128], index: 0, kind: input, shape index: {}]
  %s1 = inlined_call_operand.hbm [shape: bf16[128,128], index: 1, kind: input, shape index: {}]
  %s2 = inlined_call_operand.hbm [shape: bf16[128,128], index: 2, kind: input, shape index: {}]
  %s3 = inlined_call_operand.hbm [shape: f32[1,128], index: 3, kind: input, shape index: {}]
  %s4 = inlined_call_operand.hbm [shape: bf16[8,64,128], index: 4, kind: output, shape index: {}]
  %s5 = sld [smem:[#allocation0]]
  $region57: #{tpu_custom_call.1} parent=0
    _
  %s7 = ssub.s32 1, %s5
  %s8 = scalar_select 0, %s7, %s5
  $region1: #{tpu_custom_call.1} parent=0
    #allocation8 [shape = 'u8[131072]{0}', space=vmem, size = 0x20000, scoped, tag = 'input window, operand 0']
    #allocation9 [shape = 's32[2]{0}', space=sflag, size = 0x8, scoped, tag = 'scoped memory for tpu_custom_call.1']
    #allocation10 [shape = 's32[2]{0}', space=sflag, size = 0x8, scoped, tag = 'scoped memory for tpu_custom_call.1']
    #allocation11 [shape = 'u8[131072]{0}', space=vmem, size = 0x20000, scoped, tag = 'output window, operand 0']
    %9 = vsyncpa [#allocation9], 0
    %s10 = scalar_lea.sflag [#allocation9], 1
    %11 = vsyncpa %s10, 0
    %12 = vsyncpa [#allocation10], 0
    %s13 = scalar_lea.sflag [#allocation10], 1
    %14 = vsyncpa %s13, 0
    loop: start=0, step=1, limit=4
    $region2: #{tpu_custom_call.1} parent=1 // loop_pre_header
      _
    $region3: #{tpu_custom_call.1} parent=1 // loop_header
      %s16 = sphi 0, %s20
      %p17 = scmp.ge.s32.totalorder %s16, 4
      %s26 = sphi 0, %s28
      %s29 = sphi 0, %s26
      %s30 = sphi 0, %s29
      %s46 = sphi 0, %s30
      %s52 = sphi 0, %s54
      %s55 = sphi 0, %s52
      %s56 = sphi 0, %s55
      %s72 = sphi 0, %s56
    $region4: #{tpu_custom_call.1} parent=1 // loop_header_branch
      %19 = sbr.rel (%p17) target = $region8
    $region5: #{tpu_custom_call.1} parent=1 // loop_body
      %s21 = ssub.s32 %s16, 1
      %s22 = ssub.s32 %s16, 2
      %s23 = sadd.s32 %s16, 1
      %s24 = ssub.s32 %s16, %s23
      %p25 = scmp.eq.s32.totalorder %s24, 0
      %s27 = sadd.s32 %s26, 1
      %s28 = scalar_select %p25, %s26, %s27
      %p31 = pneg %p25
      %p32 = scmp.eq.s32.totalorder %s16, 1
      %p33 = por %p31, %p32
      %p34 = scmp.ne.s32.totalorder %s26, %s29
      %p35 = scmp.eq.s32.totalorder %s16, 0
      %p36 = por %p34, %p35
      %p37 = scmp.ne.s32.totalorder %s26, %s29
      %p38 = scmp.eq.s32.totalorder %s21, 1
      %p39 = por %p37, %p38
      %p40 = scmp.ne.s32.totalorder %s29, %s30
      %p41 = scmp.eq.s32.totalorder %s21, 0
      %p42 = por %p40, %p41
      %p43 = scmp.ne.s32.totalorder %s29, %s30
      %p44 = scmp.eq.s32.totalorder %s22, 1
      %p45 = por %p43, %p44
      %p47 = scmp.ne.s32.totalorder %s30, %s46
      %p48 = scmp.eq.s32.totalorder %s22, 0
      %p49 = por %p47, %p48
      %s50 = ssub.s32 %s16, %s23
      %p51 = scmp.eq.s32.totalorder %s50, 0
      %s53 = sadd.s32 %s52, 1
      %s54 = scalar_select %p51, %s52, %s53
      %p57 = pneg %p51
      %p58 = scmp.eq.s32.totalorder %s16, 1
      %p59 = por %p57, %p58
      %p60 = scmp.ne.s32.totalorder %s52, %s55
      %p61 = scmp.eq.s32.totalorder %s16, 0
      %p62 = por %p60, %p61
      %p63 = scmp.ne.s32.totalorder %s52, %s55
      %p64 = scmp.eq.s32.totalorder %s21, 1
      %p65 = por %p63, %p64
      %p66 = scmp.ne.s32.totalorder %s55, %s56
      %p67 = scmp.eq.s32.totalorder %s21, 0
      %p68 = por %p66, %p67
      %p69 = scmp.ne.s32.totalorder %s55, %s56
      %p70 = scmp.eq.s32.totalorder %s22, 1
      %p71 = por %p69, %p70
      %p73 = scmp.ne.s32.totalorder %s56, %s72
      %p74 = scmp.eq.s32.totalorder %s22, 0
      %p75 = por %p73, %p74
      %p76 = scmp.le.s32.totalorder 1, %s16
      %p77 = scmp.lt.s32.totalorder %s16, 3
      %p78 = pnand %p76, %p77
      %p79 = pneg %p78
      // Predicated region
      $region9: #{tpu_custom_call.1} parent=5 // pred_check
        _
      $region10: #{tpu_custom_call.1} parent=5 // pred_check_branch
        %81 = sbr.rel (%p78) target = $region12
      $region11: #{tpu_custom_call.1} parent=5 // pred_region
        %s82 = ssub.s32 %s16, 1
      $region12: #{tpu_custom_call.1} parent=5 // pred_fallthru
        _
      %p83 = scmp.lt.s32.totalorder %s16, 2
      // Predicated region
      $region13: #{tpu_custom_call.1} parent=5 // pred_check
        %p84 = pneg %p83
      $region14: #{tpu_custom_call.1} parent=5 // pred_check_branch
        %86 = sbr.rel (%p84) target = $region16
      $region15: #{tpu_custom_call.1} parent=5 // pred_region
        // Predicated region
        $region17: #{tpu_custom_call.1} parent=15 // pred_check
          %p87 = pneg %p36
        $region18: #{tpu_custom_call.1} parent=15 // pred_check_branch
          %89 = sbr.rel (%p87) target = $region20
        $region19: #{tpu_custom_call.1} parent=15 // pred_region
          %s90 = sand.u32 %s26, 1
          %s91 = scalar_lea.sflag [#allocation9], %s90
          %s92 = sand.u32 %s26, 1
          %s93 = smul.addr %s92, 128
          %s94 = scalar_lea.vmem [#allocation8], %s93
          %s95 = smul.u32 32, %s16
          %s97 = ssub.s32 2048, 2048
          %98 = vsyncadd %s91, %s97
          %s99 = smul.addr %s95, 64
          %s100 = scalar_lea.hbm %s0, %s99
          %s101 = sshll.u32 %s94, 4
          %s102 = int_to_ptr.vmem [resolvable:$true] %s101
          %107 = dma.hbm_to_vmem [thread:$0]  %s100, 2048, %s102, %s91, 64, 64, 4
        $region20: #{tpu_custom_call.1} parent=15 // pred_fallthru
          _
      $region16: #{tpu_custom_call.1} parent=5 // pred_fallthru
        _
      %p108 = scmp.le.s32.totalorder 1, %s16
      %p109 = scmp.lt.s32.totalorder %s16, 3
      %p110 = pnand %p108, %p109
      %p111 = pneg %p110
      // Predicated region
      $region21: #{tpu_custom_call.1} parent=5 // pred_check
        _
      $region22: #{tpu_custom_call.1} parent=5 // pred_check_branch
        %113 = sbr.rel (%p110) target = $region24
      $region23: #{tpu_custom_call.1} parent=5 // pred_region
        %s114 = ssub.s32 %s16, 1
        %s115 = sand.u32 %s29, 1
        %s116 = scalar_lea.sflag [#allocation9], %s115
        %s117 = sand.u32 %s29, 1
        %s118 = smul.addr %s117, 128
        %s119 = scalar_lea.vmem [#allocation8], %s118
        // Predicated region
        $region25: #{tpu_custom_call.1} parent=23 // pred_check
          %p120 = pneg %p42
        $region26: #{tpu_custom_call.1} parent=23 // pred_check_branch
          %122 = sbr.rel (%p120) target = $region28
        $region27: #{tpu_custom_call.1} parent=23 // pred_region
          %123 = dma.done %s116, 2048
        $region28: #{tpu_custom_call.1} parent=23 // pred_fallthru
          _
        %s124 = sand.u32 %s29, 1
        %s125 = scalar_lea.sflag [#allocation9], %s124
        %s126 = sand.u32 %s29, 1
        %s127 = smul.addr %s126, 128
        %s128 = scalar_lea.vmem [#allocation8], %s127
        %p129 = pneg %p42
        %p130 = pneg %p39
        %p131 = pneg %p68
        %p132 = pneg %p65
        %s133 = sand.u32 %s55, 1
        %s134 = scalar_lea.sflag [#allocation10], %s133
        %s135 = sand.u32 %s55, 1
        %s136 = smul.addr %s135, 128
        %s137 = scalar_lea.vmem [#allocation11], %s136
        %s138 = smul.u32 32, %s21
        %s139 = smul.u32 4, %s21
        %p141 = scmp.eq.s32.totalorder %s21, 0
        // Predicated region
        $region29: #{tpu_custom_call.1} parent=23 // pred_check
          %p142 = pneg %p141
        $region30: #{tpu_custom_call.1} parent=23 // pred_check_branch
          %144 = sbr.rel (%p142) target = $region32
        $region31: #{tpu_custom_call.1} parent=23 // pred_region
          // Predicated region
          $region33: #{tpu_custom_call.1} parent=31 // pred_check
            _
          $region34: #{tpu_custom_call.1} parent=31 // pred_check_branch
            %146 = sbr.rel target = $region36
          $region35: #{tpu_custom_call.1} parent=31 // pred_region
            %147 = sst [smem:[#allocation14]] [#allocation13]
            %148 = sst [smem:[#allocation15]] [#allocation12]
          $region36: #{tpu_custom_call.1} parent=31 // pred_fallthru
            _
          %150 = shalt.err (0)
          %s152 = sshll.u32 [#allocation4], 4
          %s153 = int_to_ptr.vmem [resolvable:$true] %s152
          %155 = dma.hbm_to_vmem [thread:$0]  %s1, 1024, %s153, [#allocation7]
          %s156 = scalar_lea.sflag [#allocation7], 1
          // Predicated region
          $region37: #{tpu_custom_call.1} parent=31 // pred_check
            _
          $region38: #{tpu_custom_call.1} parent=31 // pred_check_branch
            %158 = sbr.rel target = $region40
          $region39: #{tpu_custom_call.1} parent=31 // pred_region
            %159 = sst [smem:[#allocation14]] [#allocation17]
            %160 = sst [smem:[#allocation15]] [#allocation16]
          $region40: #{tpu_custom_call.1} parent=31 // pred_fallthru
            _
          %162 = shalt.err (0)
          %s164 = sshll.u32 [#allocation5], 4
          %s165 = int_to_ptr.vmem [resolvable:$true] %s164
          %167 = dma.hbm_to_vmem [thread:$0]  %s2, 1024, %s165, %s156
          %s168 = scalar_lea.sflag [#allocation7], 2
          // Predicated region
          $region41: #{tpu_custom_call.1} parent=31 // pred_check
            _
          $region42: #{tpu_custom_call.1} parent=31 // pred_check_branch
            %170 = sbr.rel target = $region44
          $region43: #{tpu_custom_call.1} parent=31 // pred_region
            %171 = sst [smem:[#allocation14]] [#allocation19]
            %172 = sst [smem:[#allocation15]] [#allocation18]
          $region44: #{tpu_custom_call.1} parent=31 // pred_fallthru
            _
          %174 = shalt.err (0)
          %s176 = sshll.u32 [#allocation6], 4
          %s177 = int_to_ptr.vmem [resolvable:$true] %s176
          %179 = dma.hbm_to_vmem [thread:$0]  %s3, 16, %s177, %s168
          %s180 = smul.u32 4, 16
          %s181 = smul.u32 %s180, 1
          %s182 = sshll.u32 %s181, 4
          %183 = dma.done [#allocation7], %s182
          %s184 = sshll.u32 %s181, 4
          %185 = dma.done %s156, %s184
          %s186 = smul.u32 1, 1
          %s187 = sshll.u32 %s186, 4
          %188 = dma.done %s168, %s187
          %189 = vst [vmem:[#allocation2] sm:$0xff] 0.0
        $region32: #{tpu_custom_call.1} parent=23 // pred_fallthru
          _
        %v190 = vld [vmem:[%s119] sm:$0xf]
        %v191 = vld [vmem:[%s119 + $0x4] sm:$0xf]
        %v192 = vld [vmem:[%s119 + $0x8] sm:$0xf]
        %v193 = vld [vmem:[%s119 + $0xc] sm:$0xf]
        %v194 = vld [vmem:[%s119 + $0x10] sm:$0xf]
        %v195 = vld [vmem:[%s119 + $0x14] sm:$0xf]
        %v196 = vld [vmem:[%s119 + $0x18] sm:$0xf]
        %v197 = vld [vmem:[%s119 + $0x1c] sm:$0xf]
        %v198 = vld [vmem:[%s119 + $0x20] sm:$0xf]
        %v199 = vld [vmem:[%s119 + $0x24] sm:$0xf]
        %v200 = vld [vmem:[%s119 + $0x28] sm:$0xf]
        %v201 = vld [vmem:[%s119 + $0x2c] sm:$0xf]
        %v202 = vld [vmem:[%s119 + $0x30] sm:$0xf]
        %v203 = vld [vmem:[%s119 + $0x34] sm:$0xf]
        %v204 = vld [vmem:[%s119 + $0x38] sm:$0xf]
        %v205 = vld [vmem:[%s119 + $0x3c] sm:$0xf]
        %v206 = vld [vmem:[%s119 + $0x40] sm:$0xf]
        %v207 = vld [vmem:[%s119 + $0x44] sm:$0xf]
        %v208 = vld [vmem:[%s119 + $0x48] sm:$0xf]
        %v209 = vld [vmem:[%s119 + $0x4c] sm:$0xf]
        %v210 = vld [vmem:[%s119 + $0x50] sm:$0xf]
        %v211 = vld [vmem:[%s119 + $0x54] sm:$0xf]
        %v212 = vld [vmem:[%s119 + $0x58] sm:$0xf]
        %v213 = vld [vmem:[%s119 + $0x5c] sm:$0xf]
        %v214 = vld [vmem:[%s119 + $0x60] sm:$0xf]
        %v215 = vld [vmem:[%s119 + $0x64] sm:$0xf]
        %v216 = vld [vmem:[%s119 + $0x68] sm:$0xf]
        %v217 = vld [vmem:[%s119 + $0x6c] sm:$0xf]
        %v218 = vld [vmem:[%s119 + $0x70] sm:$0xf]
        %v219 = vld [vmem:[%s119 + $0x74] sm:$0xf]
        %v220 = vld [vmem:[%s119 + $0x78] sm:$0xf]
        %v221 = vld [vmem:[%s119 + $0x7c] sm:$0xf]
        %v222 = vld [vmem:[#allocation5] sm:$0xff]
        %v223 = vld [vmem:[#allocation5 + $0x8] sm:$0xff]
        %v224 = vld [vmem:[#allocation5 + $0x10] sm:$0xff]
        %v225 = vld [vmem:[#allocation5 + $0x18] sm:$0xff]
        %v226 = vld [vmem:[#allocation5 + $0x20] sm:$0xff]
        %v227 = vld [vmem:[#allocation5 + $0x28] sm:$0xff]
        %v228 = vld [vmem:[#allocation5 + $0x30] sm:$0xff]
        %v229 = vld [vmem:[#allocation5 + $0x38] sm:$0xff]
        %v230 = vld [vmem:[#allocation6] sm:$0x1]
        %v232 = vlaneseq
        %v233 = vshrl.u32 %v232, 7
        %v234 = vsub.s32 0, %v233
        %v235 = vrot.slane %v230, %v234
        %v269 = vunpack.c.l.b16 %v190
        %v270 = vunpack.c.l.b16 %v191
        %v271 = vunpack.c.l.b16 %v192
        %v272 = vunpack.c.l.b16 %v193
        %v273 = vunpack.c.l.b16 %v194
        %v274 = vunpack.c.l.b16 %v195
        %v275 = vunpack.c.l.b16 %v196
        %v276 = vunpack.c.l.b16 %v197
        %v277 = vunpack.c.l.b16 %v198
        %v278 = vunpack.c.l.b16 %v199
        %v279 = vunpack.c.l.b16 %v200
        %v280 = vunpack.c.l.b16 %v201
        %v281 = vunpack.c.l.b16 %v202
        %v282 = vunpack.c.l.b16 %v203
        %v283 = vunpack.c.l.b16 %v204
        %v284 = vunpack.c.l.b16 %v205
        %v285 = vunpack.c.l.b16 %v206
        %v286 = vunpack.c.l.b16 %v207
        %v287 = vunpack.c.l.b16 %v208
        %v288 = vunpack.c.l.b16 %v209
        %v289 = vunpack.c.l.b16 %v210
        %v290 = vunpack.c.l.b16 %v211
        %v291 = vunpack.c.l.b16 %v212
        %v292 = vunpack.c.l.b16 %v213
        %v293 = vunpack.c.l.b16 %v214
        %v294 = vunpack.c.l.b16 %v215
        %v295 = vunpack.c.l.b16 %v216
        %v296 = vunpack.c.l.b16 %v217
        %v297 = vunpack.c.l.b16 %v218
        %v298 = vunpack.c.l.b16 %v219
        %v299 = vunpack.c.l.b16 %v220
        %v300 = vunpack.c.l.b16 %v221
        %v301 = vpack.c.b16 %v270, %v269
        %v302 = vpack.c.b16 %v272, %v271
        %v303 = vpack.c.b16 %v274, %v273
        %v304 = vpack.c.b16 %v276, %v275
        %v305 = vpack.c.b16 %v278, %v277
        %v306 = vpack.c.b16 %v280, %v279
        %v307 = vpack.c.b16 %v282, %v281
        %v308 = vpack.c.b16 %v284, %v283
        %v309 = vpack.c.b16 %v286, %v285
        %v310 = vpack.c.b16 %v288, %v287
        %v311 = vpack.c.b16 %v290, %v289
        %v312 = vpack.c.b16 %v292, %v291
        %v313 = vpack.c.b16 %v294, %v293
        %v314 = vpack.c.b16 %v296, %v295
        %v315 = vpack.c.b16 %v298, %v297
        %v316 = vpack.c.b16 %v300, %v299
        %333 = vmatprep.subr.bf16.mxu0 0
        %334 = vmatpush1.bf16.msra.mxu0 %v222
        %335 = vmatprep.subr.bf16.mxu0 0
        %336 = vmatpush1.bf16.msra.mxu0 %v223
        %337 = vmatprep.subr.bf16.mxu0 0
        %338 = vmatpush1.bf16.msra.mxu0 %v224
        %339 = vmatprep.subr.bf16.mxu0 0
        %340 = vmatpush1.bf16.msra.mxu0 %v225
        %341 = vmatprep.subr.bf16.mxu0 0
        %342 = vmatpush1.bf16.msra.mxu0 %v226
        %343 = vmatprep.subr.bf16.mxu0 0
        %344 = vmatpush1.bf16.msra.mxu0 %v227
        %345 = vmatprep.subr.bf16.mxu0 0
        %346 = vmatpush1.bf16.msra.mxu0 %v228
        %347 = vmatprep.subr.bf16.mxu0 0
        %348 = vmatpush1.bf16.msra.mxu0 %v229
        %349 = vmatprep.subr.bf16.mxu0 0
        %350 = vmatpush1.bf16.msra.mxu0 0
        %351 = vmatprep.subr.bf16.mxu0 0
        %352 = vmatpush1.bf16.msra.mxu0 0
        %353 = vmatprep.subr.bf16.mxu0 0
        %354 = vmatpush1.bf16.msra.mxu0 0
        %355 = vmatprep.subr.bf16.mxu0 0
        %356 = vmatpush1.bf16.msra.mxu0 0
        %357 = vmatprep.subr.bf16.mxu0 0
        %358 = vmatpush1.bf16.msra.mxu0 0
        %359 = vmatprep.subr.bf16.mxu0 0
        %360 = vmatpush1.bf16.msra.mxu0 0
        %361 = vmatprep.subr.bf16.mxu0 0
        %362 = vmatpush1.bf16.msra.mxu0 0
        %363 = vmatprep.subr.bf16.mxu0 0
        %364 = vmatpush1.bf16.msra.mxu0 0
        %365 = vmatprep.mubr.bf16.mxu0 0
        %366 = vmatmul.mubr.bf16.gmra.mrb[0].mxu0 %v301
        %v367 = vpop.f32.mrb[0].mxu0
        %v368 = vadd.f32 %v235, %v367
        %v369 = vpop.f32.mrb[0].mxu0
        %v370 = vpop.f32.mrb[0].mxu0
        %v371 = vadd.f32 %v235, %v370
        %v372 = vpop.f32.mrb[0].mxu0
        %373 = vmatprep.mubr.bf16.mxu0 0
        %374 = vmatmul.mubr.bf16.gmra.mrb[0].mxu0 %v302
        %v375 = vpop.f32.mrb[0].mxu0
        %v376 = vadd.f32 %v235, %v375
        %v377 = vpop.f32.mrb[0].mxu0
        %v378 = vpop.f32.mrb[0].mxu0
        %v379 = vadd.f32 %v235, %v378
        %v380 = vpop.f32.mrb[0].mxu0
        %381 = vmatprep.mubr.bf16.mxu0 0
        %382 = vmatmul.mubr.bf16.gmra.mrb[0].mxu0 %v303
        %v383 = vpop.f32.mrb[0].mxu0
        %v384 = vadd.f32 %v235, %v383
        %v385 = vpop.f32.mrb[0].mxu0
        %v386 = vpop.f32.mrb[0].mxu0
        %v387 = vadd.f32 %v235, %v386
        %v388 = vpop.f32.mrb[0].mxu0
        %389 = vmatprep.mubr.bf16.mxu0 0
        %390 = vmatmul.mubr.bf16.gmra.mrb[0].mxu0 %v304
        %v391 = vpop.f32.mrb[0].mxu0
        %v392 = vadd.f32 %v235, %v391
        %v393 = vpop.f32.mrb[0].mxu0
        %v394 = vpop.f32.mrb[0].mxu0
        %v395 = vadd.f32 %v235, %v394
        %v396 = vpop.f32.mrb[0].mxu0
        %397 = vmatprep.mubr.bf16.mxu0 0
        %398 = vmatmul.mubr.bf16.gmra.mrb[0].mxu0 %v305
        %v399 = vpop.f32.mrb[0].mxu0
        %v400 = vadd.f32 %v235, %v399
        %v401 = vpop.f32.mrb[0].mxu0
        %v402 = vpop.f32.mrb[0].mxu0
        %v403 = vadd.f32 %v235, %v402
        %v404 = vpop.f32.mrb[0].mxu0
        %405 = vmatprep.mubr.bf16.mxu0 0
        %406 = vmatmul.mubr.bf16.gmra.mrb[0].mxu0 %v306
        %v407 = vpop.f32.mrb[0].mxu0
        %v408 = vadd.f32 %v235, %v407
        %v409 = vpop.f32.mrb[0].mxu0
        %v410 = vpop.f32.mrb[0].mxu0
        %v411 = vadd.f32 %v235, %v410
        %v412 = vpop.f32.mrb[0].mxu0
        %413 = vmatprep.mubr.bf16.mxu0 0
        %414 = vmatmul.mubr.bf16.gmra.mrb[0].mxu0 %v307
        %v415 = vpop.f32.mrb[0].mxu0
        %v416 = vadd.f32 %v235, %v415
        %v417 = vpop.f32.mrb[0].mxu0
        %v418 = vpop.f32.mrb[0].mxu0
        %v419 = vadd.f32 %v235, %v418
        %v420 = vpop.f32.mrb[0].mxu0
        %421 = vmatprep.mubr.bf16.mxu0 0
        %422 = vmatmul.mubr.bf16.gmra.mrb[0].mxu0 %v308
        %v423 = vpop.f32.mrb[0].mxu0
        %v424 = vadd.f32 %v235, %v423
        %v425 = vpop.f32.mrb[0].mxu0
        %v426 = vpop.f32.mrb[0].mxu0
        %v427 = vadd.f32 %v235, %v426
        %v428 = vpop.f32.mrb[0].mxu0
        %429 = vmatprep.mubr.bf16.mxu0 0
        %430 = vmatmul.mubr.bf16.gmra.mrb[0].mxu0 %v309
        %v431 = vpop.f32.mrb[0].mxu0
        %v432 = vadd.f32 %v235, %v431
        %v433 = vpop.f32.mrb[0].mxu0
        %v434 = vpop.f32.mrb[0].mxu0
        %v435 = vadd.f32 %v235, %v434
        %v436 = vpop.f32.mrb[0].mxu0
        %437 = vmatprep.mubr.bf16.mxu0 0
        %438 = vmatmul.mubr.bf16.gmra.mrb[0].mxu0 %v310
        %v439 = vpop.f32.mrb[0].mxu0
        %v440 = vadd.f32 %v235, %v439
        %v441 = vpop.f32.mrb[0].mxu0
        %v442 = vpop.f32.mrb[0].mxu0
        %v443 = vadd.f32 %v235, %v442
        %v444 = vpop.f32.mrb[0].mxu0
        %445 = vmatprep.mubr.bf16.mxu0 0
        %446 = vmatmul.mubr.bf16.gmra.mrb[0].mxu0 %v311
        %v447 = vpop.f32.mrb[0].mxu0
        %v448 = vadd.f32 %v235, %v447
        %v449 = vpop.f32.mrb[0].mxu0
        %v450 = vpop.f32.mrb[0].mxu0
        %v451 = vadd.f32 %v235, %v450
        %v452 = vpop.f32.mrb[0].mxu0
        %453 = vmatprep.mubr.bf16.mxu0 0
        %454 = vmatmul.mubr.bf16.gmra.mrb[0].mxu0 %v312
        %v455 = vpop.f32.mrb[0].mxu0
        %v456 = vadd.f32 %v235, %v455
        %v457 = vpop.f32.mrb[0].mxu0
        %v458 = vpop.f32.mrb[0].mxu0
        %v459 = vadd.f32 %v235, %v458
        %v460 = vpop.f32.mrb[0].mxu0
        %461 = vmatprep.mubr.bf16.mxu0 0
        %462 = vmatmul.mubr.bf16.gmra.mrb[0].mxu0 %v313
        %v463 = vpop.f32.mrb[0].mxu0
        %v464 = vadd.f32 %v235, %v463
        %v465 = vpop.f32.mrb[0].mxu0
        %v466 = vpop.f32.mrb[0].mxu0
        %v467 = vadd.f32 %v235, %v466
        %v468 = vpop.f32.mrb[0].mxu0
        %469 = vmatprep.mubr.bf16.mxu0 0
        %470 = vmatmul.mubr.bf16.gmra.mrb[0].mxu0 %v314
        %v471 = vpop.f32.mrb[0].mxu0
        %v472 = vadd.f32 %v235, %v471
        %v473 = vpop.f32.mrb[0].mxu0
        %v474 = vpop.f32.mrb[0].mxu0
        %v475 = vadd.f32 %v235, %v474
        %v476 = vpop.f32.mrb[0].mxu0
        %477 = vmatprep.mubr.bf16.mxu0 0
        %478 = vmatmul.mubr.bf16.gmra.mrb[0].mxu0 %v315
        %v479 = vpop.f32.mrb[0].mxu0
        %v480 = vadd.f32 %v235, %v479
        %v481 = vpop.f32.mrb[0].mxu0
        %v482 = vpop.f32.mrb[0].mxu0
        %v483 = vadd.f32 %v235, %v482
        %v484 = vpop.f32.mrb[0].mxu0
        %485 = vmatprep.mubr.bf16.mxu0 0
        %486 = vmatmul.mubr.bf16.gmra.mrb[0].mxu0 %v316
        %v487 = vpop.f32.mrb[0].mxu0
        %v488 = vadd.f32 %v235, %v487
        %v489 = vpop.f32.mrb[0].mxu0
        %v490 = vpop.f32.mrb[0].mxu0
        %v491 = vadd.f32 %v235, %v490
        %v492 = vpop.f32.mrb[0].mxu0
        %493 = vdwg.mxu0
        %494 = vst [vmem:[#allocation3] sm:$0xff] %v368
        %495 = vst [vmem:[#allocation3 + $0x8] sm:$0xff] %v371
        %496 = vst [vmem:[#allocation3 + $0x10] sm:$0xff] %v376
        %497 = vst [vmem:[#allocation3 + $0x18] sm:$0xff] %v379
        %498 = vst [vmem:[#allocation3 + $0x20] sm:$0xff] %v384
        %499 = vst [vmem:[#allocation3 + $0x28] sm:$0xff] %v387
        %500 = vst [vmem:[#allocation3 + $0x30] sm:$0xff] %v392
        %501 = vst [vmem:[#allocation3 + $0x38] sm:$0xff] %v395
        %502 = vst [vmem:[#allocation3 + $0x40] sm:$0xff] %v400
        %503 = vst [vmem:[#allocation3 + $0x48] sm:$0xff] %v403
        %504 = vst [vmem:[#allocation3 + $0x50] sm:$0xff] %v408
        %505 = vst [vmem:[#allocation3 + $0x58] sm:$0xff] %v411
        %506 = vst [vmem:[#allocation3 + $0x60] sm:$0xff] %v416
        %507 = vst [vmem:[#allocation3 + $0x68] sm:$0xff] %v419
        %508 = vst [vmem:[#allocation3 + $0x70] sm:$0xff] %v424
        %509 = vst [vmem:[#allocation3 + $0x78] sm:$0xff] %v427
        %510 = vst [vmem:[#allocation3 + $0x80] sm:$0xff] %v432
        %511 = vst [vmem:[#allocation3 + $0x88] sm:$0xff] %v435
        %512 = vst [vmem:[#allocation3 + $0x90] sm:$0xff] %v440
        %513 = vst [vmem:[#allocation3 + $0x98] sm:$0xff] %v443
        %514 = vst [vmem:[#allocation3 + $0xa0] sm:$0xff] %v448
        %515 = vst [vmem:[#allocation3 + $0xa8] sm:$0xff] %v451
        %516 = vst [vmem:[#allocation3 + $0xb0] sm:$0xff] %v456
        %517 = vst [vmem:[#allocation3 + $0xb8] sm:$0xff] %v459
        %518 = vst [vmem:[#allocation3 + $0xc0] sm:$0xff] %v464
        %519 = vst [vmem:[#allocation3 + $0xc8] sm:$0xff] %v467
        %520 = vst [vmem:[#allocation3 + $0xd0] sm:$0xff] %v472
        %521 = vst [vmem:[#allocation3 + $0xd8] sm:$0xff] %v475
        %522 = vst [vmem:[#allocation3 + $0xe0] sm:$0xff] %v480
        %523 = vst [vmem:[#allocation3 + $0xe8] sm:$0xff] %v483
        %524 = vst [vmem:[#allocation3 + $0xf0] sm:$0xff] %v488
        %525 = vst [vmem:[#allocation3 + $0xf8] sm:$0xff] %v491
        %v526 = vld [vmem:[#allocation4] sm:$0xff]
        %v527 = vld [vmem:[#allocation4 + $0x8] sm:$0xff]
        %v528 = vld [vmem:[#allocation4 + $0x10] sm:$0xff]
        %v529 = vld [vmem:[#allocation4 + $0x18] sm:$0xff]
        %v530 = vld [vmem:[#allocation4 + $0x20] sm:$0xff]
        %v531 = vld [vmem:[#allocation4 + $0x28] sm:$0xff]
        %v532 = vld [vmem:[#allocation4 + $0x30] sm:$0xff]
        %v533 = vld [vmem:[#allocation4 + $0x38] sm:$0xff]
        %v534 = vld [vmem:[#allocation2] sm:$0xff]
        %v535 = vpack.c.bf16 %v534, %v534
        %v536 = vld [vmem:[#allocation3] sm:$0xff]
        %537 = vmatprep.subr.bf16.mxu0 0
        %538 = vmatpush1.bf16.msra.mxu0 %v526
        %539 = vmatprep.subr.bf16.mxu0 0
        %540 = vmatpush1.bf16.msra.mxu0 %v527
        %541 = vmatprep.subr.bf16.mxu0 0
        %542 = vmatpush1.bf16.msra.mxu0 %v528
        %543 = vmatprep.subr.bf16.mxu0 0
        %544 = vmatpush1.bf16.msra.mxu0 %v529
        %545 = vmatprep.subr.bf16.mxu0 0
        %546 = vmatpush1.bf16.msra.mxu0 %v530
        %547 = vmatprep.subr.bf16.mxu0 0
        %548 = vmatpush1.bf16.msra.mxu0 %v531
        %549 = vmatprep.subr.bf16.mxu0 0
        %550 = vmatpush1.bf16.msra.mxu0 %v532
        %551 = vmatprep.subr.bf16.mxu0 0
        %552 = vmatpush1.bf16.msra.mxu0 %v533
        %553 = vmatprep.subr.bf16.mxu0 0
        %554 = vmatpush1.bf16.msra.mxu0 0
        %555 = vmatprep.subr.bf16.mxu0 0
        %556 = vmatpush1.bf16.msra.mxu0 0
        %557 = vmatprep.subr.bf16.mxu0 0
        %558 = vmatpush1.bf16.msra.mxu0 0
        %559 = vmatprep.subr.bf16.mxu0 0
        %560 = vmatpush1.bf16.msra.mxu0 0
        %561 = vmatprep.subr.bf16.mxu0 0
        %562 = vmatpush1.bf16.msra.mxu0 0
        %563 = vmatprep.subr.bf16.mxu0 0
        %564 = vmatpush1.bf16.msra.mxu0 0
        %565 = vmatprep.subr.bf16.mxu0 0
        %566 = vmatpush1.bf16.msra.mxu0 0
        %567 = vmatprep.subr.bf16.mxu0 0
        %568 = vmatpush1.bf16.msra.mxu0 0
        %569 = vmatprep.mubr.bf16.mxu0 0
        %570 = vmatmul.mubr.bf16.gmra.mrb[0].mxu0 %v535
        %v571 = vpop.f32.mrb[0].mxu0
        %v572 = vadd.f32 %v536, %v571
        %v573 = vpop.f32.mrb[0].mxu0
        %v574 = vpop.f32.mrb[0].mxu0
        %v575 = vpop.f32.mrb[0].mxu0
        %576 = vdwg.mxu0
        %v577 = vxor.u32 %v572, 2147483648
        %v578 = vmul.f32 %v577, 1.442695
        %v579 = vpow.pop %v578
        %v580 = vadd.f32 %v579, 1.0
        %v581 = vrcp.pop %v580
        %v582 = vmul.f32 1.0, %v581
        %583 = vst [vmem:[#allocation3] sm:$0xff] %v582
        %v584 = vpack.c.bf16 %v582, %v582
        %s585 = scalar_lea.vmem [#allocation3], 8
        %v586 = vld [vmem:[%s585] sm:$0xff]
        %587 = vmatprep.subr.bf16.mxu0 0
        %588 = vmatpush1.bf16.msra.mxu0 %v526
        %589 = vmatprep.subr.bf16.mxu0 0
        %590 = vmatpush1.bf16.msra.mxu0 %v527
        %591 = vmatprep.subr.bf16.mxu0 0
        %592 = vmatpush1.bf16.msra.mxu0 %v528
        %593 = vmatprep.subr.bf16.mxu0 0
        %594 = vmatpush1.bf16.msra.mxu0 %v529
        %595 = vmatprep.subr.bf16.mxu0 0
        %596 = vmatpush1.bf16.msra.mxu0 %v530
        %597 = vmatprep.subr.bf16.mxu0 0
        %598 = vmatpush1.bf16.msra.mxu0 %v531
        %599 = vmatprep.subr.bf16.mxu0 0
        %600 = vmatpush1.bf16.msra.mxu0 %v532
        %601 = vmatprep.subr.bf16.mxu0 0
        %602 = vmatpush1.bf16.msra.mxu0 %v533
        %603 = vmatprep.subr.bf16.mxu0 0
        %604 = vmatpush1.bf16.msra.mxu0 0
        %605 = vmatprep.subr.bf16.mxu0 0
        %606 = vmatpush1.bf16.msra.mxu0 0
        %607 = vmatprep.subr.bf16.mxu0 0
        %608 = vmatpush1.bf16.msra.mxu0 0
        %609 = vmatprep.subr.bf16.mxu0 0
        %610 = vmatpush1.bf16.msra.mxu0 0
        %611 = vmatprep.subr.bf16.mxu0 0
        %612 = vmatpush1.bf16.msra.mxu0 0
        %613 = vmatprep.subr.bf16.mxu0 0
        %614 = vmatpush1.bf16.msra.mxu0 0
        %615 = vmatprep.subr.bf16.mxu0 0
        %616 = vmatpush1.bf16.msra.mxu0 0
        %617 = vmatprep.subr.bf16.mxu0 0
        %618 = vmatpush1.bf16.msra.mxu0 0
        %619 = vmatprep.mubr.bf16.mxu0 0
        %620 = vmatmul.mubr.bf16.gmra.mrb[0].mxu0 %v584
        %v621 = vpop.f32.mrb[0].mxu0
        %v622 = vadd.f32 %v586, %v621
        %v623 = vpop.f32.mrb[0].mxu0
        %v624 = vpop.f32.mrb[0].mxu0
        %v625 = vpop.f32.mrb[0].mxu0
        %626 = vdwg.mxu0
        %v627 = vxor.u32 %v622, 2147483648
        %v628 = vmul.f32 %v627, 1.442695
        %v629 = vpow.pop %v628
        %v630 = vadd.f32 %v629, 1.0
        %v631 = vrcp.pop %v630
        %v632 = vmul.f32 1.0, %v631
        %633 = vst [vmem:[%s585] sm:$0xff] %v632
        %v634 = vpack.c.bf16 %v632, %v632
        %s635 = scalar_lea.vmem [#allocation3], 16
        %v636 = vld [vmem:[%s635] sm:$0xff]
        %637 = vmatprep.subr.bf16.mxu0 0
        %638 = vmatpush1.bf16.msra.mxu0 %v526
        %639 = vmatprep.subr.bf16.mxu0 0
        %640 = vmatpush1.bf16.msra.mxu0 %v527
        %641 = vmatprep.subr.bf16.mxu0 0
        %642 = vmatpush1.bf16.msra.mxu0 %v528
        %643 = vmatprep.subr.bf16.mxu0 0
        %644 = vmatpush1.bf16.msra.mxu0 %v529
        %645 = vmatprep.subr.bf16.mxu0 0
        %646 = vmatpush1.bf16.msra.mxu0 %v530
        %647 = vmatprep.subr.bf16.mxu0 0
        %648 = vmatpush1.bf16.msra.mxu0 %v531
        %649 = vmatprep.subr.bf16.mxu0 0
        %650 = vmatpush1.bf16.msra.mxu0 %v532
        %651 = vmatprep.subr.bf16.mxu0 0
        %652 = vmatpush1.bf16.msra.mxu0 %v533
        %653 = vmatprep.subr.bf16.mxu0 0
        %654 = vmatpush1.bf16.msra.mxu0 0
        %655 = vmatprep.subr.bf16.mxu0 0
        %656 = vmatpush1.bf16.msra.mxu0 0
        %657 = vmatprep.subr.bf16.mxu0 0
        %658 = vmatpush1.bf16.msra.mxu0 0
        %659 = vmatprep.subr.bf16.mxu0 0
        %660 = vmatpush1.bf16.msra.mxu0 0
        %661 = vmatprep.subr.bf16.mxu0 0
        %662 = vmatpush1.bf16.msra.mxu0 0
        %663 = vmatprep.subr.bf16.mxu0 0
        %664 = vmatpush1.bf16.msra.mxu0 0
        %665 = vmatprep.subr.bf16.mxu0 0
        %666 = vmatpush1.bf16.msra.mxu0 0
        %667 = vmatprep.subr.bf16.mxu0 0
        %668 = vmatpush1.bf16.msra.mxu0 0
        %669 = vmatprep.mubr.bf16.mxu0 0
        %670 = vmatmul.mubr.bf16.gmra.mrb[0].mxu0 %v634
        %v671 = vpop.f32.mrb[0].mxu0
        %v672 = vadd.f32 %v636, %v671
        %v673 = vpop.f32.mrb[0].mxu0
        %v674 = vpop.f32.mrb[0].mxu0
        %v675 = vpop.f32.mrb[0].mxu0
        %676 = vdwg.mxu0
        %v677 = vxor.u32 %v672, 2147483648
        %v678 = vmul.f32 %v677, 1.442695
        %v679 = vpow.pop %v678
        %v680 = vadd.f32 %v679, 1.0
        %v681 = vrcp.pop %v680
        %v682 = vmul.f32 1.0, %v681
        %683 = vst [vmem:[%s635] sm:$0xff] %v682
        %v684 = vpack.c.bf16 %v682, %v682
        %s685 = scalar_lea.vmem [#allocation3], 24
        %v686 = vld [vmem:[%s685] sm:$0xff]
        %687 = vmatprep.subr.bf16.mxu0 0
        %688 = vmatpush1.bf16.msra.mxu0 %v526
        %689 = vmatprep.subr.bf16.mxu0 0
        %690 = vmatpush1.bf16.msra.mxu0 %v527
        %691 = vmatprep.subr.bf16.mxu0 0
        %692 = vmatpush1.bf16.msra.mxu0 %v528
        %693 = vmatprep.subr.bf16.mxu0 0
        %694 = vmatpush1.bf16.msra.mxu0 %v529
        %695 = vmatprep.subr.bf16.mxu0 0
        %696 = vmatpush1.bf16.msra.mxu0 %v530
        %697 = vmatprep.subr.bf16.mxu0 0
        %698 = vmatpush1.bf16.msra.mxu0 %v531
        %699 = vmatprep.subr.bf16.mxu0 0
        %700 = vmatpush1.bf16.msra.mxu0 %v532
        %701 = vmatprep.subr.bf16.mxu0 0
        %702 = vmatpush1.bf16.msra.mxu0 %v533
        %703 = vmatprep.subr.bf16.mxu0 0
        %704 = vmatpush1.bf16.msra.mxu0 0
        %705 = vmatprep.subr.bf16.mxu0 0
        %706 = vmatpush1.bf16.msra.mxu0 0
        %707 = vmatprep.subr.bf16.mxu0 0
        %708 = vmatpush1.bf16.msra.mxu0 0
        %709 = vmatprep.subr.bf16.mxu0 0
        %710 = vmatpush1.bf16.msra.mxu0 0
        %711 = vmatprep.subr.bf16.mxu0 0
        %712 = vmatpush1.bf16.msra.mxu0 0
        %713 = vmatprep.subr.bf16.mxu0 0
        %714 = vmatpush1.bf16.msra.mxu0 0
        %715 = vmatprep.subr.bf16.mxu0 0
        %716 = vmatpush1.bf16.msra.mxu0 0
        %717 = vmatprep.subr.bf16.mxu0 0
        %718 = vmatpush1.bf16.msra.mxu0 0
        %719 = vmatprep.mubr.bf16.mxu0 0
        %720 = vmatmul.mubr.bf16.gmra.mrb[0].mxu0 %v684
        %v721 = vpop.f32.mrb[0].mxu0
        %v722 = vadd.f32 %v686, %v721
        %v723 = vpop.f32.mrb[0].mxu0
        %v724 = vpop.f32.mrb[0].mxu0
        %v725 = vpop.f32.mrb[0].mxu0
        %726 = vdwg.mxu0
        %v727 = vxor.u32 %v722, 2147483648
        %v728 = vmul.f32 %v727, 1.442695
        %v729 = vpow.pop %v728
        %v730 = vadd.f32 %v729, 1.0
        %v731 = vrcp.pop %v730
        %v732 = vmul.f32 1.0, %v731
        %733 = vst [vmem:[%s685] sm:$0xff] %v732
        %v734 = vpack.c.bf16 %v732, %v732
        %s735 = scalar_lea.vmem [#allocation3], 32
        %v736 = vld [vmem:[%s735] sm:$0xff]
        %737 = vmatprep.subr.bf16.mxu0 0
        %738 = vmatpush1.bf16.msra.mxu0 %v526
        %739 = vmatprep.subr.bf16.mxu0 0
        %740 = vmatpush1.bf16.msra.mxu0 %v527
        %741 = vmatprep.subr.bf16.mxu0 0
        %742 = vmatpush1.bf16.msra.mxu0 %v528
        %743 = vmatprep.subr.bf16.mxu0 0
        %744 = vmatpush1.bf16.msra.mxu0 %v529
        %745 = vmatprep.subr.bf16.mxu0 0
        %746 = vmatpush1.bf16.msra.mxu0 %v530
        %747 = vmatprep.subr.bf16.mxu0 0
        %748 = vmatpush1.bf16.msra.mxu0 %v531
        %749 = vmatprep.subr.bf16.mxu0 0
        %750 = vmatpush1.bf16.msra.mxu0 %v532
        %751 = vmatprep.subr.bf16.mxu0 0
        %752 = vmatpush1.bf16.msra.mxu0 %v533
        %753 = vmatprep.subr.bf16.mxu0 0
        %754 = vmatpush1.bf16.msra.mxu0 0
        %755 = vmatprep.subr.bf16.mxu0 0
        %756 = vmatpush1.bf16.msra.mxu0 0
        %757 = vmatprep.subr.bf16.mxu0 0
        %758 = vmatpush1.bf16.msra.mxu0 0
        %759 = vmatprep.subr.bf16.mxu0 0
        %760 = vmatpush1.bf16.msra.mxu0 0
        %761 = vmatprep.subr.bf16.mxu0 0
        %762 = vmatpush1.bf16.msra.mxu0 0
        %763 = vmatprep.subr.bf16.mxu0 0
        %764 = vmatpush1.bf16.msra.mxu0 0
        %765 = vmatprep.subr.bf16.mxu0 0
        %766 = vmatpush1.bf16.msra.mxu0 0
        %767 = vmatprep.subr.bf16.mxu0 0
        %768 = vmatpush1.bf16.msra.mxu0 0
        %769 = vmatprep.mubr.bf16.mxu0 0
        %770 = vmatmul.mubr.bf16.gmra.mrb[0].mxu0 %v734
        %v771 = vpop.f32.mrb[0].mxu0
        %v772 = vadd.f32 %v736, %v771
        %v773 = vpop.f32.mrb[0].mxu0
        %v774 = vpop.f32.mrb[0].mxu0
        %v775 = vpop.f32.mrb[0].mxu0
        %776 = vdwg.mxu0
        %v777 = vxor.u32 %v772, 2147483648
        %v778 = vmul.f32 %v777, 1.442695
        %v779 = vpow.pop %v778
        %v780 = vadd.f32 %v779, 1.0
        %v781 = vrcp.pop %v780
        %v782 = vmul.f32 1.0, %v781
        %783 = vst [vmem:[%s735] sm:$0xff] %v782
        %v784 = vpack.c.bf16 %v782, %v782
        %s785 = scalar_lea.vmem [#allocation3], 40
        %v786 = vld [vmem:[%s785] sm:$0xff]
        %787 = vmatprep.subr.bf16.mxu0 0
        %788 = vmatpush1.bf16.msra.mxu0 %v526
        %789 = vmatprep.subr.bf16.mxu0 0
        %790 = vmatpush1.bf16.msra.mxu0 %v527
        %791 = vmatprep.subr.bf16.mxu0 0
        %792 = vmatpush1.bf16.msra.mxu0 %v528
        %793 = vmatprep.subr.bf16.mxu0 0
        %794 = vmatpush1.bf16.msra.mxu0 %v529
        %795 = vmatprep.subr.bf16.mxu0 0
        %796 = vmatpush1.bf16.msra.mxu0 %v530
        %797 = vmatprep.subr.bf16.mxu0 0
        %798 = vmatpush1.bf16.msra.mxu0 %v531
        %799 = vmatprep.subr.bf16.mxu0 0
        %800 = vmatpush1.bf16.msra.mxu0 %v532
        %801 = vmatprep.subr.bf16.mxu0 0
        %802 = vmatpush1.bf16.msra.mxu0 %v533
        %803 = vmatprep.subr.bf16.mxu0 0
        %804 = vmatpush1.bf16.msra.mxu0 0
        %805 = vmatprep.subr.bf16.mxu0 0
        %806 = vmatpush1.bf16.msra.mxu0 0
        %807 = vmatprep.subr.bf16.mxu0 0
        %808 = vmatpush1.bf16.msra.mxu0 0
        %809 = vmatprep.subr.bf16.mxu0 0
        %810 = vmatpush1.bf16.msra.mxu0 0
        %811 = vmatprep.subr.bf16.mxu0 0
        %812 = vmatpush1.bf16.msra.mxu0 0
        %813 = vmatprep.subr.bf16.mxu0 0
        %814 = vmatpush1.bf16.msra.mxu0 0
        %815 = vmatprep.subr.bf16.mxu0 0
        %816 = vmatpush1.bf16.msra.mxu0 0
        %817 = vmatprep.subr.bf16.mxu0 0
        %818 = vmatpush1.bf16.msra.mxu0 0
        %819 = vmatprep.mubr.bf16.mxu0 0
        %820 = vmatmul.mubr.bf16.gmra.mrb[0].mxu0 %v784
        %v821 = vpop.f32.mrb[0].mxu0
        %v822 = vadd.f32 %v786, %v821
        %v823 = vpop.f32.mrb[0].mxu0
        %v824 = vpop.f32.mrb[0].mxu0
        %v825 = vpop.f32.mrb[0].mxu0
        %826 = vdwg.mxu0
        %v827 = vxor.u32 %v822, 2147483648
        %v828 = vmul.f32 %v827, 1.442695
        %v829 = vpow.pop %v828
        %v830 = vadd.f32 %v829, 1.0
        %v831 = vrcp.pop %v830
        %v832 = vmul.f32 1.0, %v831
        %833 = vst [vmem:[%s785] sm:$0xff] %v832
        %v834 = vpack.c.bf16 %v832, %v832
        %s835 = scalar_lea.vmem [#allocation3], 48
        %v836 = vld [vmem:[%s835] sm:$0xff]
        %837 = vmatprep.subr.bf16.mxu0 0
        %838 = vmatpush1.bf16.msra.mxu0 %v526
        %839 = vmatprep.subr.bf16.mxu0 0
        %840 = vmatpush1.bf16.msra.mxu0 %v527
        %841 = vmatprep.subr.bf16.mxu0 0
        %842 = vmatpush1.bf16.msra.mxu0 %v528
        %843 = vmatprep.subr.bf16.mxu0 0
        %844 = vmatpush1.bf16.msra.mxu0 %v529
        %845 = vmatprep.subr.bf16.mxu0 0
        %846 = vmatpush1.bf16.msra.mxu0 %v530
        %847 = vmatprep.subr.bf16.mxu0 0
        %848 = vmatpush1.bf16.msra.mxu0 %v531
        %849 = vmatprep.subr.bf16.mxu0 0
        %850 = vmatpush1.bf16.msra.mxu0 %v532
        %851 = vmatprep.subr.bf16.mxu0 0
        %852 = vmatpush1.bf16.msra.mxu0 %v533
        %853 = vmatprep.subr.bf16.mxu0 0
        %854 = vmatpush1.bf16.msra.mxu0 0
        %855 = vmatprep.subr.bf16.mxu0 0
        %856 = vmatpush1.bf16.msra.mxu0 0
        %857 = vmatprep.subr.bf16.mxu0 0
        %858 = vmatpush1.bf16.msra.mxu0 0
        %859 = vmatprep.subr.bf16.mxu0 0
        %860 = vmatpush1.bf16.msra.mxu0 0
        %861 = vmatprep.subr.bf16.mxu0 0
        %862 = vmatpush1.bf16.msra.mxu0 0
        %863 = vmatprep.subr.bf16.mxu0 0
        %864 = vmatpush1.bf16.msra.mxu0 0
        %865 = vmatprep.subr.bf16.mxu0 0
        %866 = vmatpush1.bf16.msra.mxu0 0
        %867 = vmatprep.subr.bf16.mxu0 0
        %868 = vmatpush1.bf16.msra.mxu0 0
        %869 = vmatprep.mubr.bf16.mxu0 0
        %870 = vmatmul.mubr.bf16.gmra.mrb[0].mxu0 %v834
        %v871 = vpop.f32.mrb[0].mxu0
        %v872 = vadd.f32 %v836, %v871
        %v873 = vpop.f32.mrb[0].mxu0
        %v874 = vpop.f32.mrb[0].mxu0
        %v875 = vpop.f32.mrb[0].mxu0
        %876 = vdwg.mxu0
        %v877 = vxor.u32 %v872, 2147483648
        %v878 = vmul.f32 %v877, 1.442695
        %v879 = vpow.pop %v878
        %v880 = vadd.f32 %v879, 1.0
        %v881 = vrcp.pop %v880
        %v882 = vmul.f32 1.0, %v881
        %883 = vst [vmem:[%s835] sm:$0xff] %v882
        %v884 = vpack.c.bf16 %v882, %v882
        %s885 = scalar_lea.vmem [#allocation3], 56
        %v886 = vld [vmem:[%s885] sm:$0xff]
        %887 = vmatprep.subr.bf16.mxu0 0
        %888 = vmatpush1.bf16.msra.mxu0 %v526
        %889 = vmatprep.subr.bf16.mxu0 0
        %890 = vmatpush1.bf16.msra.mxu0 %v527
        %891 = vmatprep.subr.bf16.mxu0 0
        %892 = vmatpush1.bf16.msra.mxu0 %v528
        %893 = vmatprep.subr.bf16.mxu0 0
        %894 = vmatpush1.bf16.msra.mxu0 %v529
        %895 = vmatprep.subr.bf16.mxu0 0
        %896 = vmatpush1.bf16.msra.mxu0 %v530
        %897 = vmatprep.subr.bf16.mxu0 0
        %898 = vmatpush1.bf16.msra.mxu0 %v531
        %899 = vmatprep.subr.bf16.mxu0 0
        %900 = vmatpush1.bf16.msra.mxu0 %v532
        %901 = vmatprep.subr.bf16.mxu0 0
        %902 = vmatpush1.bf16.msra.mxu0 %v533
        %903 = vmatprep.subr.bf16.mxu0 0
        %904 = vmatpush1.bf16.msra.mxu0 0
        %905 = vmatprep.subr.bf16.mxu0 0
        %906 = vmatpush1.bf16.msra.mxu0 0
        %907 = vmatprep.subr.bf16.mxu0 0
        %908 = vmatpush1.bf16.msra.mxu0 0
        %909 = vmatprep.subr.bf16.mxu0 0
        %910 = vmatpush1.bf16.msra.mxu0 0
        %911 = vmatprep.subr.bf16.mxu0 0
        %912 = vmatpush1.bf16.msra.mxu0 0
        %913 = vmatprep.subr.bf16.mxu0 0
        %914 = vmatpush1.bf16.msra.mxu0 0
        %915 = vmatprep.subr.bf16.mxu0 0
        %916 = vmatpush1.bf16.msra.mxu0 0
        %917 = vmatprep.subr.bf16.mxu0 0
        %918 = vmatpush1.bf16.msra.mxu0 0
        %919 = vmatprep.mubr.bf16.mxu0 0
        %920 = vmatmul.mubr.bf16.gmra.mrb[0].mxu0 %v884
        %v921 = vpop.f32.mrb[0].mxu0
        %v922 = vadd.f32 %v886, %v921
        %v923 = vpop.f32.mrb[0].mxu0
        %v924 = vpop.f32.mrb[0].mxu0
        %v925 = vpop.f32.mrb[0].mxu0
        %926 = vdwg.mxu0
        %v927 = vxor.u32 %v922, 2147483648
        %v928 = vmul.f32 %v927, 1.442695
        %v929 = vpow.pop %v928
        %v930 = vadd.f32 %v929, 1.0
        %v931 = vrcp.pop %v930
        %v932 = vmul.f32 1.0, %v931
        %933 = vst [vmem:[%s885] sm:$0xff] %v932
        %v934 = vpack.c.bf16 %v932, %v932
        %s935 = scalar_lea.vmem [#allocation3], 64
        %v936 = vld [vmem:[%s935] sm:$0xff]
        %937 = vmatprep.subr.bf16.mxu0 0
        %938 = vmatpush1.bf16.msra.mxu0 %v526
        %939 = vmatprep.subr.bf16.mxu0 0
        %940 = vmatpush1.bf16.msra.mxu0 %v527
        %941 = vmatprep.subr.bf16.mxu0 0
        %942 = vmatpush1.bf16.msra.mxu0 %v528
        %943 = vmatprep.subr.bf16.mxu0 0
        %944 = vmatpush1.bf16.msra.mxu0 %v529
        %945 = vmatprep.subr.bf16.mxu0 0
        %946 = vmatpush1.bf16.msra.mxu0 %v530
        %947 = vmatprep.subr.bf16.mxu0 0
        %948 = vmatpush1.bf16.msra.mxu0 %v531
        %949 = vmatprep.subr.bf16.mxu0 0
        %950 = vmatpush1.bf16.msra.mxu0 %v532
        %951 = vmatprep.subr.bf16.mxu0 0
        %952 = vmatpush1.bf16.msra.mxu0 %v533
        %953 = vmatprep.subr.bf16.mxu0 0
        %954 = vmatpush1.bf16.msra.mxu0 0
        %955 = vmatprep.subr.bf16.mxu0 0
        %956 = vmatpush1.bf16.msra.mxu0 0
        %957 = vmatprep.subr.bf16.mxu0 0
        %958 = vmatpush1.bf16.msra.mxu0 0
        %959 = vmatprep.subr.bf16.mxu0 0
        %960 = vmatpush1.bf16.msra.mxu0 0
        %961 = vmatprep.subr.bf16.mxu0 0
        %962 = vmatpush1.bf16.msra.mxu0 0
        %963 = vmatprep.subr.bf16.mxu0 0
        %964 = vmatpush1.bf16.msra.mxu0 0
        %965 = vmatprep.subr.bf16.mxu0 0
        %966 = vmatpush1.bf16.msra.mxu0 0
        %967 = vmatprep.subr.bf16.mxu0 0
        %968 = vmatpush1.bf16.msra.mxu0 0
        %969 = vmatprep.mubr.bf16.mxu0 0
        %970 = vmatmul.mubr.bf16.gmra.mrb[0].mxu0 %v934
        %v971 = vpop.f32.mrb[0].mxu0
        %v972 = vadd.f32 %v936, %v971
        %v973 = vpop.f32.mrb[0].mxu0
        %v974 = vpop.f32.mrb[0].mxu0
        %v975 = vpop.f32.mrb[0].mxu0
        %976 = vdwg.mxu0
        %v977 = vxor.u32 %v972, 2147483648
        %v978 = vmul.f32 %v977, 1.442695
        %v979 = vpow.pop %v978
        %v980 = vadd.f32 %v979, 1.0
        %v981 = vrcp.pop %v980
        %v982 = vmul.f32 1.0, %v981
        %983 = vst [vmem:[%s935] sm:$0xff] %v982
        %v984 = vpack.c.bf16 %v982, %v982
        %s985 = scalar_lea.vmem [#allocation3], 72
        %v986 = vld [vmem:[%s985] sm:$0xff]
        %987 = vmatprep.subr.bf16.mxu0 0
        %988 = vmatpush1.bf16.msra.mxu0 %v526
        %989 = vmatprep.subr.bf16.mxu0 0
        %990 = vmatpush1.bf16.msra.mxu0 %v527
        %991 = vmatprep.subr.bf16.mxu0 0
        %992 = vmatpush1.bf16.msra.mxu0 %v528
        %993 = vmatprep.subr.bf16.mxu0 0
        %994 = vmatpush1.bf16.msra.mxu0 %v529
        %995 = vmatprep.subr.bf16.mxu0 0
        %996 = vmatpush1.bf16.msra.mxu0 %v530
        %997 = vmatprep.subr.bf16.mxu0 0
        %998 = vmatpush1.bf16.msra.mxu0 %v531
        %999 = vmatprep.subr.bf16.mxu0 0
        %1000 = vmatpush1.bf16.msra.mxu0 %v532
        %1001 = vmatprep.subr.bf16.mxu0 0
        %1002 = vmatpush1.bf16.msra.mxu0 %v533
        %1003 = vmatprep.subr.bf16.mxu0 0
        %1004 = vmatpush1.bf16.msra.mxu0 0
        %1005 = vmatprep.subr.bf16.mxu0 0
        %1006 = vmatpush1.bf16.msra.mxu0 0
        %1007 = vmatprep.subr.bf16.mxu0 0
        %1008 = vmatpush1.bf16.msra.mxu0 0
        %1009 = vmatprep.subr.bf16.mxu0 0
        %1010 = vmatpush1.bf16.msra.mxu0 0
        %1011 = vmatprep.subr.bf16.mxu0 0
        %1012 = vmatpush1.bf16.msra.mxu0 0
        %1013 = vmatprep.subr.bf16.mxu0 0
        %1014 = vmatpush1.bf16.msra.mxu0 0
        %1015 = vmatprep.subr.bf16.mxu0 0
        %1016 = vmatpush1.bf16.msra.mxu0 0
        %1017 = vmatprep.subr.bf16.mxu0 0
        %1018 = vmatpush1.bf16.msra.mxu0 0
        %1019 = vmatprep.mubr.bf16.mxu0 0
        %1020 = vmatmul.mubr.bf16.gmra.mrb[0].mxu0 %v984
        %v1021 = vpop.f32.mrb[0].mxu0
        %v1022 = vadd.f32 %v986, %v1021
        %v1023 = vpop.f32.mrb[0].mxu0
        %v1024 = vpop.f32.mrb[0].mxu0
        %v1025 = vpop.f32.mrb[0].mxu0
        %1026 = vdwg.mxu0
        %v1027 = vxor.u32 %v1022, 2147483648
        %v1028 = vmul.f32 %v1027, 1.442695
        %v1029 = vpow.pop %v1028
        %v1030 = vadd.f32 %v1029, 1.0
        %v1031 = vrcp.pop %v1030
        %v1032 = vmul.f32 1.0, %v1031
        %1033 = vst [vmem:[%s985] sm:$0xff] %v1032
        %v1034 = vpack.c.bf16 %v1032, %v1032
        %s1035 = scalar_lea.vmem [#allocation3], 80
        %v1036 = vld [vmem:[%s1035] sm:$0xff]
        %1037 = vmatprep.subr.bf16.mxu0 0
        %1038 = vmatpush1.bf16.msra.mxu0 %v526
        %1039 = vmatprep.subr.bf16.mxu0 0
        %1040 = vmatpush1.bf16.msra.mxu0 %v527
        %1041 = vmatprep.subr.bf16.mxu0 0
        %1042 = vmatpush1.bf16.msra.mxu0 %v528
        %1043 = vmatprep.subr.bf16.mxu0 0
        %1044 = vmatpush1.bf16.msra.mxu0 %v529
        %1045 = vmatprep.subr.bf16.mxu0 0
        %1046 = vmatpush1.bf16.msra.mxu0 %v530
        %1047 = vmatprep.subr.bf16.mxu0 0
        %1048 = vmatpush1.bf16.msra.mxu0 %v531
        %1049 = vmatprep.subr.bf16.mxu0 0
        %1050 = vmatpush1.bf16.msra.mxu0 %v532
        %1051 = vmatprep.subr.bf16.mxu0 0
        %1052 = vmatpush1.bf16.msra.mxu0 %v533
        %1053 = vmatprep.subr.bf16.mxu0 0
        %1054 = vmatpush1.bf16.msra.mxu0 0
        %1055 = vmatprep.subr.bf16.mxu0 0
        %1056 = vmatpush1.bf16.msra.mxu0 0
        %1057 = vmatprep.subr.bf16.mxu0 0
        %1058 = vmatpush1.bf16.msra.mxu0 0
        %1059 = vmatprep.subr.bf16.mxu0 0
        %1060 = vmatpush1.bf16.msra.mxu0 0
        %1061 = vmatprep.subr.bf16.mxu0 0
        %1062 = vmatpush1.bf16.msra.mxu0 0
        %1063 = vmatprep.subr.bf16.mxu0 0
        %1064 = vmatpush1.bf16.msra.mxu0 0
        %1065 = vmatprep.subr.bf16.mxu0 0
        %1066 = vmatpush1.bf16.msra.mxu0 0
        %1067 = vmatprep.subr.bf16.mxu0 0
        %1068 = vmatpush1.bf16.msra.mxu0 0
        %1069 = vmatprep.mubr.bf16.mxu0 0
        %1070 = vmatmul.mubr.bf16.gmra.mrb[0].mxu0 %v1034
        %v1071 = vpop.f32.mrb[0].mxu0
        %v1072 = vadd.f32 %v1036, %v1071
        %v1073 = vpop.f32.mrb[0].mxu0
        %v1074 = vpop.f32.mrb[0].mxu0
        %v1075 = vpop.f32.mrb[0].mxu0
        %1076 = vdwg.mxu0
        %v1077 = vxor.u32 %v1072, 2147483648
        %v1078 = vmul.f32 %v1077, 1.442695
        %v1079 = vpow.pop %v1078
        %v1080 = vadd.f32 %v1079, 1.0
        %v1081 = vrcp.pop %v1080
        %v1082 = vmul.f32 1.0, %v1081
        %1083 = vst [vmem:[%s1035] sm:$0xff] %v1082
        %v1084 = vpack.c.bf16 %v1082, %v1082
        %s1085 = scalar_lea.vmem [#allocation3], 88
        %v1086 = vld [vmem:[%s1085] sm:$0xff]
        %1087 = vmatprep.subr.bf16.mxu0 0
        %1088 = vmatpush1.bf16.msra.mxu0 %v526
        %1089 = vmatprep.subr.bf16.mxu0 0
        %1090 = vmatpush1.bf16.msra.mxu0 %v527
        %1091 = vmatprep.subr.bf16.mxu0 0
        %1092 = vmatpush1.bf16.msra.mxu0 %v528
        %1093 = vmatprep.subr.bf16.mxu0 0
        %1094 = vmatpush1.bf16.msra.mxu0 %v529
        %1095 = vmatprep.subr.bf16.mxu0 0
        %1096 = vmatpush1.bf16.msra.mxu0 %v530
        %1097 = vmatprep.subr.bf16.mxu0 0
        %1098 = vmatpush1.bf16.msra.mxu0 %v531
        %1099 = vmatprep.subr.bf16.mxu0 0
        %1100 = vmatpush1.bf16.msra.mxu0 %v532
        %1101 = vmatprep.subr.bf16.mxu0 0
        %1102 = vmatpush1.bf16.msra.mxu0 %v533
        %1103 = vmatprep.subr.bf16.mxu0 0
        %1104 = vmatpush1.bf16.msra.mxu0 0
        %1105 = vmatprep.subr.bf16.mxu0 0
        %1106 = vmatpush1.bf16.msra.mxu0 0
        %1107 = vmatprep.subr.bf16.mxu0 0
        %1108 = vmatpush1.bf16.msra.mxu0 0
        %1109 = vmatprep.subr.bf16.mxu0 0
        %1110 = vmatpush1.bf16.msra.mxu0 0
        %1111 = vmatprep.subr.bf16.mxu0 0
        %1112 = vmatpush1.bf16.msra.mxu0 0
        %1113 = vmatprep.subr.bf16.mxu0 0
        %1114 = vmatpush1.bf16.msra.mxu0 0
        %1115 = vmatprep.subr.bf16.mxu0 0
        %1116 = vmatpush1.bf16.msra.mxu0 0
        %1117 = vmatprep.subr.bf16.mxu0 0
        %1118 = vmatpush1.bf16.msra.mxu0 0
        %1119 = vmatprep.mubr.bf16.mxu0 0
        %1120 = vmatmul.mubr.bf16.gmra.mrb[0].mxu0 %v1084
        %v1121 = vpop.f32.mrb[0].mxu0
        %v1122 = vadd.f32 %v1086, %v1121
        %v1123 = vpop.f32.mrb[0].mxu0
        %v1124 = vpop.f32.mrb[0].mxu0
        %v1125 = vpop.f32.mrb[0].mxu0
        %1126 = vdwg.mxu0
        %v1127 = vxor.u32 %v1122, 2147483648
        %v1128 = vmul.f32 %v1127, 1.442695
        %v1129 = vpow.pop %v1128
        %v1130 = vadd.f32 %v1129, 1.0
        %v1131 = vrcp.pop %v1130
        %v1132 = vmul.f32 1.0, %v1131
        %1133 = vst [vmem:[%s1085] sm:$0xff] %v1132
        %v1134 = vpack.c.bf16 %v1132, %v1132
        %s1135 = scalar_lea.vmem [#allocation3], 96
        %v1136 = vld [vmem:[%s1135] sm:$0xff]
        %1137 = vmatprep.subr.bf16.mxu0 0
        %1138 = vmatpush1.bf16.msra.mxu0 %v526
        %1139 = vmatprep.subr.bf16.mxu0 0
        %1140 = vmatpush1.bf16.msra.mxu0 %v527
        %1141 = vmatprep.subr.bf16.mxu0 0
        %1142 = vmatpush1.bf16.msra.mxu0 %v528
        %1143 = vmatprep.subr.bf16.mxu0 0
        %1144 = vmatpush1.bf16.msra.mxu0 %v529
        %1145 = vmatprep.subr.bf16.mxu0 0
        %1146 = vmatpush1.bf16.msra.mxu0 %v530
        %1147 = vmatprep.subr.bf16.mxu0 0
        %1148 = vmatpush1.bf16.msra.mxu0 %v531
        %1149 = vmatprep.subr.bf16.mxu0 0
        %1150 = vmatpush1.bf16.msra.mxu0 %v532
        %1151 = vmatprep.subr.bf16.mxu0 0
        %1152 = vmatpush1.bf16.msra.mxu0 %v533
        %1153 = vmatprep.subr.bf16.mxu0 0
        %1154 = vmatpush1.bf16.msra.mxu0 0
        %1155 = vmatprep.subr.bf16.mxu0 0
        %1156 = vmatpush1.bf16.msra.mxu0 0
        %1157 = vmatprep.subr.bf16.mxu0 0
        %1158 = vmatpush1.bf16.msra.mxu0 0
        %1159 = vmatprep.subr.bf16.mxu0 0
        %1160 = vmatpush1.bf16.msra.mxu0 0
        %1161 = vmatprep.subr.bf16.mxu0 0
        %1162 = vmatpush1.bf16.msra.mxu0 0
        %1163 = vmatprep.subr.bf16.mxu0 0
        %1164 = vmatpush1.bf16.msra.mxu0 0
        %1165 = vmatprep.subr.bf16.mxu0 0
        %1166 = vmatpush1.bf16.msra.mxu0 0
        %1167 = vmatprep.subr.bf16.mxu0 0
        %1168 = vmatpush1.bf16.msra.mxu0 0
        %1169 = vmatprep.mubr.bf16.mxu0 0
        %1170 = vmatmul.mubr.bf16.gmra.mrb[0].mxu0 %v1134
        %v1171 = vpop.f32.mrb[0].mxu0
        %v1172 = vadd.f32 %v1136, %v1171
        %v1173 = vpop.f32.mrb[0].mxu0
        %v1174 = vpop.f32.mrb[0].mxu0
        %v1175 = vpop.f32.mrb[0].mxu0
        %1176 = vdwg.mxu0
        %v1177 = vxor.u32 %v1172, 2147483648
        %v1178 = vmul.f32 %v1177, 1.442695
        %v1179 = vpow.pop %v1178
        %v1180 = vadd.f32 %v1179, 1.0
        %v1181 = vrcp.pop %v1180
        %v1182 = vmul.f32 1.0, %v1181
        %1183 = vst [vmem:[%s1135] sm:$0xff] %v1182
        %v1184 = vpack.c.bf16 %v1182, %v1182
        %s1185 = scalar_lea.vmem [#allocation3], 104
        %v1186 = vld [vmem:[%s1185] sm:$0xff]
        %1187 = vmatprep.subr.bf16.mxu0 0
        %1188 = vmatpush1.bf16.msra.mxu0 %v526
        %1189 = vmatprep.subr.bf16.mxu0 0
        %1190 = vmatpush1.bf16.msra.mxu0 %v527
        %1191 = vmatprep.subr.bf16.mxu0 0
        %1192 = vmatpush1.bf16.msra.mxu0 %v528
        %1193 = vmatprep.subr.bf16.mxu0 0
        %1194 = vmatpush1.bf16.msra.mxu0 %v529
        %1195 = vmatprep.subr.bf16.mxu0 0
        %1196 = vmatpush1.bf16.msra.mxu0 %v530
        %1197 = vmatprep.subr.bf16.mxu0 0
        %1198 = vmatpush1.bf16.msra.mxu0 %v531
        %1199 = vmatprep.subr.bf16.mxu0 0
        %1200 = vmatpush1.bf16.msra.mxu0 %v532
        %1201 = vmatprep.subr.bf16.mxu0 0
        %1202 = vmatpush1.bf16.msra.mxu0 %v533
        %1203 = vmatprep.subr.bf16.mxu0 0
        %1204 = vmatpush1.bf16.msra.mxu0 0
        %1205 = vmatprep.subr.bf16.mxu0 0
        %1206 = vmatpush1.bf16.msra.mxu0 0
        %1207 = vmatprep.subr.bf16.mxu0 0
        %1208 = vmatpush1.bf16.msra.mxu0 0
        %1209 = vmatprep.subr.bf16.mxu0 0
        %1210 = vmatpush1.bf16.msra.mxu0 0
        %1211 = vmatprep.subr.bf16.mxu0 0
        %1212 = vmatpush1.bf16.msra.mxu0 0
        %1213 = vmatprep.subr.bf16.mxu0 0
        %1214 = vmatpush1.bf16.msra.mxu0 0
        %1215 = vmatprep.subr.bf16.mxu0 0
        %1216 = vmatpush1.bf16.msra.mxu0 0
        %1217 = vmatprep.subr.bf16.mxu0 0
        %1218 = vmatpush1.bf16.msra.mxu0 0
        %1219 = vmatprep.mubr.bf16.mxu0 0
        %1220 = vmatmul.mubr.bf16.gmra.mrb[0].mxu0 %v1184
        %v1221 = vpop.f32.mrb[0].mxu0
        %v1222 = vadd.f32 %v1186, %v1221
        %v1223 = vpop.f32.mrb[0].mxu0
        %v1224 = vpop.f32.mrb[0].mxu0
        %v1225 = vpop.f32.mrb[0].mxu0
        %1226 = vdwg.mxu0
        %v1227 = vxor.u32 %v1222, 2147483648
        %v1228 = vmul.f32 %v1227, 1.442695
        %v1229 = vpow.pop %v1228
        %v1230 = vadd.f32 %v1229, 1.0
        %v1231 = vrcp.pop %v1230
        %v1232 = vmul.f32 1.0, %v1231
        %1233 = vst [vmem:[%s1185] sm:$0xff] %v1232
        %v1234 = vpack.c.bf16 %v1232, %v1232
        %s1235 = scalar_lea.vmem [#allocation3], 112
        %v1236 = vld [vmem:[%s1235] sm:$0xff]
        %1237 = vmatprep.subr.bf16.mxu0 0
        %1238 = vmatpush1.bf16.msra.mxu0 %v526
        %1239 = vmatprep.subr.bf16.mxu0 0
        %1240 = vmatpush1.bf16.msra.mxu0 %v527
        %1241 = vmatprep.subr.bf16.mxu0 0
        %1242 = vmatpush1.bf16.msra.mxu0 %v528
        %1243 = vmatprep.subr.bf16.mxu0 0
        %1244 = vmatpush1.bf16.msra.mxu0 %v529
        %1245 = vmatprep.subr.bf16.mxu0 0
        %1246 = vmatpush1.bf16.msra.mxu0 %v530
        %1247 = vmatprep.subr.bf16.mxu0 0
        %1248 = vmatpush1.bf16.msra.mxu0 %v531
        %1249 = vmatprep.subr.bf16.mxu0 0
        %1250 = vmatpush1.bf16.msra.mxu0 %v532
        %1251 = vmatprep.subr.bf16.mxu0 0
        %1252 = vmatpush1.bf16.msra.mxu0 %v533
        %1253 = vmatprep.subr.bf16.mxu0 0
        %1254 = vmatpush1.bf16.msra.mxu0 0
        %1255 = vmatprep.subr.bf16.mxu0 0
        %1256 = vmatpush1.bf16.msra.mxu0 0
        %1257 = vmatprep.subr.bf16.mxu0 0
        %1258 = vmatpush1.bf16.msra.mxu0 0
        %1259 = vmatprep.subr.bf16.mxu0 0
        %1260 = vmatpush1.bf16.msra.mxu0 0
        %1261 = vmatprep.subr.bf16.mxu0 0
        %1262 = vmatpush1.bf16.msra.mxu0 0
        %1263 = vmatprep.subr.bf16.mxu0 0
        %1264 = vmatpush1.bf16.msra.mxu0 0
        %1265 = vmatprep.subr.bf16.mxu0 0
        %1266 = vmatpush1.bf16.msra.mxu0 0
        %1267 = vmatprep.subr.bf16.mxu0 0
        %1268 = vmatpush1.bf16.msra.mxu0 0
        %1269 = vmatprep.mubr.bf16.mxu0 0
        %1270 = vmatmul.mubr.bf16.gmra.mrb[0].mxu0 %v1234
        %v1271 = vpop.f32.mrb[0].mxu0
        %v1272 = vadd.f32 %v1236, %v1271
        %v1273 = vpop.f32.mrb[0].mxu0
        %v1274 = vpop.f32.mrb[0].mxu0
        %v1275 = vpop.f32.mrb[0].mxu0
        %1276 = vdwg.mxu0
        %v1277 = vxor.u32 %v1272, 2147483648
        %v1278 = vmul.f32 %v1277, 1.442695
        %v1279 = vpow.pop %v1278
        %v1280 = vadd.f32 %v1279, 1.0
        %v1281 = vrcp.pop %v1280
        %v1282 = vmul.f32 1.0, %v1281
        %1283 = vst [vmem:[%s1235] sm:$0xff] %v1282
        %v1284 = vpack.c.bf16 %v1282, %v1282
        %s1285 = scalar_lea.vmem [#allocation3], 120
        %v1286 = vld [vmem:[%s1285] sm:$0xff]
        %1287 = vmatprep.subr.bf16.mxu0 0
        %1288 = vmatpush1.bf16.msra.mxu0 %v526
        %1289 = vmatprep.subr.bf16.mxu0 0
        %1290 = vmatpush1.bf16.msra.mxu0 %v527
        %1291 = vmatprep.subr.bf16.mxu0 0
        %1292 = vmatpush1.bf16.msra.mxu0 %v528
        %1293 = vmatprep.subr.bf16.mxu0 0
        %1294 = vmatpush1.bf16.msra.mxu0 %v529
        %1295 = vmatprep.subr.bf16.mxu0 0
        %1296 = vmatpush1.bf16.msra.mxu0 %v530
        %1297 = vmatprep.subr.bf16.mxu0 0
        %1298 = vmatpush1.bf16.msra.mxu0 %v531
        %1299 = vmatprep.subr.bf16.mxu0 0
        %1300 = vmatpush1.bf16.msra.mxu0 %v532
        %1301 = vmatprep.subr.bf16.mxu0 0
        %1302 = vmatpush1.bf16.msra.mxu0 %v533
        %1303 = vmatprep.subr.bf16.mxu0 0
        %1304 = vmatpush1.bf16.msra.mxu0 0
        %1305 = vmatprep.subr.bf16.mxu0 0
        %1306 = vmatpush1.bf16.msra.mxu0 0
        %1307 = vmatprep.subr.bf16.mxu0 0
        %1308 = vmatpush1.bf16.msra.mxu0 0
        %1309 = vmatprep.subr.bf16.mxu0 0
        %1310 = vmatpush1.bf16.msra.mxu0 0
        %1311 = vmatprep.subr.bf16.mxu0 0
        %1312 = vmatpush1.bf16.msra.mxu0 0
        %1313 = vmatprep.subr.bf16.mxu0 0
        %1314 = vmatpush1.bf16.msra.mxu0 0
        %1315 = vmatprep.subr.bf16.mxu0 0
        %1316 = vmatpush1.bf16.msra.mxu0 0
        %1317 = vmatprep.subr.bf16.mxu0 0
        %1318 = vmatpush1.bf16.msra.mxu0 0
        %1319 = vmatprep.mubr.bf16.mxu0 0
        %1320 = vmatmul.mubr.bf16.gmra.mrb[0].mxu0 %v1284
        %v1321 = vpop.f32.mrb[0].mxu0
        %v1322 = vadd.f32 %v1286, %v1321
        %v1323 = vpop.f32.mrb[0].mxu0
        %v1324 = vpop.f32.mrb[0].mxu0
        %v1325 = vpop.f32.mrb[0].mxu0
        %1326 = vdwg.mxu0
        %v1327 = vxor.u32 %v1322, 2147483648
        %v1328 = vmul.f32 %v1327, 1.442695
        %v1329 = vpow.pop %v1328
        %v1330 = vadd.f32 %v1329, 1.0
        %v1331 = vrcp.pop %v1330
        %v1332 = vmul.f32 1.0, %v1331
        %1333 = vst [vmem:[%s1285] sm:$0xff] %v1332
        %v1334 = vpack.c.bf16 %v1332, %v1332
        %s1335 = scalar_lea.vmem [#allocation3], 128
        %v1336 = vld [vmem:[%s1335] sm:$0xff]
        %1337 = vmatprep.subr.bf16.mxu0 0
        %1338 = vmatpush1.bf16.msra.mxu0 %v526
        %1339 = vmatprep.subr.bf16.mxu0 0
        %1340 = vmatpush1.bf16.msra.mxu0 %v527
        %1341 = vmatprep.subr.bf16.mxu0 0
        %1342 = vmatpush1.bf16.msra.mxu0 %v528
        %1343 = vmatprep.subr.bf16.mxu0 0
        %1344 = vmatpush1.bf16.msra.mxu0 %v529
        %1345 = vmatprep.subr.bf16.mxu0 0
        %1346 = vmatpush1.bf16.msra.mxu0 %v530
        %1347 = vmatprep.subr.bf16.mxu0 0
        %1348 = vmatpush1.bf16.msra.mxu0 %v531
        %1349 = vmatprep.subr.bf16.mxu0 0
        %1350 = vmatpush1.bf16.msra.mxu0 %v532
        %1351 = vmatprep.subr.bf16.mxu0 0
        %1352 = vmatpush1.bf16.msra.mxu0 %v533
        %1353 = vmatprep.subr.bf16.mxu0 0
        %1354 = vmatpush1.bf16.msra.mxu0 0
        %1355 = vmatprep.subr.bf16.mxu0 0
        %1356 = vmatpush1.bf16.msra.mxu0 0
        %1357 = vmatprep.subr.bf16.mxu0 0
        %1358 = vmatpush1.bf16.msra.mxu0 0
        %1359 = vmatprep.subr.bf16.mxu0 0
        %1360 = vmatpush1.bf16.msra.mxu0 0
        %1361 = vmatprep.subr.bf16.mxu0 0
        %1362 = vmatpush1.bf16.msra.mxu0 0
        %1363 = vmatprep.subr.bf16.mxu0 0
        %1364 = vmatpush1.bf16.msra.mxu0 0
        %1365 = vmatprep.subr.bf16.mxu0 0
        %1366 = vmatpush1.bf16.msra.mxu0 0
        %1367 = vmatprep.subr.bf16.mxu0 0
        %1368 = vmatpush1.bf16.msra.mxu0 0
        %1369 = vmatprep.mubr.bf16.mxu0 0
        %1370 = vmatmul.mubr.bf16.gmra.mrb[0].mxu0 %v1334
        %v1371 = vpop.f32.mrb[0].mxu0
        %v1372 = vadd.f32 %v1336, %v1371
        %v1373 = vpop.f32.mrb[0].mxu0
        %v1374 = vpop.f32.mrb[0].mxu0
        %v1375 = vpop.f32.mrb[0].mxu0
        %1376 = vdwg.mxu0
        %v1377 = vxor.u32 %v1372, 2147483648
        %v1378 = vmul.f32 %v1377, 1.442695
        %v1379 = vpow.pop %v1378
        %v1380 = vadd.f32 %v1379, 1.0
        %v1381 = vrcp.pop %v1380
        %v1382 = vmul.f32 1.0, %v1381
        %1383 = vst [vmem:[%s1335] sm:$0xff] %v1382
        %v1384 = vpack.c.bf16 %v1382, %v1382
        %s1385 = scalar_lea.vmem [#allocation3], 136
        %v1386 = vld [vmem:[%s1385] sm:$0xff]
        %1387 = vmatprep.subr.bf16.mxu0 0
        %1388 = vmatpush1.bf16.msra.mxu0 %v526
        %1389 = vmatprep.subr.bf16.mxu0 0
        %1390 = vmatpush1.bf16.msra.mxu0 %v527
        %1391 = vmatprep.subr.bf16.mxu0 0
        %1392 = vmatpush1.bf16.msra.mxu0 %v528
        %1393 = vmatprep.subr.bf16.mxu0 0
        %1394 = vmatpush1.bf16.msra.mxu0 %v529
        %1395 = vmatprep.subr.bf16.mxu0 0
        %1396 = vmatpush1.bf16.msra.mxu0 %v530
        %1397 = vmatprep.subr.bf16.mxu0 0
        %1398 = vmatpush1.bf16.msra.mxu0 %v531
        %1399 = vmatprep.subr.bf16.mxu0 0
        %1400 = vmatpush1.bf16.msra.mxu0 %v532
        %1401 = vmatprep.subr.bf16.mxu0 0
        %1402 = vmatpush1.bf16.msra.mxu0 %v533
        %1403 = vmatprep.subr.bf16.mxu0 0
        %1404 = vmatpush1.bf16.msra.mxu0 0
        %1405 = vmatprep.subr.bf16.mxu0 0
        %1406 = vmatpush1.bf16.msra.mxu0 0
        %1407 = vmatprep.subr.bf16.mxu0 0
        %1408 = vmatpush1.bf16.msra.mxu0 0
        %1409 = vmatprep.subr.bf16.mxu0 0
        %1410 = vmatpush1.bf16.msra.mxu0 0
        %1411 = vmatprep.subr.bf16.mxu0 0
        %1412 = vmatpush1.bf16.msra.mxu0 0
        %1413 = vmatprep.subr.bf16.mxu0 0
        %1414 = vmatpush1.bf16.msra.mxu0 0
        %1415 = vmatprep.subr.bf16.mxu0 0
        %1416 = vmatpush1.bf16.msra.mxu0 0
        %1417 = vmatprep.subr.bf16.mxu0 0
        %1418 = vmatpush1.bf16.msra.mxu0 0
        %1419 = vmatprep.mubr.bf16.mxu0 0
        %1420 = vmatmul.mubr.bf16.gmra.mrb[0].mxu0 %v1384
        %v1421 = vpop.f32.mrb[0].mxu0
        %v1422 = vadd.f32 %v1386, %v1421
        %v1423 = vpop.f32.mrb[0].mxu0
        %v1424 = vpop.f32.mrb[0].mxu0
        %v1425 = vpop.f32.mrb[0].mxu0
        %1426 = vdwg.mxu0
        %v1427 = vxor.u32 %v1422, 2147483648
        %v1428 = vmul.f32 %v1427, 1.442695
        %v1429 = vpow.pop %v1428
        %v1430 = vadd.f32 %v1429, 1.0
        %v1431 = vrcp.pop %v1430
        %v1432 = vmul.f32 1.0, %v1431
        %1433 = vst [vmem:[%s1385] sm:$0xff] %v1432
        %v1434 = vpack.c.bf16 %v1432, %v1432
        %s1435 = scalar_lea.vmem [#allocation3], 144
        %v1436 = vld [vmem:[%s1435] sm:$0xff]
        %1437 = vmatprep.subr.bf16.mxu0 0
        %1438 = vmatpush1.bf16.msra.mxu0 %v526
        %1439 = vmatprep.subr.bf16.mxu0 0
        %1440 = vmatpush1.bf16.msra.mxu0 %v527
        %1441 = vmatprep.subr.bf16.mxu0 0
        %1442 = vmatpush1.bf16.msra.mxu0 %v528
        %1443 = vmatprep.subr.bf16.mxu0 0
        %1444 = vmatpush1.bf16.msra.mxu0 %v529
        %1445 = vmatprep.subr.bf16.mxu0 0
        %1446 = vmatpush1.bf16.msra.mxu0 %v530
        %1447 = vmatprep.subr.bf16.mxu0 0
        %1448 = vmatpush1.bf16.msra.mxu0 %v531
        %1449 = vmatprep.subr.bf16.mxu0 0
        %1450 = vmatpush1.bf16.msra.mxu0 %v532
        %1451 = vmatprep.subr.bf16.mxu0 0
        %1452 = vmatpush1.bf16.msra.mxu0 %v533
        %1453 = vmatprep.subr.bf16.mxu0 0
        %1454 = vmatpush1.bf16.msra.mxu0 0
        %1455 = vmatprep.subr.bf16.mxu0 0
        %1456 = vmatpush1.bf16.msra.mxu0 0
        %1457 = vmatprep.subr.bf16.mxu0 0
        %1458 = vmatpush1.bf16.msra.mxu0 0
        %1459 = vmatprep.subr.bf16.mxu0 0
        %1460 = vmatpush1.bf16.msra.mxu0 0
        %1461 = vmatprep.subr.bf16.mxu0 0
        %1462 = vmatpush1.bf16.msra.mxu0 0
        %1463 = vmatprep.subr.bf16.mxu0 0
        %1464 = vmatpush1.bf16.msra.mxu0 0
        %1465 = vmatprep.subr.bf16.mxu0 0
        %1466 = vmatpush1.bf16.msra.mxu0 0
        %1467 = vmatprep.subr.bf16.mxu0 0
        %1468 = vmatpush1.bf16.msra.mxu0 0
        %1469 = vmatprep.mubr.bf16.mxu0 0
        %1470 = vmatmul.mubr.bf16.gmra.mrb[0].mxu0 %v1434
        %v1471 = vpop.f32.mrb[0].mxu0
        %v1472 = vadd.f32 %v1436, %v1471
        %v1473 = vpop.f32.mrb[0].mxu0
        %v1474 = vpop.f32.mrb[0].mxu0
        %v1475 = vpop.f32.mrb[0].mxu0
        %1476 = vdwg.mxu0
        %v1477 = vxor.u32 %v1472, 2147483648
        %v1478 = vmul.f32 %v1477, 1.442695
        %v1479 = vpow.pop %v1478
        %v1480 = vadd.f32 %v1479, 1.0
        %v1481 = vrcp.pop %v1480
        %v1482 = vmul.f32 1.0, %v1481
        %1483 = vst [vmem:[%s1435] sm:$0xff] %v1482
        %v1484 = vpack.c.bf16 %v1482, %v1482
        %s1485 = scalar_lea.vmem [#allocation3], 152
        %v1486 = vld [vmem:[%s1485] sm:$0xff]
        %1487 = vmatprep.subr.bf16.mxu0 0
        %1488 = vmatpush1.bf16.msra.mxu0 %v526
        %1489 = vmatprep.subr.bf16.mxu0 0
        %1490 = vmatpush1.bf16.msra.mxu0 %v527
        %1491 = vmatprep.subr.bf16.mxu0 0
        %1492 = vmatpush1.bf16.msra.mxu0 %v528
        %1493 = vmatprep.subr.bf16.mxu0 0
        %1494 = vmatpush1.bf16.msra.mxu0 %v529
        %1495 = vmatprep.subr.bf16.mxu0 0
        %1496 = vmatpush1.bf16.msra.mxu0 %v530
        %1497 = vmatprep.subr.bf16.mxu0 0
        %1498 = vmatpush1.bf16.msra.mxu0 %v531
        %1499 = vmatprep.subr.bf16.mxu0 0
        %1500 = vmatpush1.bf16.msra.mxu0 %v532
        %1501 = vmatprep.subr.bf16.mxu0 0
        %1502 = vmatpush1.bf16.msra.mxu0 %v533
        %1503 = vmatprep.subr.bf16.mxu0 0
        %1504 = vmatpush1.bf16.msra.mxu0 0
        %1505 = vmatprep.subr.bf16.mxu0 0
        %1506 = vmatpush1.bf16.msra.mxu0 0
        %1507 = vmatprep.subr.bf16.mxu0 0
        %1508 = vmatpush1.bf16.msra.mxu0 0
        %1509 = vmatprep.subr.bf16.mxu0 0
        %1510 = vmatpush1.bf16.msra.mxu0 0
        %1511 = vmatprep.subr.bf16.mxu0 0
        %1512 = vmatpush1.bf16.msra.mxu0 0
        %1513 = vmatprep.subr.bf16.mxu0 0
        %1514 = vmatpush1.bf16.msra.mxu0 0
        %1515 = vmatprep.subr.bf16.mxu0 0
        %1516 = vmatpush1.bf16.msra.mxu0 0
        %1517 = vmatprep.subr.bf16.mxu0 0
        %1518 = vmatpush1.bf16.msra.mxu0 0
        %1519 = vmatprep.mubr.bf16.mxu0 0
        %1520 = vmatmul.mubr.bf16.gmra.mrb[0].mxu0 %v1484
        %v1521 = vpop.f32.mrb[0].mxu0
        %v1522 = vadd.f32 %v1486, %v1521
        %v1523 = vpop.f32.mrb[0].mxu0
        %v1524 = vpop.f32.mrb[0].mxu0
        %v1525 = vpop.f32.mrb[0].mxu0
        %1526 = vdwg.mxu0
        %v1527 = vxor.u32 %v1522, 2147483648
        %v1528 = vmul.f32 %v1527, 1.442695
        %v1529 = vpow.pop %v1528
        %v1530 = vadd.f32 %v1529, 1.0
        %v1531 = vrcp.pop %v1530
        %v1532 = vmul.f32 1.0, %v1531
        %1533 = vst [vmem:[%s1485] sm:$0xff] %v1532
        %v1534 = vpack.c.bf16 %v1532, %v1532
        %s1535 = scalar_lea.vmem [#allocation3], 160
        %v1536 = vld [vmem:[%s1535] sm:$0xff]
        %1537 = vmatprep.subr.bf16.mxu0 0
        %1538 = vmatpush1.bf16.msra.mxu0 %v526
        %1539 = vmatprep.subr.bf16.mxu0 0
        %1540 = vmatpush1.bf16.msra.mxu0 %v527
        %1541 = vmatprep.subr.bf16.mxu0 0
        %1542 = vmatpush1.bf16.msra.mxu0 %v528
        %1543 = vmatprep.subr.bf16.mxu0 0
        %1544 = vmatpush1.bf16.msra.mxu0 %v529
        %1545 = vmatprep.subr.bf16.mxu0 0
        %1546 = vmatpush1.bf16.msra.mxu0 %v530
        %1547 = vmatprep.subr.bf16.mxu0 0
        %1548 = vmatpush1.bf16.msra.mxu0 %v531
        %1549 = vmatprep.subr.bf16.mxu0 0
        %1550 = vmatpush1.bf16.msra.mxu0 %v532
        %1551 = vmatprep.subr.bf16.mxu0 0
        %1552 = vmatpush1.bf16.msra.mxu0 %v533
        %1553 = vmatprep.subr.bf16.mxu0 0
        %1554 = vmatpush1.bf16.msra.mxu0 0
        %1555 = vmatprep.subr.bf16.mxu0 0
        %1556 = vmatpush1.bf16.msra.mxu0 0
        %1557 = vmatprep.subr.bf16.mxu0 0
        %1558 = vmatpush1.bf16.msra.mxu0 0
        %1559 = vmatprep.subr.bf16.mxu0 0
        %1560 = vmatpush1.bf16.msra.mxu0 0
        %1561 = vmatprep.subr.bf16.mxu0 0
        %1562 = vmatpush1.bf16.msra.mxu0 0
        %1563 = vmatprep.subr.bf16.mxu0 0
        %1564 = vmatpush1.bf16.msra.mxu0 0
        %1565 = vmatprep.subr.bf16.mxu0 0
        %1566 = vmatpush1.bf16.msra.mxu0 0
        %1567 = vmatprep.subr.bf16.mxu0 0
        %1568 = vmatpush1.bf16.msra.mxu0 0
        %1569 = vmatprep.mubr.bf16.mxu0 0
        %1570 = vmatmul.mubr.bf16.gmra.mrb[0].mxu0 %v1534
        %v1571 = vpop.f32.mrb[0].mxu0
        %v1572 = vadd.f32 %v1536, %v1571
        %v1573 = vpop.f32.mrb[0].mxu0
        %v1574 = vpop.f32.mrb[0].mxu0
        %v1575 = vpop.f32.mrb[0].mxu0
        %1576 = vdwg.mxu0
        %v1577 = vxor.u32 %v1572, 2147483648
        %v1578 = vmul.f32 %v1577, 1.442695
        %v1579 = vpow.pop %v1578
        %v1580 = vadd.f32 %v1579, 1.0
        %v1581 = vrcp.pop %v1580
        %v1582 = vmul.f32 1.0, %v1581
        %1583 = vst [vmem:[%s1535] sm:$0xff] %v1582
        %v1584 = vpack.c.bf16 %v1582, %v1582
        %s1585 = scalar_lea.vmem [#allocation3], 168
        %v1586 = vld [vmem:[%s1585] sm:$0xff]
        %1587 = vmatprep.subr.bf16.mxu0 0
        %1588 = vmatpush1.bf16.msra.mxu0 %v526
        %1589 = vmatprep.subr.bf16.mxu0 0
        %1590 = vmatpush1.bf16.msra.mxu0 %v527
        %1591 = vmatprep.subr.bf16.mxu0 0
        %1592 = vmatpush1.bf16.msra.mxu0 %v528
        %1593 = vmatprep.subr.bf16.mxu0 0
        %1594 = vmatpush1.bf16.msra.mxu0 %v529
        %1595 = vmatprep.subr.bf16.mxu0 0
        %1596 = vmatpush1.bf16.msra.mxu0 %v530
        %1597 = vmatprep.subr.bf16.mxu0 0
        %1598 = vmatpush1.bf16.msra.mxu0 %v531
        %1599 = vmatprep.subr.bf16.mxu0 0
        %1600 = vmatpush1.bf16.msra.mxu0 %v532
        %1601 = vmatprep.subr.bf16.mxu0 0
        %1602 = vmatpush1.bf16.msra.mxu0 %v533
        %1603 = vmatprep.subr.bf16.mxu0 0
        %1604 = vmatpush1.bf16.msra.mxu0 0
        %1605 = vmatprep.subr.bf16.mxu0 0
        %1606 = vmatpush1.bf16.msra.mxu0 0
        %1607 = vmatprep.subr.bf16.mxu0 0
        %1608 = vmatpush1.bf16.msra.mxu0 0
        %1609 = vmatprep.subr.bf16.mxu0 0
        %1610 = vmatpush1.bf16.msra.mxu0 0
        %1611 = vmatprep.subr.bf16.mxu0 0
        %1612 = vmatpush1.bf16.msra.mxu0 0
        %1613 = vmatprep.subr.bf16.mxu0 0
        %1614 = vmatpush1.bf16.msra.mxu0 0
        %1615 = vmatprep.subr.bf16.mxu0 0
        %1616 = vmatpush1.bf16.msra.mxu0 0
        %1617 = vmatprep.subr.bf16.mxu0 0
        %1618 = vmatpush1.bf16.msra.mxu0 0
        %1619 = vmatprep.mubr.bf16.mxu0 0
        %1620 = vmatmul.mubr.bf16.gmra.mrb[0].mxu0 %v1584
        %v1621 = vpop.f32.mrb[0].mxu0
        %v1622 = vadd.f32 %v1586, %v1621
        %v1623 = vpop.f32.mrb[0].mxu0
        %v1624 = vpop.f32.mrb[0].mxu0
        %v1625 = vpop.f32.mrb[0].mxu0
        %1626 = vdwg.mxu0
        %v1627 = vxor.u32 %v1622, 2147483648
        %v1628 = vmul.f32 %v1627, 1.442695
        %v1629 = vpow.pop %v1628
        %v1630 = vadd.f32 %v1629, 1.0
        %v1631 = vrcp.pop %v1630
        %v1632 = vmul.f32 1.0, %v1631
        %1633 = vst [vmem:[%s1585] sm:$0xff] %v1632
        %v1634 = vpack.c.bf16 %v1632, %v1632
        %s1635 = scalar_lea.vmem [#allocation3], 176
        %v1636 = vld [vmem:[%s1635] sm:$0xff]
        %1637 = vmatprep.subr.bf16.mxu0 0
        %1638 = vmatpush1.bf16.msra.mxu0 %v526
        %1639 = vmatprep.subr.bf16.mxu0 0
        %1640 = vmatpush1.bf16.msra.mxu0 %v527
        %1641 = vmatprep.subr.bf16.mxu0 0
        %1642 = vmatpush1.bf16.msra.mxu0 %v528
        %1643 = vmatprep.subr.bf16.mxu0 0
        %1644 = vmatpush1.bf16.msra.mxu0 %v529
        %1645 = vmatprep.subr.bf16.mxu0 0
        %1646 = vmatpush1.bf16.msra.mxu0 %v530
        %1647 = vmatprep.subr.bf16.mxu0 0
        %1648 = vmatpush1.bf16.msra.mxu0 %v531
        %1649 = vmatprep.subr.bf16.mxu0 0
        %1650 = vmatpush1.bf16.msra.mxu0 %v532
        %1651 = vmatprep.subr.bf16.mxu0 0
        %1652 = vmatpush1.bf16.msra.mxu0 %v533
        %1653 = vmatprep.subr.bf16.mxu0 0
        %1654 = vmatpush1.bf16.msra.mxu0 0
        %1655 = vmatprep.subr.bf16.mxu0 0
        %1656 = vmatpush1.bf16.msra.mxu0 0
        %1657 = vmatprep.subr.bf16.mxu0 0
        %1658 = vmatpush1.bf16.msra.mxu0 0
        %1659 = vmatprep.subr.bf16.mxu0 0
        %1660 = vmatpush1.bf16.msra.mxu0 0
        %1661 = vmatprep.subr.bf16.mxu0 0
        %1662 = vmatpush1.bf16.msra.mxu0 0
        %1663 = vmatprep.subr.bf16.mxu0 0
        %1664 = vmatpush1.bf16.msra.mxu0 0
        %1665 = vmatprep.subr.bf16.mxu0 0
        %1666 = vmatpush1.bf16.msra.mxu0 0
        %1667 = vmatprep.subr.bf16.mxu0 0
        %1668 = vmatpush1.bf16.msra.mxu0 0
        %1669 = vmatprep.mubr.bf16.mxu0 0
        %1670 = vmatmul.mubr.bf16.gmra.mrb[0].mxu0 %v1634
        %v1671 = vpop.f32.mrb[0].mxu0
        %v1672 = vadd.f32 %v1636, %v1671
        %v1673 = vpop.f32.mrb[0].mxu0
        %v1674 = vpop.f32.mrb[0].mxu0
        %v1675 = vpop.f32.mrb[0].mxu0
        %1676 = vdwg.mxu0
        %v1677 = vxor.u32 %v1672, 2147483648
        %v1678 = vmul.f32 %v1677, 1.442695
        %v1679 = vpow.pop %v1678
        %v1680 = vadd.f32 %v1679, 1.0
        %v1681 = vrcp.pop %v1680
        %v1682 = vmul.f32 1.0, %v1681
        %1683 = vst [vmem:[%s1635] sm:$0xff] %v1682
        %v1684 = vpack.c.bf16 %v1682, %v1682
        %s1685 = scalar_lea.vmem [#allocation3], 184
        %v1686 = vld [vmem:[%s1685] sm:$0xff]
        %1687 = vmatprep.subr.bf16.mxu0 0
        %1688 = vmatpush1.bf16.msra.mxu0 %v526
        %1689 = vmatprep.subr.bf16.mxu0 0
        %1690 = vmatpush1.bf16.msra.mxu0 %v527
        %1691 = vmatprep.subr.bf16.mxu0 0
        %1692 = vmatpush1.bf16.msra.mxu0 %v528
        %1693 = vmatprep.subr.bf16.mxu0 0
        %1694 = vmatpush1.bf16.msra.mxu0 %v529
        %1695 = vmatprep.subr.bf16.mxu0 0
        %1696 = vmatpush1.bf16.msra.mxu0 %v530
        %1697 = vmatprep.subr.bf16.mxu0 0
        %1698 = vmatpush1.bf16.msra.mxu0 %v531
        %1699 = vmatprep.subr.bf16.mxu0 0
        %1700 = vmatpush1.bf16.msra.mxu0 %v532
        %1701 = vmatprep.subr.bf16.mxu0 0
        %1702 = vmatpush1.bf16.msra.mxu0 %v533
        %1703 = vmatprep.subr.bf16.mxu0 0
        %1704 = vmatpush1.bf16.msra.mxu0 0
        %1705 = vmatprep.subr.bf16.mxu0 0
        %1706 = vmatpush1.bf16.msra.mxu0 0
        %1707 = vmatprep.subr.bf16.mxu0 0
        %1708 = vmatpush1.bf16.msra.mxu0 0
        %1709 = vmatprep.subr.bf16.mxu0 0
        %1710 = vmatpush1.bf16.msra.mxu0 0
        %1711 = vmatprep.subr.bf16.mxu0 0
        %1712 = vmatpush1.bf16.msra.mxu0 0
        %1713 = vmatprep.subr.bf16.mxu0 0
        %1714 = vmatpush1.bf16.msra.mxu0 0
        %1715 = vmatprep.subr.bf16.mxu0 0
        %1716 = vmatpush1.bf16.msra.mxu0 0
        %1717 = vmatprep.subr.bf16.mxu0 0
        %1718 = vmatpush1.bf16.msra.mxu0 0
        %1719 = vmatprep.mubr.bf16.mxu0 0
        %1720 = vmatmul.mubr.bf16.gmra.mrb[0].mxu0 %v1684
        %v1721 = vpop.f32.mrb[0].mxu0
        %v1722 = vadd.f32 %v1686, %v1721
        %v1723 = vpop.f32.mrb[0].mxu0
        %v1724 = vpop.f32.mrb[0].mxu0
        %v1725 = vpop.f32.mrb[0].mxu0
        %1726 = vdwg.mxu0
        %v1727 = vxor.u32 %v1722, 2147483648
        %v1728 = vmul.f32 %v1727, 1.442695
        %v1729 = vpow.pop %v1728
        %v1730 = vadd.f32 %v1729, 1.0
        %v1731 = vrcp.pop %v1730
        %v1732 = vmul.f32 1.0, %v1731
        %1733 = vst [vmem:[%s1685] sm:$0xff] %v1732
        %v1734 = vpack.c.bf16 %v1732, %v1732
        %s1735 = scalar_lea.vmem [#allocation3], 192
        %v1736 = vld [vmem:[%s1735] sm:$0xff]
        %1737 = vmatprep.subr.bf16.mxu0 0
        %1738 = vmatpush1.bf16.msra.mxu0 %v526
        %1739 = vmatprep.subr.bf16.mxu0 0
        %1740 = vmatpush1.bf16.msra.mxu0 %v527
        %1741 = vmatprep.subr.bf16.mxu0 0
        %1742 = vmatpush1.bf16.msra.mxu0 %v528
        %1743 = vmatprep.subr.bf16.mxu0 0
        %1744 = vmatpush1.bf16.msra.mxu0 %v529
        %1745 = vmatprep.subr.bf16.mxu0 0
        %1746 = vmatpush1.bf16.msra.mxu0 %v530
        %1747 = vmatprep.subr.bf16.mxu0 0
        %1748 = vmatpush1.bf16.msra.mxu0 %v531
        %1749 = vmatprep.subr.bf16.mxu0 0
        %1750 = vmatpush1.bf16.msra.mxu0 %v532
        %1751 = vmatprep.subr.bf16.mxu0 0
        %1752 = vmatpush1.bf16.msra.mxu0 %v533
        %1753 = vmatprep.subr.bf16.mxu0 0
        %1754 = vmatpush1.bf16.msra.mxu0 0
        %1755 = vmatprep.subr.bf16.mxu0 0
        %1756 = vmatpush1.bf16.msra.mxu0 0
        %1757 = vmatprep.subr.bf16.mxu0 0
        %1758 = vmatpush1.bf16.msra.mxu0 0
        %1759 = vmatprep.subr.bf16.mxu0 0
        %1760 = vmatpush1.bf16.msra.mxu0 0
        %1761 = vmatprep.subr.bf16.mxu0 0
        %1762 = vmatpush1.bf16.msra.mxu0 0
        %1763 = vmatprep.subr.bf16.mxu0 0
        %1764 = vmatpush1.bf16.msra.mxu0 0
        %1765 = vmatprep.subr.bf16.mxu0 0
        %1766 = vmatpush1.bf16.msra.mxu0 0
        %1767 = vmatprep.subr.bf16.mxu0 0
        %1768 = vmatpush1.bf16.msra.mxu0 0
        %1769 = vmatprep.mubr.bf16.mxu0 0
        %1770 = vmatmul.mubr.bf16.gmra.mrb[0].mxu0 %v1734
        %v1771 = vpop.f32.mrb[0].mxu0
        %v1772 = vadd.f32 %v1736, %v1771
        %v1773 = vpop.f32.mrb[0].mxu0
        %v1774 = vpop.f32.mrb[0].mxu0
        %v1775 = vpop.f32.mrb[0].mxu0
        %1776 = vdwg.mxu0
        %v1777 = vxor.u32 %v1772, 2147483648
        %v1778 = vmul.f32 %v1777, 1.442695
        %v1779 = vpow.pop %v1778
        %v1780 = vadd.f32 %v1779, 1.0
        %v1781 = vrcp.pop %v1780
        %v1782 = vmul.f32 1.0, %v1781
        %1783 = vst [vmem:[%s1735] sm:$0xff] %v1782
        %v1784 = vpack.c.bf16 %v1782, %v1782
        %s1785 = scalar_lea.vmem [#allocation3], 200
        %v1786 = vld [vmem:[%s1785] sm:$0xff]
        %1787 = vmatprep.subr.bf16.mxu0 0
        %1788 = vmatpush1.bf16.msra.mxu0 %v526
        %1789 = vmatprep.subr.bf16.mxu0 0
        %1790 = vmatpush1.bf16.msra.mxu0 %v527
        %1791 = vmatprep.subr.bf16.mxu0 0
        %1792 = vmatpush1.bf16.msra.mxu0 %v528
        %1793 = vmatprep.subr.bf16.mxu0 0
        %1794 = vmatpush1.bf16.msra.mxu0 %v529
        %1795 = vmatprep.subr.bf16.mxu0 0
        %1796 = vmatpush1.bf16.msra.mxu0 %v530
        %1797 = vmatprep.subr.bf16.mxu0 0
        %1798 = vmatpush1.bf16.msra.mxu0 %v531
        %1799 = vmatprep.subr.bf16.mxu0 0
        %1800 = vmatpush1.bf16.msra.mxu0 %v532
        %1801 = vmatprep.subr.bf16.mxu0 0
        %1802 = vmatpush1.bf16.msra.mxu0 %v533
        %1803 = vmatprep.subr.bf16.mxu0 0
        %1804 = vmatpush1.bf16.msra.mxu0 0
        %1805 = vmatprep.subr.bf16.mxu0 0
        %1806 = vmatpush1.bf16.msra.mxu0 0
        %1807 = vmatprep.subr.bf16.mxu0 0
        %1808 = vmatpush1.bf16.msra.mxu0 0
        %1809 = vmatprep.subr.bf16.mxu0 0
        %1810 = vmatpush1.bf16.msra.mxu0 0
        %1811 = vmatprep.subr.bf16.mxu0 0
        %1812 = vmatpush1.bf16.msra.mxu0 0
        %1813 = vmatprep.subr.bf16.mxu0 0
        %1814 = vmatpush1.bf16.msra.mxu0 0
        %1815 = vmatprep.subr.bf16.mxu0 0
        %1816 = vmatpush1.bf16.msra.mxu0 0
        %1817 = vmatprep.subr.bf16.mxu0 0
        %1818 = vmatpush1.bf16.msra.mxu0 0
        %1819 = vmatprep.mubr.bf16.mxu0 0
        %1820 = vmatmul.mubr.bf16.gmra.mrb[0].mxu0 %v1784
        %v1821 = vpop.f32.mrb[0].mxu0
        %v1822 = vadd.f32 %v1786, %v1821
        %v1823 = vpop.f32.mrb[0].mxu0
        %v1824 = vpop.f32.mrb[0].mxu0
        %v1825 = vpop.f32.mrb[0].mxu0
        %1826 = vdwg.mxu0
        %v1827 = vxor.u32 %v1822, 2147483648
        %v1828 = vmul.f32 %v1827, 1.442695
        %v1829 = vpow.pop %v1828
        %v1830 = vadd.f32 %v1829, 1.0
        %v1831 = vrcp.pop %v1830
        %v1832 = vmul.f32 1.0, %v1831
        %1833 = vst [vmem:[%s1785] sm:$0xff] %v1832
        %v1834 = vpack.c.bf16 %v1832, %v1832
        %s1835 = scalar_lea.vmem [#allocation3], 208
        %v1836 = vld [vmem:[%s1835] sm:$0xff]
        %1837 = vmatprep.subr.bf16.mxu0 0
        %1838 = vmatpush1.bf16.msra.mxu0 %v526
        %1839 = vmatprep.subr.bf16.mxu0 0
        %1840 = vmatpush1.bf16.msra.mxu0 %v527
        %1841 = vmatprep.subr.bf16.mxu0 0
        %1842 = vmatpush1.bf16.msra.mxu0 %v528
        %1843 = vmatprep.subr.bf16.mxu0 0
        %1844 = vmatpush1.bf16.msra.mxu0 %v529
        %1845 = vmatprep.subr.bf16.mxu0 0
        %1846 = vmatpush1.bf16.msra.mxu0 %v530
        %1847 = vmatprep.subr.bf16.mxu0 0
        %1848 = vmatpush1.bf16.msra.mxu0 %v531
        %1849 = vmatprep.subr.bf16.mxu0 0
        %1850 = vmatpush1.bf16.msra.mxu0 %v532
        %1851 = vmatprep.subr.bf16.mxu0 0
        %1852 = vmatpush1.bf16.msra.mxu0 %v533
        %1853 = vmatprep.subr.bf16.mxu0 0
        %1854 = vmatpush1.bf16.msra.mxu0 0
        %1855 = vmatprep.subr.bf16.mxu0 0
        %1856 = vmatpush1.bf16.msra.mxu0 0
        %1857 = vmatprep.subr.bf16.mxu0 0
        %1858 = vmatpush1.bf16.msra.mxu0 0
        %1859 = vmatprep.subr.bf16.mxu0 0
        %1860 = vmatpush1.bf16.msra.mxu0 0
        %1861 = vmatprep.subr.bf16.mxu0 0
        %1862 = vmatpush1.bf16.msra.mxu0 0
        %1863 = vmatprep.subr.bf16.mxu0 0
        %1864 = vmatpush1.bf16.msra.mxu0 0
        %1865 = vmatprep.subr.bf16.mxu0 0
        %1866 = vmatpush1.bf16.msra.mxu0 0
        %1867 = vmatprep.subr.bf16.mxu0 0
        %1868 = vmatpush1.bf16.msra.mxu0 0
        %1869 = vmatprep.mubr.bf16.mxu0 0
        %1870 = vmatmul.mubr.bf16.gmra.mrb[0].mxu0 %v1834
        %v1871 = vpop.f32.mrb[0].mxu0
        %v1872 = vadd.f32 %v1836, %v1871
        %v1873 = vpop.f32.mrb[0].mxu0
        %v1874 = vpop.f32.mrb[0].mxu0
        %v1875 = vpop.f32.mrb[0].mxu0
        %1876 = vdwg.mxu0
        %v1877 = vxor.u32 %v1872, 2147483648
        %v1878 = vmul.f32 %v1877, 1.442695
        %v1879 = vpow.pop %v1878
        %v1880 = vadd.f32 %v1879, 1.0
        %v1881 = vrcp.pop %v1880
        %v1882 = vmul.f32 1.0, %v1881
        %1883 = vst [vmem:[%s1835] sm:$0xff] %v1882
        %v1884 = vpack.c.bf16 %v1882, %v1882
        %s1885 = scalar_lea.vmem [#allocation3], 216
        %v1886 = vld [vmem:[%s1885] sm:$0xff]
        %1887 = vmatprep.subr.bf16.mxu0 0
        %1888 = vmatpush1.bf16.msra.mxu0 %v526
        %1889 = vmatprep.subr.bf16.mxu0 0
        %1890 = vmatpush1.bf16.msra.mxu0 %v527
        %1891 = vmatprep.subr.bf16.mxu0 0
        %1892 = vmatpush1.bf16.msra.mxu0 %v528
        %1893 = vmatprep.subr.bf16.mxu0 0
        %1894 = vmatpush1.bf16.msra.mxu0 %v529
        %1895 = vmatprep.subr.bf16.mxu0 0
        %1896 = vmatpush1.bf16.msra.mxu0 %v530
        %1897 = vmatprep.subr.bf16.mxu0 0
        %1898 = vmatpush1.bf16.msra.mxu0 %v531
        %1899 = vmatprep.subr.bf16.mxu0 0
        %1900 = vmatpush1.bf16.msra.mxu0 %v532
        %1901 = vmatprep.subr.bf16.mxu0 0
        %1902 = vmatpush1.bf16.msra.mxu0 %v533
        %1903 = vmatprep.subr.bf16.mxu0 0
        %1904 = vmatpush1.bf16.msra.mxu0 0
        %1905 = vmatprep.subr.bf16.mxu0 0
        %1906 = vmatpush1.bf16.msra.mxu0 0
        %1907 = vmatprep.subr.bf16.mxu0 0
        %1908 = vmatpush1.bf16.msra.mxu0 0
        %1909 = vmatprep.subr.bf16.mxu0 0
        %1910 = vmatpush1.bf16.msra.mxu0 0
        %1911 = vmatprep.subr.bf16.mxu0 0
        %1912 = vmatpush1.bf16.msra.mxu0 0
        %1913 = vmatprep.subr.bf16.mxu0 0
        %1914 = vmatpush1.bf16.msra.mxu0 0
        %1915 = vmatprep.subr.bf16.mxu0 0
        %1916 = vmatpush1.bf16.msra.mxu0 0
        %1917 = vmatprep.subr.bf16.mxu0 0
        %1918 = vmatpush1.bf16.msra.mxu0 0
        %1919 = vmatprep.mubr.bf16.mxu0 0
        %1920 = vmatmul.mubr.bf16.gmra.mrb[0].mxu0 %v1884
        %v1921 = vpop.f32.mrb[0].mxu0
        %v1922 = vadd.f32 %v1886, %v1921
        %v1923 = vpop.f32.mrb[0].mxu0
        %v1924 = vpop.f32.mrb[0].mxu0
        %v1925 = vpop.f32.mrb[0].mxu0
        %1926 = vdwg.mxu0
        %v1927 = vxor.u32 %v1922, 2147483648
        %v1928 = vmul.f32 %v1927, 1.442695
        %v1929 = vpow.pop %v1928
        %v1930 = vadd.f32 %v1929, 1.0
        %v1931 = vrcp.pop %v1930
        %v1932 = vmul.f32 1.0, %v1931
        %1933 = vst [vmem:[%s1885] sm:$0xff] %v1932
        %v1934 = vpack.c.bf16 %v1932, %v1932
        %s1935 = scalar_lea.vmem [#allocation3], 224
        %v1936 = vld [vmem:[%s1935] sm:$0xff]
        %1937 = vmatprep.subr.bf16.mxu0 0
        %1938 = vmatpush1.bf16.msra.mxu0 %v526
        %1939 = vmatprep.subr.bf16.mxu0 0
        %1940 = vmatpush1.bf16.msra.mxu0 %v527
        %1941 = vmatprep.subr.bf16.mxu0 0
        %1942 = vmatpush1.bf16.msra.mxu0 %v528
        %1943 = vmatprep.subr.bf16.mxu0 0
        %1944 = vmatpush1.bf16.msra.mxu0 %v529
        %1945 = vmatprep.subr.bf16.mxu0 0
        %1946 = vmatpush1.bf16.msra.mxu0 %v530
        %1947 = vmatprep.subr.bf16.mxu0 0
        %1948 = vmatpush1.bf16.msra.mxu0 %v531
        %1949 = vmatprep.subr.bf16.mxu0 0
        %1950 = vmatpush1.bf16.msra.mxu0 %v532
        %1951 = vmatprep.subr.bf16.mxu0 0
        %1952 = vmatpush1.bf16.msra.mxu0 %v533
        %1953 = vmatprep.subr.bf16.mxu0 0
        %1954 = vmatpush1.bf16.msra.mxu0 0
        %1955 = vmatprep.subr.bf16.mxu0 0
        %1956 = vmatpush1.bf16.msra.mxu0 0
        %1957 = vmatprep.subr.bf16.mxu0 0
        %1958 = vmatpush1.bf16.msra.mxu0 0
        %1959 = vmatprep.subr.bf16.mxu0 0
        %1960 = vmatpush1.bf16.msra.mxu0 0
        %1961 = vmatprep.subr.bf16.mxu0 0
        %1962 = vmatpush1.bf16.msra.mxu0 0
        %1963 = vmatprep.subr.bf16.mxu0 0
        %1964 = vmatpush1.bf16.msra.mxu0 0
        %1965 = vmatprep.subr.bf16.mxu0 0
        %1966 = vmatpush1.bf16.msra.mxu0 0
        %1967 = vmatprep.subr.bf16.mxu0 0
        %1968 = vmatpush1.bf16.msra.mxu0 0
        %1969 = vmatprep.mubr.bf16.mxu0 0
        %1970 = vmatmul.mubr.bf16.gmra.mrb[0].mxu0 %v1934
        %v1971 = vpop.f32.mrb[0].mxu0
        %v1972 = vadd.f32 %v1936, %v1971
        %v1973 = vpop.f32.mrb[0].mxu0
        %v1974 = vpop.f32.mrb[0].mxu0
        %v1975 = vpop.f32.mrb[0].mxu0
        %1976 = vdwg.mxu0
        %v1977 = vxor.u32 %v1972, 2147483648
        %v1978 = vmul.f32 %v1977, 1.442695
        %v1979 = vpow.pop %v1978
        %v1980 = vadd.f32 %v1979, 1.0
        %v1981 = vrcp.pop %v1980
        %v1982 = vmul.f32 1.0, %v1981
        %1983 = vst [vmem:[%s1935] sm:$0xff] %v1982
        %v1984 = vpack.c.bf16 %v1982, %v1982
        %s1985 = scalar_lea.vmem [#allocation3], 232
        %v1986 = vld [vmem:[%s1985] sm:$0xff]
        %1987 = vmatprep.subr.bf16.mxu0 0
        %1988 = vmatpush1.bf16.msra.mxu0 %v526
        %1989 = vmatprep.subr.bf16.mxu0 0
        %1990 = vmatpush1.bf16.msra.mxu0 %v527
        %1991 = vmatprep.subr.bf16.mxu0 0
        %1992 = vmatpush1.bf16.msra.mxu0 %v528
        %1993 = vmatprep.subr.bf16.mxu0 0
        %1994 = vmatpush1.bf16.msra.mxu0 %v529
        %1995 = vmatprep.subr.bf16.mxu0 0
        %1996 = vmatpush1.bf16.msra.mxu0 %v530
        %1997 = vmatprep.subr.bf16.mxu0 0
        %1998 = vmatpush1.bf16.msra.mxu0 %v531
        %1999 = vmatprep.subr.bf16.mxu0 0
        %2000 = vmatpush1.bf16.msra.mxu0 %v532
        %2001 = vmatprep.subr.bf16.mxu0 0
        %2002 = vmatpush1.bf16.msra.mxu0 %v533
        %2003 = vmatprep.subr.bf16.mxu0 0
        %2004 = vmatpush1.bf16.msra.mxu0 0
        %2005 = vmatprep.subr.bf16.mxu0 0
        %2006 = vmatpush1.bf16.msra.mxu0 0
        %2007 = vmatprep.subr.bf16.mxu0 0
        %2008 = vmatpush1.bf16.msra.mxu0 0
        %2009 = vmatprep.subr.bf16.mxu0 0
        %2010 = vmatpush1.bf16.msra.mxu0 0
        %2011 = vmatprep.subr.bf16.mxu0 0
        %2012 = vmatpush1.bf16.msra.mxu0 0
        %2013 = vmatprep.subr.bf16.mxu0 0
        %2014 = vmatpush1.bf16.msra.mxu0 0
        %2015 = vmatprep.subr.bf16.mxu0 0
        %2016 = vmatpush1.bf16.msra.mxu0 0
        %2017 = vmatprep.subr.bf16.mxu0 0
        %2018 = vmatpush1.bf16.msra.mxu0 0
        %2019 = vmatprep.mubr.bf16.mxu0 0
        %2020 = vmatmul.mubr.bf16.gmra.mrb[0].mxu0 %v1984
        %v2021 = vpop.f32.mrb[0].mxu0
        %v2022 = vadd.f32 %v1986, %v2021
        %v2023 = vpop.f32.mrb[0].mxu0
        %v2024 = vpop.f32.mrb[0].mxu0
        %v2025 = vpop.f32.mrb[0].mxu0
        %2026 = vdwg.mxu0
        %v2027 = vxor.u32 %v2022, 2147483648
        %v2028 = vmul.f32 %v2027, 1.442695
        %v2029 = vpow.pop %v2028
        %v2030 = vadd.f32 %v2029, 1.0
        %v2031 = vrcp.pop %v2030
        %v2032 = vmul.f32 1.0, %v2031
        %2033 = vst [vmem:[%s1985] sm:$0xff] %v2032
        %v2034 = vpack.c.bf16 %v2032, %v2032
        %s2035 = scalar_lea.vmem [#allocation3], 240
        %v2036 = vld [vmem:[%s2035] sm:$0xff]
        %2037 = vmatprep.subr.bf16.mxu0 0
        %2038 = vmatpush1.bf16.msra.mxu0 %v526
        %2039 = vmatprep.subr.bf16.mxu0 0
        %2040 = vmatpush1.bf16.msra.mxu0 %v527
        %2041 = vmatprep.subr.bf16.mxu0 0
        %2042 = vmatpush1.bf16.msra.mxu0 %v528
        %2043 = vmatprep.subr.bf16.mxu0 0
        %2044 = vmatpush1.bf16.msra.mxu0 %v529
        %2045 = vmatprep.subr.bf16.mxu0 0
        %2046 = vmatpush1.bf16.msra.mxu0 %v530
        %2047 = vmatprep.subr.bf16.mxu0 0
        %2048 = vmatpush1.bf16.msra.mxu0 %v531
        %2049 = vmatprep.subr.bf16.mxu0 0
        %2050 = vmatpush1.bf16.msra.mxu0 %v532
        %2051 = vmatprep.subr.bf16.mxu0 0
        %2052 = vmatpush1.bf16.msra.mxu0 %v533
        %2053 = vmatprep.subr.bf16.mxu0 0
        %2054 = vmatpush1.bf16.msra.mxu0 0
        %2055 = vmatprep.subr.bf16.mxu0 0
        %2056 = vmatpush1.bf16.msra.mxu0 0
        %2057 = vmatprep.subr.bf16.mxu0 0
        %2058 = vmatpush1.bf16.msra.mxu0 0
        %2059 = vmatprep.subr.bf16.mxu0 0
        %2060 = vmatpush1.bf16.msra.mxu0 0
        %2061 = vmatprep.subr.bf16.mxu0 0
        %2062 = vmatpush1.bf16.msra.mxu0 0
        %2063 = vmatprep.subr.bf16.mxu0 0
        %2064 = vmatpush1.bf16.msra.mxu0 0
        %2065 = vmatprep.subr.bf16.mxu0 0
        %2066 = vmatpush1.bf16.msra.mxu0 0
        %2067 = vmatprep.subr.bf16.mxu0 0
        %2068 = vmatpush1.bf16.msra.mxu0 0
        %2069 = vmatprep.mubr.bf16.mxu0 0
        %2070 = vmatmul.mubr.bf16.gmra.mrb[0].mxu0 %v2034
        %v2071 = vpop.f32.mrb[0].mxu0
        %v2072 = vadd.f32 %v2036, %v2071
        %v2073 = vpop.f32.mrb[0].mxu0
        %v2074 = vpop.f32.mrb[0].mxu0
        %v2075 = vpop.f32.mrb[0].mxu0
        %2076 = vdwg.mxu0
        %v2077 = vxor.u32 %v2072, 2147483648
        %v2078 = vmul.f32 %v2077, 1.442695
        %v2079 = vpow.pop %v2078
        %v2080 = vadd.f32 %v2079, 1.0
        %v2081 = vrcp.pop %v2080
        %v2082 = vmul.f32 1.0, %v2081
        %2083 = vst [vmem:[%s2035] sm:$0xff] %v2082
        %v2084 = vpack.c.bf16 %v2082, %v2082
        %s2085 = scalar_lea.vmem [#allocation3], 248
        %v2086 = vld [vmem:[%s2085] sm:$0xff]
        %2087 = vmatprep.subr.bf16.mxu0 0
        %2088 = vmatpush1.bf16.msra.mxu0 %v526
        %2089 = vmatprep.subr.bf16.mxu0 0
        %2090 = vmatpush1.bf16.msra.mxu0 %v527
        %2091 = vmatprep.subr.bf16.mxu0 0
        %2092 = vmatpush1.bf16.msra.mxu0 %v528
        %2093 = vmatprep.subr.bf16.mxu0 0
        %2094 = vmatpush1.bf16.msra.mxu0 %v529
        %2095 = vmatprep.subr.bf16.mxu0 0
        %2096 = vmatpush1.bf16.msra.mxu0 %v530
        %2097 = vmatprep.subr.bf16.mxu0 0
        %2098 = vmatpush1.bf16.msra.mxu0 %v531
        %2099 = vmatprep.subr.bf16.mxu0 0
        %2100 = vmatpush1.bf16.msra.mxu0 %v532
        %2101 = vmatprep.subr.bf16.mxu0 0
        %2102 = vmatpush1.bf16.msra.mxu0 %v533
        %2103 = vmatprep.subr.bf16.mxu0 0
        %2104 = vmatpush1.bf16.msra.mxu0 0
        %2105 = vmatprep.subr.bf16.mxu0 0
        %2106 = vmatpush1.bf16.msra.mxu0 0
        %2107 = vmatprep.subr.bf16.mxu0 0
        %2108 = vmatpush1.bf16.msra.mxu0 0
        %2109 = vmatprep.subr.bf16.mxu0 0
        %2110 = vmatpush1.bf16.msra.mxu0 0
        %2111 = vmatprep.subr.bf16.mxu0 0
        %2112 = vmatpush1.bf16.msra.mxu0 0
        %2113 = vmatprep.subr.bf16.mxu0 0
        %2114 = vmatpush1.bf16.msra.mxu0 0
        %2115 = vmatprep.subr.bf16.mxu0 0
        %2116 = vmatpush1.bf16.msra.mxu0 0
        %2117 = vmatprep.subr.bf16.mxu0 0
        %2118 = vmatpush1.bf16.msra.mxu0 0
        %2119 = vmatprep.mubr.bf16.mxu0 0
        %2120 = vmatmul.mubr.bf16.gmra.mrb[0].mxu0 %v2084
        %v2121 = vpop.f32.mrb[0].mxu0
        %v2122 = vadd.f32 %v2086, %v2121
        %v2123 = vpop.f32.mrb[0].mxu0
        %v2124 = vpop.f32.mrb[0].mxu0
        %v2125 = vpop.f32.mrb[0].mxu0
        %2126 = vdwg.mxu0
        %v2127 = vxor.u32 %v2122, 2147483648
        %v2128 = vmul.f32 %v2127, 1.442695
        %v2129 = vpow.pop %v2128
        %v2130 = vadd.f32 %v2129, 1.0
        %v2131 = vrcp.pop %v2130
        %v2132 = vmul.f32 1.0, %v2131
        %2133 = vst [vmem:[%s2085] sm:$0xff] %v2132
        %2134 = vst [vmem:[#allocation2] sm:$0xff] %v2132
        %v2135 = vld [vmem:[#allocation3] sm:$0xff]
        %v2136 = vld [vmem:[#allocation3 + $0x8] sm:$0xff]
        %v2137 = vld [vmem:[#allocation3 + $0x10] sm:$0xff]
        %v2138 = vld [vmem:[#allocation3 + $0x18] sm:$0xff]
        %v2139 = vld [vmem:[#allocation3 + $0x20] sm:$0xff]
        %v2140 = vld [vmem:[#allocation3 + $0x28] sm:$0xff]
        %v2141 = vld [vmem:[#allocation3 + $0x30] sm:$0xff]
        %v2142 = vld [vmem:[#allocation3 + $0x38] sm:$0xff]
        %v2143 = vld [vmem:[#allocation3 + $0x40] sm:$0xff]
        %v2144 = vld [vmem:[#allocation3 + $0x48] sm:$0xff]
        %v2145 = vld [vmem:[#allocation3 + $0x50] sm:$0xff]
        %v2146 = vld [vmem:[#allocation3 + $0x58] sm:$0xff]
        %v2147 = vld [vmem:[#allocation3 + $0x60] sm:$0xff]
        %v2148 = vld [vmem:[#allocation3 + $0x68] sm:$0xff]
        %v2149 = vld [vmem:[#allocation3 + $0x70] sm:$0xff]
        %v2150 = vld [vmem:[#allocation3 + $0x78] sm:$0xff]
        %v2151 = vld [vmem:[#allocation3 + $0x80] sm:$0xff]
        %v2152 = vld [vmem:[#allocation3 + $0x88] sm:$0xff]
        %v2153 = vld [vmem:[#allocation3 + $0x90] sm:$0xff]
        %v2154 = vld [vmem:[#allocation3 + $0x98] sm:$0xff]
        %v2155 = vld [vmem:[#allocation3 + $0xa0] sm:$0xff]
        %v2156 = vld [vmem:[#allocation3 + $0xa8] sm:$0xff]
        %v2157 = vld [vmem:[#allocation3 + $0xb0] sm:$0xff]
        %v2158 = vld [vmem:[#allocation3 + $0xb8] sm:$0xff]
        %v2159 = vld [vmem:[#allocation3 + $0xc0] sm:$0xff]
        %v2160 = vld [vmem:[#allocation3 + $0xc8] sm:$0xff]
        %v2161 = vld [vmem:[#allocation3 + $0xd0] sm:$0xff]
        %v2162 = vld [vmem:[#allocation3 + $0xd8] sm:$0xff]
        %v2163 = vld [vmem:[#allocation3 + $0xe0] sm:$0xff]
        %v2164 = vld [vmem:[#allocation3 + $0xe8] sm:$0xff]
        %v2165 = vld [vmem:[#allocation3 + $0xf0] sm:$0xff]
        %v2166 = vld [vmem:[#allocation3 + $0xf8] sm:$0xff]
        %v2167 = vcombine.low %v2135, %v2137
        %v2168 = vcombine.high %v2135, %v2137
        %v2170 = vunpack.c.l.s4 1983009808
        %v2171 = vunpack.c.0.s8 %v2170
        %v2172 = vlaneseq
        %v2173 = vshrl.u32 %v2172, 7
        %v2174 = vsub.s32 %v2171, %v2173
        %v2175 = vrot.slane %v2167, %v2174
        %v2177 = vunpack.c.l.s4 1983009808
        %v2178 = vunpack.c.0.s8 %v2177
        %v2179 = vlaneseq
        %v2180 = vshrl.u32 %v2179, 7
        %v2181 = vsub.s32 %v2178, %v2180
        %v2182 = vrot.slane %v2168, %v2181
        %v2183 = vcombine.low %v2136, %v2138
        %v2184 = vcombine.high %v2136, %v2138
        %v2186 = vunpack.c.l.s4 1983009808
        %v2187 = vunpack.c.0.s8 %v2186
        %v2188 = vlaneseq
        %v2189 = vshrl.u32 %v2188, 7
        %v2190 = vsub.s32 %v2187, %v2189
        %v2191 = vrot.slane %v2183, %v2190
        %v2193 = vunpack.c.l.s4 1983009808
        %v2194 = vunpack.c.0.s8 %v2193
        %v2195 = vlaneseq
        %v2196 = vshrl.u32 %v2195, 7
        %v2197 = vsub.s32 %v2194, %v2196
        %v2198 = vrot.slane %v2184, %v2197
        %v2199 = vcombine.low %v2139, %v2141
        %v2200 = vcombine.high %v2139, %v2141
        %v2202 = vunpack.c.l.s4 1983009808
        %v2203 = vunpack.c.0.s8 %v2202
        %v2204 = vlaneseq
        %v2205 = vshrl.u32 %v2204, 7
        %v2206 = vsub.s32 %v2203, %v2205
        %v2207 = vrot.slane %v2199, %v2206
        %v2209 = vunpack.c.l.s4 1983009808
        %v2210 = vunpack.c.0.s8 %v2209
        %v2211 = vlaneseq
        %v2212 = vshrl.u32 %v2211, 7
        %v2213 = vsub.s32 %v2210, %v2212
        %v2214 = vrot.slane %v2200, %v2213
        %v2215 = vcombine.low %v2140, %v2142
        %v2216 = vcombine.high %v2140, %v2142
        %v2218 = vunpack.c.l.s4 1983009808
        %v2219 = vunpack.c.0.s8 %v2218
        %v2220 = vlaneseq
        %v2221 = vshrl.u32 %v2220, 7
        %v2222 = vsub.s32 %v2219, %v2221
        %v2223 = vrot.slane %v2215, %v2222
        %v2225 = vunpack.c.l.s4 1983009808
        %v2226 = vunpack.c.0.s8 %v2225
        %v2227 = vlaneseq
        %v2228 = vshrl.u32 %v2227, 7
        %v2229 = vsub.s32 %v2226, %v2228
        %v2230 = vrot.slane %v2216, %v2229
        %v2231 = vcombine.low %v2175, %v2191
        %v2232 = vcombine.high %v2175, %v2191
        %v2234 = vunpack.c.l.s4 1934713408
        %v2235 = vunpack.c.0.s8 %v2234
        %v2236 = vlaneseq
        %v2237 = vshrl.u32 %v2236, 7
        %v2238 = vsub.s32 %v2235, %v2237
        %v2239 = vrot.slane %v2231, %v2238
        %v2241 = vunpack.c.l.s4 1934713408
        %v2242 = vunpack.c.0.s8 %v2241
        %v2243 = vlaneseq
        %v2244 = vshrl.u32 %v2243, 7
        %v2245 = vsub.s32 %v2242, %v2244
        %v2246 = vrot.slane %v2232, %v2245
        %v2247 = vcombine.low %v2182, %v2198
        %v2248 = vcombine.high %v2182, %v2198
        %v2250 = vunpack.c.l.s4 1934713408
        %v2251 = vunpack.c.0.s8 %v2250
        %v2252 = vlaneseq
        %v2253 = vshrl.u32 %v2252, 7
        %v2254 = vsub.s32 %v2251, %v2253
        %v2255 = vrot.slane %v2247, %v2254
        %v2257 = vunpack.c.l.s4 1934713408
        %v2258 = vunpack.c.0.s8 %v2257
        %v2259 = vlaneseq
        %v2260 = vshrl.u32 %v2259, 7
        %v2261 = vsub.s32 %v2258, %v2260
        %v2262 = vrot.slane %v2248, %v2261
        %v2263 = vcombine.low %v2207, %v2223
        %v2264 = vcombine.high %v2207, %v2223
        %v2266 = vunpack.c.l.s4 1934713408
        %v2267 = vunpack.c.0.s8 %v2266
        %v2268 = vlaneseq
        %v2269 = vshrl.u32 %v2268, 7
        %v2270 = vsub.s32 %v2267, %v2269
        %v2271 = vrot.slane %v2263, %v2270
        %v2273 = vunpack.c.l.s4 1934713408
        %v2274 = vunpack.c.0.s8 %v2273
        %v2275 = vlaneseq
        %v2276 = vshrl.u32 %v2275, 7
        %v2277 = vsub.s32 %v2274, %v2276
        %v2278 = vrot.slane %v2264, %v2277
        %v2279 = vcombine.low %v2214, %v2230
        %v2280 = vcombine.high %v2214, %v2230
        %v2282 = vunpack.c.l.s4 1934713408
        %v2283 = vunpack.c.0.s8 %v2282
        %v2284 = vlaneseq
        %v2285 = vshrl.u32 %v2284, 7
        %v2286 = vsub.s32 %v2283, %v2285
        %v2287 = vrot.slane %v2279, %v2286
        %v2289 = vunpack.c.l.s4 1934713408
        %v2290 = vunpack.c.0.s8 %v2289
        %v2291 = vlaneseq
        %v2292 = vshrl.u32 %v2291, 7
        %v2293 = vsub.s32 %v2290, %v2292
        %v2294 = vrot.slane %v2280, %v2293
        %v2295 = vcombine.low %v2239, %v2271
        %v2296 = vcombine.high %v2239, %v2271
        %v2297 = vcombine.low %v2246, %v2278
        %v2298 = vcombine.high %v2246, %v2278
        %v2299 = vcombine.low %v2255, %v2287
        %v2300 = vcombine.high %v2255, %v2287
        %v2301 = vcombine.low %v2262, %v2294
        %v2302 = vcombine.high %v2262, %v2294
        %v2303 = vcombine.low %v2143, %v2145
        %v2304 = vcombine.high %v2143, %v2145
        %v2306 = vunpack.c.l.s4 1983009808
        %v2307 = vunpack.c.0.s8 %v2306
        %v2308 = vlaneseq
        %v2309 = vshrl.u32 %v2308, 7
        %v2310 = vsub.s32 %v2307, %v2309
        %v2311 = vrot.slane %v2303, %v2310
        %v2313 = vunpack.c.l.s4 1983009808
        %v2314 = vunpack.c.0.s8 %v2313
        %v2315 = vlaneseq
        %v2316 = vshrl.u32 %v2315, 7
        %v2317 = vsub.s32 %v2314, %v2316
        %v2318 = vrot.slane %v2304, %v2317
        %v2319 = vcombine.low %v2144, %v2146
        %v2320 = vcombine.high %v2144, %v2146
        %v2322 = vunpack.c.l.s4 1983009808
        %v2323 = vunpack.c.0.s8 %v2322
        %v2324 = vlaneseq
        %v2325 = vshrl.u32 %v2324, 7
        %v2326 = vsub.s32 %v2323, %v2325
        %v2327 = vrot.slane %v2319, %v2326
        %v2329 = vunpack.c.l.s4 1983009808
        %v2330 = vunpack.c.0.s8 %v2329
        %v2331 = vlaneseq
        %v2332 = vshrl.u32 %v2331, 7
        %v2333 = vsub.s32 %v2330, %v2332
        %v2334 = vrot.slane %v2320, %v2333
        %v2335 = vcombine.low %v2147, %v2149
        %v2336 = vcombine.high %v2147, %v2149
        %v2338 = vunpack.c.l.s4 1983009808
        %v2339 = vunpack.c.0.s8 %v2338
        %v2340 = vlaneseq
        %v2341 = vshrl.u32 %v2340, 7
        %v2342 = vsub.s32 %v2339, %v2341
        %v2343 = vrot.slane %v2335, %v2342
        %v2345 = vunpack.c.l.s4 1983009808
        %v2346 = vunpack.c.0.s8 %v2345
        %v2347 = vlaneseq
        %v2348 = vshrl.u32 %v2347, 7
        %v2349 = vsub.s32 %v2346, %v2348
        %v2350 = vrot.slane %v2336, %v2349
        %v2351 = vcombine.low %v2148, %v2150
        %v2352 = vcombine.high %v2148, %v2150
        %v2354 = vunpack.c.l.s4 1983009808
        %v2355 = vunpack.c.0.s8 %v2354
        %v2356 = vlaneseq
        %v2357 = vshrl.u32 %v2356, 7
        %v2358 = vsub.s32 %v2355, %v2357
        %v2359 = vrot.slane %v2351, %v2358
        %v2361 = vunpack.c.l.s4 1983009808
        %v2362 = vunpack.c.0.s8 %v2361
        %v2363 = vlaneseq
        %v2364 = vshrl.u32 %v2363, 7
        %v2365 = vsub.s32 %v2362, %v2364
        %v2366 = vrot.slane %v2352, %v2365
        %v2367 = vcombine.low %v2311, %v2327
        %v2368 = vcombine.high %v2311, %v2327
        %v2370 = vunpack.c.l.s4 1934713408
        %v2371 = vunpack.c.0.s8 %v2370
        %v2372 = vlaneseq
        %v2373 = vshrl.u32 %v2372, 7
        %v2374 = vsub.s32 %v2371, %v2373
        %v2375 = vrot.slane %v2367, %v2374
        %v2377 = vunpack.c.l.s4 1934713408
        %v2378 = vunpack.c.0.s8 %v2377
        %v2379 = vlaneseq
        %v2380 = vshrl.u32 %v2379, 7
        %v2381 = vsub.s32 %v2378, %v2380
        %v2382 = vrot.slane %v2368, %v2381
        %v2383 = vcombine.low %v2318, %v2334
        %v2384 = vcombine.high %v2318, %v2334
        %v2386 = vunpack.c.l.s4 1934713408
        %v2387 = vunpack.c.0.s8 %v2386
        %v2388 = vlaneseq
        %v2389 = vshrl.u32 %v2388, 7
        %v2390 = vsub.s32 %v2387, %v2389
        %v2391 = vrot.slane %v2383, %v2390
        %v2393 = vunpack.c.l.s4 1934713408
        %v2394 = vunpack.c.0.s8 %v2393
        %v2395 = vlaneseq
        %v2396 = vshrl.u32 %v2395, 7
        %v2397 = vsub.s32 %v2394, %v2396
        %v2398 = vrot.slane %v2384, %v2397
        %v2399 = vcombine.low %v2343, %v2359
        %v2400 = vcombine.high %v2343, %v2359
        %v2402 = vunpack.c.l.s4 1934713408
        %v2403 = vunpack.c.0.s8 %v2402
        %v2404 = vlaneseq
        %v2405 = vshrl.u32 %v2404, 7
        %v2406 = vsub.s32 %v2403, %v2405
        %v2407 = vrot.slane %v2399, %v2406
        %v2409 = vunpack.c.l.s4 1934713408
        %v2410 = vunpack.c.0.s8 %v2409
        %v2411 = vlaneseq
        %v2412 = vshrl.u32 %v2411, 7
        %v2413 = vsub.s32 %v2410, %v2412
        %v2414 = vrot.slane %v2400, %v2413
        %v2415 = vcombine.low %v2350, %v2366
        %v2416 = vcombine.high %v2350, %v2366
        %v2418 = vunpack.c.l.s4 1934713408
        %v2419 = vunpack.c.0.s8 %v2418
        %v2420 = vlaneseq
        %v2421 = vshrl.u32 %v2420, 7
        %v2422 = vsub.s32 %v2419, %v2421
        %v2423 = vrot.slane %v2415, %v2422
        %v2425 = vunpack.c.l.s4 1934713408
        %v2426 = vunpack.c.0.s8 %v2425
        %v2427 = vlaneseq
        %v2428 = vshrl.u32 %v2427, 7
        %v2429 = vsub.s32 %v2426, %v2428
        %v2430 = vrot.slane %v2416, %v2429
        %v2431 = vcombine.low %v2375, %v2407
        %v2432 = vcombine.high %v2375, %v2407
        %v2433 = vcombine.low %v2382, %v2414
        %v2434 = vcombine.high %v2382, %v2414
        %v2435 = vcombine.low %v2391, %v2423
        %v2436 = vcombine.high %v2391, %v2423
        %v2437 = vcombine.low %v2398, %v2430
        %v2438 = vcombine.high %v2398, %v2430
        %v2439 = vcombine.low %v2151, %v2153
        %v2440 = vcombine.high %v2151, %v2153
        %v2442 = vunpack.c.l.s4 1983009808
        %v2443 = vunpack.c.0.s8 %v2442
        %v2444 = vlaneseq
        %v2445 = vshrl.u32 %v2444, 7
        %v2446 = vsub.s32 %v2443, %v2445
        %v2447 = vrot.slane %v2439, %v2446
        %v2449 = vunpack.c.l.s4 1983009808
        %v2450 = vunpack.c.0.s8 %v2449
        %v2451 = vlaneseq
        %v2452 = vshrl.u32 %v2451, 7
        %v2453 = vsub.s32 %v2450, %v2452
        %v2454 = vrot.slane %v2440, %v2453
        %v2455 = vcombine.low %v2152, %v2154
        %v2456 = vcombine.high %v2152, %v2154
        %v2458 = vunpack.c.l.s4 1983009808
        %v2459 = vunpack.c.0.s8 %v2458
        %v2460 = vlaneseq
        %v2461 = vshrl.u32 %v2460, 7
        %v2462 = vsub.s32 %v2459, %v2461
        %v2463 = vrot.slane %v2455, %v2462
        %v2465 = vunpack.c.l.s4 1983009808
        %v2466 = vunpack.c.0.s8 %v2465
        %v2467 = vlaneseq
        %v2468 = vshrl.u32 %v2467, 7
        %v2469 = vsub.s32 %v2466, %v2468
        %v2470 = vrot.slane %v2456, %v2469
        %v2471 = vcombine.low %v2155, %v2157
        %v2472 = vcombine.high %v2155, %v2157
        %v2474 = vunpack.c.l.s4 1983009808
        %v2475 = vunpack.c.0.s8 %v2474
        %v2476 = vlaneseq
        %v2477 = vshrl.u32 %v2476, 7
        %v2478 = vsub.s32 %v2475, %v2477
        %v2479 = vrot.slane %v2471, %v2478
        %v2481 = vunpack.c.l.s4 1983009808
        %v2482 = vunpack.c.0.s8 %v2481
        %v2483 = vlaneseq
        %v2484 = vshrl.u32 %v2483, 7
        %v2485 = vsub.s32 %v2482, %v2484
        %v2486 = vrot.slane %v2472, %v2485
        %v2487 = vcombine.low %v2156, %v2158
        %v2488 = vcombine.high %v2156, %v2158
        %v2490 = vunpack.c.l.s4 1983009808
        %v2491 = vunpack.c.0.s8 %v2490
        %v2492 = vlaneseq
        %v2493 = vshrl.u32 %v2492, 7
        %v2494 = vsub.s32 %v2491, %v2493
        %v2495 = vrot.slane %v2487, %v2494
        %v2497 = vunpack.c.l.s4 1983009808
        %v2498 = vunpack.c.0.s8 %v2497
        %v2499 = vlaneseq
        %v2500 = vshrl.u32 %v2499, 7
        %v2501 = vsub.s32 %v2498, %v2500
        %v2502 = vrot.slane %v2488, %v2501
        %v2503 = vcombine.low %v2447, %v2463
        %v2504 = vcombine.high %v2447, %v2463
        %v2506 = vunpack.c.l.s4 1934713408
        %v2507 = vunpack.c.0.s8 %v2506
        %v2508 = vlaneseq
        %v2509 = vshrl.u32 %v2508, 7
        %v2510 = vsub.s32 %v2507, %v2509
        %v2511 = vrot.slane %v2503, %v2510
        %v2513 = vunpack.c.l.s4 1934713408
        %v2514 = vunpack.c.0.s8 %v2513
        %v2515 = vlaneseq
        %v2516 = vshrl.u32 %v2515, 7
        %v2517 = vsub.s32 %v2514, %v2516
        %v2518 = vrot.slane %v2504, %v2517
        %v2519 = vcombine.low %v2454, %v2470
        %v2520 = vcombine.high %v2454, %v2470
        %v2522 = vunpack.c.l.s4 1934713408
        %v2523 = vunpack.c.0.s8 %v2522
        %v2524 = vlaneseq
        %v2525 = vshrl.u32 %v2524, 7
        %v2526 = vsub.s32 %v2523, %v2525
        %v2527 = vrot.slane %v2519, %v2526
        %v2529 = vunpack.c.l.s4 1934713408
        %v2530 = vunpack.c.0.s8 %v2529
        %v2531 = vlaneseq
        %v2532 = vshrl.u32 %v2531, 7
        %v2533 = vsub.s32 %v2530, %v2532
        %v2534 = vrot.slane %v2520, %v2533
        %v2535 = vcombine.low %v2479, %v2495
        %v2536 = vcombine.high %v2479, %v2495
        %v2538 = vunpack.c.l.s4 1934713408
        %v2539 = vunpack.c.0.s8 %v2538
        %v2540 = vlaneseq
        %v2541 = vshrl.u32 %v2540, 7
        %v2542 = vsub.s32 %v2539, %v2541
        %v2543 = vrot.slane %v2535, %v2542
        %v2545 = vunpack.c.l.s4 1934713408
        %v2546 = vunpack.c.0.s8 %v2545
        %v2547 = vlaneseq
        %v2548 = vshrl.u32 %v2547, 7
        %v2549 = vsub.s32 %v2546, %v2548
        %v2550 = vrot.slane %v2536, %v2549
        %v2551 = vcombine.low %v2486, %v2502
        %v2552 = vcombine.high %v2486, %v2502
        %v2554 = vunpack.c.l.s4 1934713408
        %v2555 = vunpack.c.0.s8 %v2554
        %v2556 = vlaneseq
        %v2557 = vshrl.u32 %v2556, 7
        %v2558 = vsub.s32 %v2555, %v2557
        %v2559 = vrot.slane %v2551, %v2558
        %v2561 = vunpack.c.l.s4 1934713408
        %v2562 = vunpack.c.0.s8 %v2561
        %v2563 = vlaneseq
        %v2564 = vshrl.u32 %v2563, 7
        %v2565 = vsub.s32 %v2562, %v2564
        %v2566 = vrot.slane %v2552, %v2565
        %v2567 = vcombine.low %v2511, %v2543
        %v2568 = vcombine.high %v2511, %v2543
        %v2569 = vcombine.low %v2518, %v2550
        %v2570 = vcombine.high %v2518, %v2550
        %v2571 = vcombine.low %v2527, %v2559
        %v2572 = vcombine.high %v2527, %v2559
        %v2573 = vcombine.low %v2534, %v2566
        %v2574 = vcombine.high %v2534, %v2566
        %v2575 = vcombine.low %v2159, %v2161
        %v2576 = vcombine.high %v2159, %v2161
        %v2578 = vunpack.c.l.s4 1983009808
        %v2579 = vunpack.c.0.s8 %v2578
        %v2580 = vlaneseq
        %v2581 = vshrl.u32 %v2580, 7
        %v2582 = vsub.s32 %v2579, %v2581
        %v2583 = vrot.slane %v2575, %v2582
        %v2585 = vunpack.c.l.s4 1983009808
        %v2586 = vunpack.c.0.s8 %v2585
        %v2587 = vlaneseq
        %v2588 = vshrl.u32 %v2587, 7
        %v2589 = vsub.s32 %v2586, %v2588
        %v2590 = vrot.slane %v2576, %v2589
        %v2591 = vcombine.low %v2160, %v2162
        %v2592 = vcombine.high %v2160, %v2162
        %v2594 = vunpack.c.l.s4 1983009808
        %v2595 = vunpack.c.0.s8 %v2594
        %v2596 = vlaneseq
        %v2597 = vshrl.u32 %v2596, 7
        %v2598 = vsub.s32 %v2595, %v2597
        %v2599 = vrot.slane %v2591, %v2598
        %v2601 = vunpack.c.l.s4 1983009808
        %v2602 = vunpack.c.0.s8 %v2601
        %v2603 = vlaneseq
        %v2604 = vshrl.u32 %v2603, 7
        %v2605 = vsub.s32 %v2602, %v2604
        %v2606 = vrot.slane %v2592, %v2605
        %v2607 = vcombine.low %v2163, %v2165
        %v2608 = vcombine.high %v2163, %v2165
        %v2610 = vunpack.c.l.s4 1983009808
        %v2611 = vunpack.c.0.s8 %v2610
        %v2612 = vlaneseq
        %v2613 = vshrl.u32 %v2612, 7
        %v2614 = vsub.s32 %v2611, %v2613
        %v2615 = vrot.slane %v2607, %v2614
        %v2617 = vunpack.c.l.s4 1983009808
        %v2618 = vunpack.c.0.s8 %v2617
        %v2619 = vlaneseq
        %v2620 = vshrl.u32 %v2619, 7
        %v2621 = vsub.s32 %v2618, %v2620
        %v2622 = vrot.slane %v2608, %v2621
        %v2623 = vcombine.low %v2164, %v2166
        %v2624 = vcombine.high %v2164, %v2166
        %v2626 = vunpack.c.l.s4 1983009808
        %v2627 = vunpack.c.0.s8 %v2626
        %v2628 = vlaneseq
        %v2629 = vshrl.u32 %v2628, 7
        %v2630 = vsub.s32 %v2627, %v2629
        %v2631 = vrot.slane %v2623, %v2630
        %v2633 = vunpack.c.l.s4 1983009808
        %v2634 = vunpack.c.0.s8 %v2633
        %v2635 = vlaneseq
        %v2636 = vshrl.u32 %v2635, 7
        %v2637 = vsub.s32 %v2634, %v2636
        %v2638 = vrot.slane %v2624, %v2637
        %v2639 = vcombine.low %v2583, %v2599
        %v2640 = vcombine.high %v2583, %v2599
        %v2642 = vunpack.c.l.s4 1934713408
        %v2643 = vunpack.c.0.s8 %v2642
        %v2644 = vlaneseq
        %v2645 = vshrl.u32 %v2644, 7
        %v2646 = vsub.s32 %v2643, %v2645
        %v2647 = vrot.slane %v2639, %v2646
        %v2649 = vunpack.c.l.s4 1934713408
        %v2650 = vunpack.c.0.s8 %v2649
        %v2651 = vlaneseq
        %v2652 = vshrl.u32 %v2651, 7
        %v2653 = vsub.s32 %v2650, %v2652
        %v2654 = vrot.slane %v2640, %v2653
        %v2655 = vcombine.low %v2590, %v2606
        %v2656 = vcombine.high %v2590, %v2606
        %v2658 = vunpack.c.l.s4 1934713408
        %v2659 = vunpack.c.0.s8 %v2658
        %v2660 = vlaneseq
        %v2661 = vshrl.u32 %v2660, 7
        %v2662 = vsub.s32 %v2659, %v2661
        %v2663 = vrot.slane %v2655, %v2662
        %v2665 = vunpack.c.l.s4 1934713408
        %v2666 = vunpack.c.0.s8 %v2665
        %v2667 = vlaneseq
        %v2668 = vshrl.u32 %v2667, 7
        %v2669 = vsub.s32 %v2666, %v2668
        %v2670 = vrot.slane %v2656, %v2669
        %v2671 = vcombine.low %v2615, %v2631
        %v2672 = vcombine.high %v2615, %v2631
        %v2674 = vunpack.c.l.s4 1934713408
        %v2675 = vunpack.c.0.s8 %v2674
        %v2676 = vlaneseq
        %v2677 = vshrl.u32 %v2676, 7
        %v2678 = vsub.s32 %v2675, %v2677
        %v2679 = vrot.slane %v2671, %v2678
        %v2681 = vunpack.c.l.s4 1934713408
        %v2682 = vunpack.c.0.s8 %v2681
        %v2683 = vlaneseq
        %v2684 = vshrl.u32 %v2683, 7
        %v2685 = vsub.s32 %v2682, %v2684
        %v2686 = vrot.slane %v2672, %v2685
        %v2687 = vcombine.low %v2622, %v2638
        %v2688 = vcombine.high %v2622, %v2638
        %v2690 = vunpack.c.l.s4 1934713408
        %v2691 = vunpack.c.0.s8 %v2690
        %v2692 = vlaneseq
        %v2693 = vshrl.u32 %v2692, 7
        %v2694 = vsub.s32 %v2691, %v2693
        %v2695 = vrot.slane %v2687, %v2694
        %v2697 = vunpack.c.l.s4 1934713408
        %v2698 = vunpack.c.0.s8 %v2697
        %v2699 = vlaneseq
        %v2700 = vshrl.u32 %v2699, 7
        %v2701 = vsub.s32 %v2698, %v2700
        %v2702 = vrot.slane %v2688, %v2701
        %v2703 = vcombine.low %v2647, %v2679
        %v2704 = vcombine.high %v2647, %v2679
        %v2705 = vcombine.low %v2654, %v2686
        %v2706 = vcombine.high %v2654, %v2686
        %v2707 = vcombine.low %v2663, %v2695
        %v2708 = vcombine.high %v2663, %v2695
        %v2709 = vcombine.low %v2670, %v2702
        %v2710 = vcombine.high %v2670, %v2702
        %v2711 = vpack.c.bf16 %v2431, %v2295
        %v2712 = vpack.c.bf16 %v2703, %v2567
        %v2713 = vpack.c.bf16 %v2432, %v2296
        %v2714 = vpack.c.bf16 %v2704, %v2568
        %v2715 = vpack.c.bf16 %v2433, %v2297
        %v2716 = vpack.c.bf16 %v2705, %v2569
        %v2717 = vpack.c.bf16 %v2434, %v2298
        %v2718 = vpack.c.bf16 %v2706, %v2570
        %v2719 = vpack.c.bf16 %v2435, %v2299
        %v2720 = vpack.c.bf16 %v2707, %v2571
        %v2721 = vpack.c.bf16 %v2436, %v2300
        %v2722 = vpack.c.bf16 %v2708, %v2572
        %v2723 = vpack.c.bf16 %v2437, %v2301
        %v2724 = vpack.c.bf16 %v2709, %v2573
        %v2725 = vpack.c.bf16 %v2438, %v2302
        %v2726 = vpack.c.bf16 %v2710, %v2574
        %v2743 = vunpack.c.l.b16 %v2711
        %v2744 = vunpack.c.h.b16 %v2711
        %v2745 = vunpack.c.l.b16 %v2712
        %v2746 = vunpack.c.h.b16 %v2712
        %v2747 = vunpack.c.l.b16 %v2713
        %v2748 = vunpack.c.h.b16 %v2713
        %v2749 = vunpack.c.l.b16 %v2714
        %v2750 = vunpack.c.h.b16 %v2714
        %v2751 = vunpack.c.l.b16 %v2715
        %v2752 = vunpack.c.h.b16 %v2715
        %v2753 = vunpack.c.l.b16 %v2716
        %v2754 = vunpack.c.h.b16 %v2716
        %v2755 = vunpack.c.l.b16 %v2717
        %v2756 = vunpack.c.h.b16 %v2717
        %v2757 = vunpack.c.l.b16 %v2718
        %v2758 = vunpack.c.h.b16 %v2718
        %v2759 = vunpack.c.l.b16 %v2719
        %v2760 = vunpack.c.h.b16 %v2719
        %v2761 = vunpack.c.l.b16 %v2720
        %v2762 = vunpack.c.h.b16 %v2720
        %v2763 = vunpack.c.l.b16 %v2721
        %v2764 = vunpack.c.h.b16 %v2721
        %v2765 = vunpack.c.l.b16 %v2722
        %v2766 = vunpack.c.h.b16 %v2722
        %v2767 = vunpack.c.l.b16 %v2723
        %v2768 = vunpack.c.h.b16 %v2723
        %v2769 = vunpack.c.l.b16 %v2724
        %v2770 = vunpack.c.h.b16 %v2724
        %v2771 = vunpack.c.l.b16 %v2725
        %v2772 = vunpack.c.h.b16 %v2725
        %v2773 = vunpack.c.l.b16 %v2726
        %v2774 = vunpack.c.h.b16 %v2726
        %v2775 = vpack.c.b16 %v2743, %v2743
        %v2776 = vpack.c.b16 %v2744, %v2744
        %v2777 = vpack.c.b16 %v2745, %v2745
        %v2778 = vpack.c.b16 %v2746, %v2746
        %v2779 = vpack.c.b16 %v2747, %v2747
        %v2780 = vpack.c.b16 %v2748, %v2748
        %v2781 = vpack.c.b16 %v2749, %v2749
        %v2782 = vpack.c.b16 %v2750, %v2750
        %v2783 = vpack.c.b16 %v2751, %v2751
        %v2784 = vpack.c.b16 %v2752, %v2752
        %v2785 = vpack.c.b16 %v2753, %v2753
        %v2786 = vpack.c.b16 %v2754, %v2754
        %v2787 = vpack.c.b16 %v2755, %v2755
        %v2788 = vpack.c.b16 %v2756, %v2756
        %v2789 = vpack.c.b16 %v2757, %v2757
        %v2790 = vpack.c.b16 %v2758, %v2758
        %v2791 = vpack.c.b16 %v2759, %v2759
        %v2792 = vpack.c.b16 %v2760, %v2760
        %v2793 = vpack.c.b16 %v2761, %v2761
        %v2794 = vpack.c.b16 %v2762, %v2762
        %v2795 = vpack.c.b16 %v2763, %v2763
        %v2796 = vpack.c.b16 %v2764, %v2764
        %v2797 = vpack.c.b16 %v2765, %v2765
        %v2798 = vpack.c.b16 %v2766, %v2766
        %v2799 = vpack.c.b16 %v2767, %v2767
        %v2800 = vpack.c.b16 %v2768, %v2768
        %v2801 = vpack.c.b16 %v2769, %v2769
        %v2802 = vpack.c.b16 %v2770, %v2770
        %v2803 = vpack.c.b16 %v2771, %v2771
        %v2804 = vpack.c.b16 %v2772, %v2772
        %v2805 = vpack.c.b16 %v2773, %v2773
        %v2806 = vpack.c.b16 %v2774, %v2774
        %2839 = vst [vmem:[%s137] sm:$0xf] %v2775
        %2840 = vst [vmem:[%s137 + $0x4] sm:$0xf] %v2776
        %2841 = vst [vmem:[%s137 + $0x8] sm:$0xf] %v2777
        %2842 = vst [vmem:[%s137 + $0xc] sm:$0xf] %v2778
        %2843 = vst [vmem:[%s137 + $0x10] sm:$0xf] %v2779
        %2844 = vst [vmem:[%s137 + $0x14] sm:$0xf] %v2780
        %2845 = vst [vmem:[%s137 + $0x18] sm:$0xf] %v2781
        %2846 = vst [vmem:[%s137 + $0x1c] sm:$0xf] %v2782
        %2847 = vst [vmem:[%s137 + $0x20] sm:$0xf] %v2783
        %2848 = vst [vmem:[%s137 + $0x24] sm:$0xf] %v2784
        %2849 = vst [vmem:[%s137 + $0x28] sm:$0xf] %v2785
        %2850 = vst [vmem:[%s137 + $0x2c] sm:$0xf] %v2786
        %2851 = vst [vmem:[%s137 + $0x30] sm:$0xf] %v2787
        %2852 = vst [vmem:[%s137 + $0x34] sm:$0xf] %v2788
        %2853 = vst [vmem:[%s137 + $0x38] sm:$0xf] %v2789
        %2854 = vst [vmem:[%s137 + $0x3c] sm:$0xf] %v2790
        %2855 = vst [vmem:[%s137 + $0x40] sm:$0xf] %v2791
        %2856 = vst [vmem:[%s137 + $0x44] sm:$0xf] %v2792
        %2857 = vst [vmem:[%s137 + $0x48] sm:$0xf] %v2793
        %2858 = vst [vmem:[%s137 + $0x4c] sm:$0xf] %v2794
        %2859 = vst [vmem:[%s137 + $0x50] sm:$0xf] %v2795
        %2860 = vst [vmem:[%s137 + $0x54] sm:$0xf] %v2796
        %2861 = vst [vmem:[%s137 + $0x58] sm:$0xf] %v2797
        %2862 = vst [vmem:[%s137 + $0x5c] sm:$0xf] %v2798
        %2863 = vst [vmem:[%s137 + $0x60] sm:$0xf] %v2799
        %2864 = vst [vmem:[%s137 + $0x64] sm:$0xf] %v2800
        %2865 = vst [vmem:[%s137 + $0x68] sm:$0xf] %v2801
        %2866 = vst [vmem:[%s137 + $0x6c] sm:$0xf] %v2802
        %2867 = vst [vmem:[%s137 + $0x70] sm:$0xf] %v2803
        %2868 = vst [vmem:[%s137 + $0x74] sm:$0xf] %v2804
        %2869 = vst [vmem:[%s137 + $0x78] sm:$0xf] %v2805
        %2870 = vst [vmem:[%s137 + $0x7c] sm:$0xf] %v2806
        %s2871 = sand.u32 %s55, 1
        %s2872 = scalar_lea.sflag [#allocation10], %s2871
        %s2873 = sand.u32 %s55, 1
        %s2874 = smul.addr %s2873, 128
        %s2875 = scalar_lea.vmem [#allocation11], %s2874
        // Predicated region
        $region45: #{tpu_custom_call.1} parent=23 // pred_check
          %p2876 = pneg %p65
        $region46: #{tpu_custom_call.1} parent=23 // pred_check_branch
          %2878 = sbr.rel (%p2876) target = $region48
        $region47: #{tpu_custom_call.1} parent=23 // pred_region
          #allocation21 [shape = 'u32[6]{0}', space=smem, size = 0x18, scoped, tag = 'DMA stride descriptor']
          %s2879 = smul.u32 4, %s21
          %s2881 = ssub.s32 2048, 2048
          %2882 = vsyncadd %s2872, %s2881
          %s2883 = smul.addr %s2879, 64
          %s2884 = scalar_lea.hbm %s4, %s2883
          %s2886 = sshll.u32 1, 14
          %s2887 = sxor.u32 4294967295, %s2886
          %s2890 = sshll.u32 7, 18
          %s2891 = sxor.u32 4294967295, %s2890
          %s2892 = sand.u32 0, %s2891
          %s2894 = sor.u32 %s2892, 0
          %s2896 = sshll.u32 3, 24
          %s2897 = sxor.u32 4294967295, %s2896
          %s2898 = sand.u32 %s2894, %s2897
          %s2900 = sor.u32 %s2898, 0
          %s2901 = sshll.u32 %s2875, 4
          %s2902 = int_to_ptr.vmem [resolvable:$true] %s2901
          %2908 = sst [smem:[#allocation21]] 256
          %s2909 = scalar_lea.smem [#allocation21], 1
          %2910 = sst [smem:[%s2909]] 512
          %s2911 = scalar_lea.smem [#allocation21], 2
          %2912 = sst [smem:[%s2911]] 4
          %s2913 = scalar_lea.smem [#allocation21], 3
          %2914 = sst [smem:[%s2913]] 64
          %s2915 = scalar_lea.smem [#allocation21], 4
          %2916 = sst [smem:[%s2915]] 64
          %s2917 = scalar_lea.smem [#allocation21], 5
          %2918 = sst [smem:[%s2917]] 4
          %2920 = dma.general %s2902, 2048, %s2884, %s2872, [#allocation20], [#allocation21], %s2900, 0
        $region48: #{tpu_custom_call.1} parent=23 // pred_fallthru
          _
      $region24: #{tpu_custom_call.1} parent=5 // pred_fallthru
        _
      %p2921 = scmp.le.s32.totalorder 2, %s16
      // Predicated region
      $region49: #{tpu_custom_call.1} parent=5 // pred_check
        %p2922 = pneg %p2921
      $region50: #{tpu_custom_call.1} parent=5 // pred_check_branch
        %2924 = sbr.rel (%p2922) target = $region52
      $region51: #{tpu_custom_call.1} parent=5 // pred_region
        %s2925 = ssub.s32 %s16, 2
        // Predicated region
        $region53: #{tpu_custom_call.1} parent=51 // pred_check
          %p2926 = pneg %p71
        $region54: #{tpu_custom_call.1} parent=51 // pred_check_branch
          %2928 = sbr.rel (%p2926) target = $region56
        $region55: #{tpu_custom_call.1} parent=51 // pred_region
          %s2929 = sand.u32 %s56, 1
          %s2930 = scalar_lea.sflag [#allocation10], %s2929
          %s2931 = sand.u32 %s56, 1
          %s2932 = smul.addr %s2931, 128
          %s2933 = scalar_lea.vmem [#allocation11], %s2932
          %2934 = dma.done %s2930, 2048
        $region56: #{tpu_custom_call.1} parent=51 // pred_fallthru
          _
      $region52: #{tpu_custom_call.1} parent=5 // pred_fallthru
        _
    $region6: #{tpu_custom_call.1} parent=1 // loop_footer
      %s20 = sadd.s32 1, %s16
    $region7: #{tpu_custom_call.1} parent=1 // loop_footer_branch
      %15 = sbr.rel target = $region3
    $region8: #{tpu_custom_call.1} parent=1 // loop_exit
      _
    %2935 = vsyncpa [#allocation9], 1
    %s2936 = scalar_lea.sflag [#allocation9], 1
    %2937 = vsyncpa %s2936, 1
    %2938 = vsyncpa [#allocation10], 1
    %s2939 = scalar_lea.sflag [#allocation10], 1
    %2940 = vsyncpa %s2939, 1
  %2941 = vsyncmov [#allocation7]
  %s2942 = vpop.sfrf %2941
  %p2943 = scmp.eq.s32.totalorder %s2942, 0
  %p2944 = pneg %p2943
  %2946 = shalt.err (%p2944)
  %s2947 = scalar_lea.sflag [#allocation7], 1
  %2948 = vsyncmov %s2947
  %s2949 = vpop.sfrf %2948
  %p2950 = scmp.eq.s32.totalorder %s2949, 0
  %p2951 = pneg %p2950
  %2953 = shalt.err (%p2951)
  %s2954 = scalar_lea.sflag [#allocation7], 2
  %2955 = vsyncmov %s2954
  %s2956 = vpop.sfrf %2955
  %p2957 = scmp.eq.s32.totalorder %s2956, 0
  %p2958 = pneg %p2957
  %2960 = shalt.err (%p2958)

</llo_original>
